<compile_context>
chip_gen: v6e
topology: v6e:2x2x1
jax: 0.10.0
libtpu: 0.0.40
codegen_flags: <defaults>
</compile_context>

<pallas_src>
import math
import numpy as np
import jax
import jax.numpy as jnp
from jax import lax
from jax.experimental import pallas as pl
from jax.experimental.pallas import tpu as pltpu

# ----------------- constants mirroring the PyTorch module -----------------
SAMPLE_RATE = 16000
FBANK_SAMPLE_STRIDE = 160
WINDOW_SECS = 1.0
STRIDE_SECS = 1.0
TARGET_LENGTH = int(WINDOW_SECS * SAMPLE_RATE / FBANK_SAMPLE_STRIDE)   # 100 frames
NUM_MEL = 128

# kaldi-fbank framing parameters (frame_length=25ms, frame_shift=10ms)
FRAME_LEN = 400
FRAME_SHIFT = 160
NFFT = 512
NBIN = NFFT // 2 + 1          # 257
NBIN_PAD = 384                # zero-padded to a lane-aligned multiple of 128
PREEMPH = 0.97
NORM_MEAN = -4.2677393        # SSAST fbank normalization
NORM_STD = 4.5689974
INV_2STD = 1.0 / (2.0 * NORM_STD)

# 'f'-type SSAST patching: fshape=128, tshape=2, fstride=128, tstride=1
FSHAPE, TSHAPE = 128, 2
TSTRIDE = 1
NUM_PATCHES = (TARGET_LENGTH - TSHAPE) // TSTRIDE + 1                  # 99
PATCH_DIM = FSHAPE * TSHAPE                                            # 256
CLS_TOKEN_NUM = 2                                                      # cls + dist tokens
SEQ_LEN = NUM_PATCHES + CLS_TOKEN_NUM                                  # 101
SEQ_PAD = 104                                                          # 101 -> multiple of 8

# scaled-down synthetic transformer (stand-in for "tiny"; weights are random)
EMBED_DIM = 32
DEPTH = 2
NUM_HEADS = 4
HEAD_DIM = EMBED_DIM // NUM_HEADS
MLP_DIM = EMBED_DIM * 4
LN_EPS = 1e-6

FB_TILE = 512                 # fbank frames per grid step (review: 512-1024)
BT_TILE = 2                   # (num_seg * batch) segments per AST grid step


# ----------------------------- shared helpers ------------------------------
def _layer_norm(x, g, b):
    mu = jnp.mean(x, axis=-1, keepdims=True)
    var = jnp.mean((x - mu) ** 2, axis=-1, keepdims=True)
    return (x - mu) * lax.rsqrt(var + LN_EPS) * g + b


# ----------------------------- Pallas kernels ------------------------------
def fbank_kernel(frames_ref, dft_ref, mel_ref, out_ref):
    # raw frames (bf16) -> one fused cos|sin DFT matmul (preprocessing folded into dft)
    reim = jnp.dot(frames_ref[...], dft_ref[...], preferred_element_type=jnp.float32)
    re = reim[:, :NBIN_PAD]                    # slice at lane 384 (multiple of 128)
    im = reim[:, NBIN_PAD:]
    power = re * re + im * im                  # f32 (keep power->mel path in f32)
    mel = jnp.dot(power, mel_ref[...], preferred_element_type=jnp.float32)
    logmel = jnp.log(jnp.maximum(mel, 1.1920929e-07))
    out_ref[...] = (logmel - NORM_MEAN) * INV_2STD


def ast_kernel(patches_ref, base_ref, pw_ref,
               ln1g_ref, ln1b_ref, wqkv_ref, bqkv_ref, wo_ref, bo_ref,
               ln2g_ref, ln2b_ref, w1_ref, b1_ref, w2_ref, b2_ref,
               ng_ref, nb_ref, hs_ref, x_ref):
    l = pl.program_id(1)
    bt_tile = patches_ref.shape[0]
    rows = bt_tile * SEQ_PAD
    scale = 1.0 / math.sqrt(HEAD_DIM)

    # -inf bias for the 3 padded key positions (101..103)
    col = lax.broadcasted_iota(jnp.int32, (1, SEQ_PAD), 1)
    key_bias = jnp.where(col < SEQ_LEN, 0.0, -1e30).astype(jnp.float32)

    @pl.when(l == 0)
    def _init():
        # patch embedding; cls/dist tokens, positional embedding and patch bias are
        # pre-folded into `base` (padded rows of `patches` are zero).
        tok = jnp.dot(patches_ref[...].reshape(rows, PATCH_DIM), pw_ref[...],
                      preferred_element_type=jnp.float32)
        x0 = tok.reshape(bt_tile, SEQ_PAD, EMBED_DIM) + base_ref[...]
        x_ref[...] = x0.reshape(rows, EMBED_DIM)

    @pl.when(l < DEPTH)
    def _block():
        x = x_ref[...]
        hs_ref[...] = x.reshape(1, bt_tile, SEQ_PAD, EMBED_DIM).astype(hs_ref.dtype)

        # ---- multi-head self-attention (timm ViT pre-norm block) ----
        h = _layer_norm(x, ln1g_ref[0], ln1b_ref[0])
        qkv = jnp.dot(h.astype(jnp.bfloat16), wqkv_ref[0],
                      preferred_element_type=jnp.float32) + bqkv_ref[0]
        qkv3 = qkv.reshape(bt_tile, SEQ_PAD, 3 * EMBED_DIM)
        ctx_heads = []
        for hh in range(NUM_HEADS):
            q = qkv3[:, :, hh * HEAD_DIM:(hh + 1) * HEAD_DIM] * scale
            k = qkv3[:, :, EMBED_DIM + hh * HEAD_DIM:EMBED_DIM + (hh + 1) * HEAD_DIM]
            v = qkv3[:, :, 2 * EMBED_DIM + hh * HEAD_DIM:2 * EMBED_DIM + (hh + 1) * HEAD_DIM]
            s = jnp.einsum("bqd,bkd->bqk", q, k,
                           preferred_element_type=jnp.float32) + key_bias
            s = s - jnp.max(s, axis=-1, keepdims=True)
            p = jnp.exp(s)
            p = p * pl.reciprocal(jnp.sum(p, axis=-1, keepdims=True), approx=True)
            ctx_heads.append(jnp.einsum("bqk,bkd->bqd", p, v,
                                        preferred_element_type=jnp.float32))
        ctx = jnp.concatenate(ctx_heads, axis=-1).reshape(rows, EMBED_DIM)
        attn = jnp.dot(ctx.astype(jnp.bfloat16), wo_ref[0],
                       preferred_element_type=jnp.float32) + bo_ref[0]
        x = x + attn

        # ---- MLP ----
        h2 = _layer_norm(x, ln2g_ref[0], ln2b_ref[0])
        m = jnp.dot(h2.astype(jnp.bfloat16), w1_ref[0],
                    preferred_element_type=jnp.float32) + b1_ref[0]
        # TODO(synk): PyTorch nn.GELU is exact (erf-based); tanh approximation used here.
        m = jax.nn.gelu(m, approximate=True)
        m = jnp.dot(m.astype(jnp.bfloat16), w2_ref[0],
                    preferred_element_type=jnp.float32) + b2_ref[0]
        x_ref[...] = x + m

    @pl.when(l == DEPTH)
    def _final():
        y = _layer_norm(x_ref[...], ng_ref[...], nb_ref[...])
        hs_ref[...] = y.reshape(1, bt_tile, SEQ_PAD, EMBED_DIM).astype(hs_ref.dtype)


# --------------------------- pallas_call wrappers ---------------------------
def fbank_pallas(frames, dft_m, mel_fb):
    nf = frames.shape[0]
    grid = pl.cdiv(nf, FB_TILE)
    nf_pad = grid * FB_TILE
    frames = frames.astype(jnp.bfloat16)
    frames = jnp.pad(frames, ((0, nf_pad - nf), (0, NFFT - FRAME_LEN)))
    out = pl.pallas_call(
        fbank_kernel,
        out_shape=jax.ShapeDtypeStruct((nf_pad, NUM_MEL), jnp.float32),
        grid=(grid,),
        in_specs=[pl.BlockSpec((FB_TILE, NFFT), lambda i: (i, 0)),
                  pl.BlockSpec((NFFT, 2 * NBIN_PAD), lambda i: (0, 0)),
                  pl.BlockSpec((NBIN_PAD, NUM_MEL), lambda i: (0, 0))],
        out_specs=pl.BlockSpec((FB_TILE, NUM_MEL), lambda i: (i, 0)),
        compiler_params=pltpu.CompilerParams(
            dimension_semantics=("parallel",),
            vmem_limit_bytes=32 * 1024 * 1024),
    )(frames, dft_m, mel_fb)
    return out[:nf]


# ------------------------- feature extraction (fbank) -----------------------
def build_fbank_constants():
    # TODO(synk): kaldi.fbank specifics (dither, Povey window, snip-edge corner cases,
    #             exact HTK/Kaldi mel warping constants) are approximated here.
    n = np.arange(FRAME_LEN, dtype=np.float64)[:, None]
    k = np.arange(NBIN, dtype=np.float64)[None, :]
    ang = 2.0 * np.pi * n * k / NFFT
    cos_b = np.cos(ang)                                                # (400, 257)
    sin_b = np.sin(ang)

    # Fold the per-frame linear preprocessing (DC-offset removal, pre-emphasis, Hann
    # window) into the DFT matrices: frame @ (C @ M @ W @ dft_base).
    N = FRAME_LEN
    window = 0.5 - 0.5 * np.cos(2.0 * np.pi * np.arange(N) / (N - 1))  # Hann
    C = np.eye(N) - np.ones((N, N)) / N                                # mean removal
    M = np.eye(N)
    M[np.arange(N - 1), np.arange(1, N)] = -PREEMPH                    # y[j] -= 0.97 x[j-1]
    M[0, 0] = 1.0 - PREEMPH
    A = C @ M @ np.diag(window)                                        # (400, 400)
    cos_m = A @ cos_b
    sin_m = A @ sin_b

    dft = np.zeros((NFFT, 2 * NBIN_PAD), dtype=np.float64)             # K padded 400->512
    dft[:FRAME_LEN, :NBIN] = cos_m
    dft[:FRAME_LEN, NBIN_PAD:NBIN_PAD + NBIN] = sin_m

    # kaldi-style mel filterbank (triangles on the 1127*ln(1+f/700) scale)
    def mel(f):
        return 1127.0 * np.log(1.0 + f / 700.0)
    low_freq, high_freq = 20.0, SAMPLE_RATE / 2.0
    mel_pts = np.linspace(mel(low_freq), mel(high_freq), NUM_MEL + 2)
    fft_freqs = np.arange(NBIN) * SAMPLE_RATE / NFFT
    mel_f = mel(fft_freqs)
    fb = np.zeros((NBIN_PAD, NUM_MEL), dtype=np.float32)
    for m in range(NUM_MEL):
        left, center, right = mel_pts[m], mel_pts[m + 1], mel_pts[m + 2]
        up = (mel_f - left) / (center - left)
        down = (right - mel_f) / (right - center)
        fb[:NBIN, m] = np.maximum(0.0, np.minimum(up, down)).astype(np.float32)
    return (jnp.asarray(dft, dtype=jnp.bfloat16),
            jnp.asarray(fb, dtype=jnp.float32))


def extract_features(padded_wavs, start_points, fb_consts):
    window_samples = int(WINDOW_SECS * SAMPLE_RATE)
    num_seg = len(start_points)
    B = padded_wavs.shape[0]
    segs = jnp.stack([padded_wavs[:, s:s + window_samples] for s in start_points], axis=0)
    flat = segs.reshape(num_seg * B, window_samples)
    nframes = 1 + (window_samples - FRAME_LEN) // FRAME_SHIFT          # 98
    # TODO(synk): the framing gather still materializes the 2.5x-expanded frame matrix in
    #             XLA; for long inputs this could move in-kernel (pl.ds-indexed segments).
    idx = np.arange(nframes)[:, None] * FRAME_SHIFT + np.arange(FRAME_LEN)[None, :]
    frames = flat[:, idx].reshape(num_seg * B * nframes, FRAME_LEN)
    logmel = fbank_pallas(frames, *fb_consts)                          # (NS*B*nframes, 128)
    logmel = logmel.reshape(num_seg * B, nframes, NUM_MEL)
    pad = TARGET_LENGTH - nframes
    logmel = jnp.pad(logmel, ((0, 0), (0, pad), (0, 0)))
    return logmel.reshape(num_seg, B, TARGET_LENGTH, NUM_MEL)


# --------------------------- AST model forward ------------------------------
def build_patches(features):
    # features: (bt, TARGET_LENGTH, NUM_MEL) -> padded flattened patches (bt, SEQ_PAD, 256)
    bt = features.shape[0]
    ft = jnp.transpose(features, (0, 2, 1))                            # (bt, 128, 100)
    p0 = ft[:, :, 0:NUM_PATCHES]                                       # (bt, 128, 99)
    p1 = ft[:, :, 1:NUM_PATCHES + 1]
    patches = jnp.stack([p0, p1], axis=-1)                             # (bt, 128, 99, 2)
    patches = jnp.transpose(patches, (0, 2, 1, 3)).reshape(bt, NUM_PATCHES, PATCH_DIM)
    # rows 0,1 -> cls/dist slots, rows 101..103 -> alignment padding (all zero)
    patches = jnp.pad(patches, ((0, 0), (CLS_TOKEN_NUM, SEQ_PAD - SEQ_LEN), (0, 0)))
    return patches.astype(jnp.bfloat16)


def build_base(params):
    # base added to the patch-embed output: cls/dist + pos for rows 0,1;
    # patch bias + pos for patch rows; zeros for padded rows.
    pos = params["pos_embed"][0]                                       # (101, D)
    cls = params["cls_token"][0, 0]
    dist = params["dist_token"][0, 0]
    base = jnp.zeros((SEQ_PAD, EMBED_DIM), jnp.float32)
    base = base.at[:SEQ_LEN].set(pos)
    base = base.at[0].add(cls)
    base = base.at[1].add(dist)
    base = base.at[CLS_TOKEN_NUM:SEQ_LEN].add(params["patch_b"])
    return base[None]                                                  # (1, SEQ_PAD, D)


def ast_forward(features, params):
    # features: (num_seg*B, TARGET_LENGTH, NUM_MEL)
    bt = features.shape[0]
    bt_pad = pl.cdiv(bt, BT_TILE) * BT_TILE
    patches = build_patches(features)
    if bt_pad != bt:
        patches = jnp.pad(patches, ((0, bt_pad - bt), (0, 0), (0, 0)))
    base = build_base(params)
    blk = params["blk"]
    bf16 = jnp.bfloat16

    def cmap(*_):                         # constant blocks
        return tuple(0 for _ in range(len(_args_shape)))

    # index maps
    def map_patch(b, l):  # noqa: E306
        return (b, 0, 0)
    def map_const3(b, l):
        return (0, 0, 0)
    def map_const2(b, l):
        return (0, 0)
    def map_layer(b, l):
        # clamp: the final (norm-only) step re-uses the last layer's (unused) weights,
        # which also keeps the DMA index unchanged -> no extra weight fetch.
        return (jnp.minimum(l, DEPTH - 1), 0, 0)
    def map_hs(b, l):
        return (l, b, 0, 0)

    grid = (bt_pad // BT_TILE, DEPTH + 1)
    hs = pl.pallas_call(
        ast_kernel,
        out_shape=jax.ShapeDtypeStruct((DEPTH + 1, bt_pad, SEQ_PAD, EMBED_DIM), bf16),
        grid=grid,
        in_specs=[
            pl.BlockSpec((BT_TILE, SEQ_PAD, PATCH_DIM), map_patch),
            pl.BlockSpec((1, SEQ_PAD, EMBED_DIM), map_const3),
            pl.BlockSpec((PATCH_DIM, EMBED_DIM), map_const2),
            pl.BlockSpec((1, 1, EMBED_DIM), map_layer),           # ln1_g
            pl.BlockSpec((1, 1, EMBED_DIM), map_layer),           # ln1_b
            pl.BlockSpec((1, EMBED_DIM, 3 * EMBED_DIM), map_layer),   # w_qkv
            pl.BlockSpec((1, 1, 3 * EMBED_DIM), map_layer),           # b_qkv
            pl.BlockSpec((1, EMBED_DIM, EMBED_DIM), map_layer),       # w_o
            pl.BlockSpec((1, 1, EMBED_DIM), map_layer),               # b_o
            pl.BlockSpec((1, 1, EMBED_DIM), map_layer),               # ln2_g
            pl.BlockSpec((1, 1, EMBED_DIM), map_layer),               # ln2_b
            pl.BlockSpec((1, EMBED_DIM, MLP_DIM), map_layer),         # w_fc1
            pl.BlockSpec((1, 1, MLP_DIM), map_layer),                 # b_fc1
            pl.BlockSpec((1, MLP_DIM, EMBED_DIM), map_layer),         # w_fc2
            pl.BlockSpec((1, 1, EMBED_DIM), map_layer),               # b_fc2
            pl.BlockSpec((1, EMBED_DIM), map_const2),                 # norm_g
            pl.BlockSpec((1, EMBED_DIM), map_const2),                 # norm_b
        ],
        out_specs=pl.BlockSpec((1, BT_TILE, SEQ_PAD, EMBED_DIM), map_hs),
        scratch_shapes=[pltpu.VMEM((BT_TILE * SEQ_PAD, EMBED_DIM), jnp.float32)],
        compiler_params=pltpu.CompilerParams(
            dimension_semantics=("parallel", "arbitrary"),
            vmem_limit_bytes=32 * 1024 * 1024),
    )(patches, base, params["patch_w"].astype(bf16),
      blk["ln1_g"], blk["ln1_b"], blk["w_qkv"].astype(bf16), blk["b_qkv"],
      blk["w_o"].astype(bf16), blk["b_o"],
      blk["ln2_g"], blk["ln2_b"], blk["w_fc1"].astype(bf16), blk["b_fc1"],
      blk["w_fc2"].astype(bf16), blk["b_fc2"],
      params["norm_g"], params["norm_b"])

    # TODO(synk): hidden-state tap points follow the s3prl convention
    #             (block inputs + post-final-norm output, cls/dist tokens stripped).
    hidden_states = [hs[l, :bt, CLS_TOKEN_NUM:SEQ_LEN, :].astype(jnp.float32)
                     for l in range(DEPTH + 1)]
    final_repr = (hs[DEPTH, :bt, 0, :].astype(jnp.float32) +
                  hs[DEPTH, :bt, 1, :].astype(jnp.float32)) / 2.0
    return hidden_states, final_repr


# -------------------------- UpstreamExpert.forward --------------------------
def upstream_forward(wavs, params, fb_consts):
    wavs_len = [int(w.shape[0]) for w in wavs]
    max_wav_len = max(wavs_len)
    window_samples = int(WINDOW_SECS * SAMPLE_RATE)
    stride_samples = int(STRIDE_SECS * SAMPLE_RATE)
    start_points = list(range(0, max_wav_len, stride_samples))
    padded_max_wav_len = start_points[-1] + window_samples
    padded_wavs = jnp.stack(
        [jnp.pad(w, (0, padded_max_wav_len - w.shape[0])) for w in wavs], axis=0)
    B = padded_wavs.shape[0]
    num_segment = len(start_points)

    all_features = extract_features(padded_wavs, start_points, fb_consts)
    flatten_features = all_features.reshape(-1, TARGET_LENGTH, NUM_MEL)

    hidden_states, _final_repr = ast_forward(flatten_features, params)

    downsample_rate = FBANK_SAMPLE_STRIDE * TSTRIDE                    # 160
    max_h_len = len(range(0, max_wav_len, downsample_rate))
    trimmed = []
    for h in hidden_states:
        d = h.shape[-1]
        h = h.reshape(num_segment, B, -1, d)
        h = jnp.transpose(h, (1, 0, 2, 3)).reshape(B, -1, d)
        trimmed.append(h[:, :max_h_len, :].astype(jnp.float32))
    return {"hidden_states": trimmed}


# ------------------------------- parameters ---------------------------------
def init_params(key):
    ks = jax.random.split(key, 8)
    init = lambda kk, shape: (0.02 * jax.random.normal(kk, shape)).astype(jnp.float32)
    params = {
        "patch_w": init(ks[0], (PATCH_DIM, EMBED_DIM)),
        "patch_b": jnp.zeros((EMBED_DIM,), jnp.float32),
        "cls_token": init(ks[1], (1, 1, EMBED_DIM)),
        "dist_token": init(ks[2], (1, 1, EMBED_DIM)),
        "pos_embed": init(ks[3], (1, SEQ_LEN, EMBED_DIM)),
        "norm_g": jnp.ones((1, EMBED_DIM), jnp.float32),
        "norm_b": jnp.zeros((1, EMBED_DIM), jnp.float32),
        # per-layer weights stacked on a leading DEPTH axis, streamed layer-by-layer
        "blk": {
            "ln1_g": jnp.ones((DEPTH, 1, EMBED_DIM), jnp.float32),
            "ln1_b": jnp.zeros((DEPTH, 1, EMBED_DIM), jnp.float32),
            "w_qkv": init(ks[4], (DEPTH, EMBED_DIM, 3 * EMBED_DIM)),
            "b_qkv": jnp.zeros((DEPTH, 1, 3 * EMBED_DIM), jnp.float32),
            "w_o": init(ks[5], (DEPTH, EMBED_DIM, EMBED_DIM)),
            "b_o": jnp.zeros((DEPTH, 1, EMBED_DIM), jnp.float32),
            "ln2_g": jnp.ones((DEPTH, 1, EMBED_DIM), jnp.float32),
            "ln2_b": jnp.zeros((DEPTH, 1, EMBED_DIM), jnp.float32),
            "w_fc1": init(ks[6], (DEPTH, EMBED_DIM, MLP_DIM)),
            "b_fc1": jnp.zeros((DEPTH, 1, MLP_DIM), jnp.float32),
            "w_fc2": init(ks[7], (DEPTH, MLP_DIM, EMBED_DIM)),
            "b_fc2": jnp.zeros((DEPTH, 1, EMBED_DIM), jnp.float32),
        },
    }
    return params


# --------------------------------- main --------------------------------------
if __name__ == "__main__":
    key = jax.random.PRNGKey(0)
    k_wav, k_par = jax.random.split(key)

    # batch of 2 waveforms with different lengths (1.25 s and ~0.81 s) -> 2 segments
    len0, len1 = 20000, 13000
    wav0 = 0.1 * jax.random.normal(jax.random.fold_in(k_wav, 0), (len0,), jnp.float32)
    wav1 = 0.1 * jax.random.normal(jax.random.fold_in(k_wav, 1), (len1,), jnp.float32)

    params = init_params(k_par)
    fb_consts = build_fbank_constants()

    out = upstream_forward([wav0, wav1], params, fb_consts)
    hs = out["hidden_states"]
    for h in hs:
        jax.block_until_ready(h)

    expected_len = len(range(0, len0, FBANK_SAMPLE_STRIDE * TSTRIDE))   # 125
    assert len(hs) == DEPTH + 1
    for h in hs:
        assert h.shape == (2, expected_len, EMBED_DIM), h.shape
        assert h.dtype == jnp.float32
        assert bool(jnp.all(jnp.isfinite(h)))

    print("KERNEL_OK")
</pallas_src>

<mosaic_0001>
module attributes {stable_mosaic.version = 11 : i64} {
  func.func @fbank_kernel(%arg0: i32, %arg1: memref<512x512xbf16, #tpu.memory_space<vmem>>, %arg2: memref<512x768xbf16, #tpu.memory_space<vmem>>, %arg3: memref<384x128xf32, #tpu.memory_space<vmem>>, %arg4: memref<512x128xf32, #tpu.memory_space<vmem>>) attributes {dimension_semantics = [#tpu.dimension_semantics<parallel>], iteration_bounds = array<i64: 1>, scalar_prefetch = 0 : i64, scratch_operands = 0 : i64, tpu.core_type = #tpu.core_type<tc>, window_params = [{transform_indices = @transform_0, window_bounds = array<i64: 512, 512>}, {pipeline_mode = #tpu.pipeline_mode<synchronous>, transform_indices = @transform_1, window_bounds = array<i64: 512, 768>}, {pipeline_mode = #tpu.pipeline_mode<synchronous>, transform_indices = @transform_2, window_bounds = array<i64: 384, 128>}, {transform_indices = @transform_3, window_bounds = array<i64: 512, 128>}]} {
    %c0 = arith.constant 0 : index
    %c0_0 = arith.constant 0 : index
    %0 = vector.load %arg1[%c0, %c0_0] : memref<512x512xbf16, #tpu.memory_space<vmem>>, vector<512x512xbf16>
    %c0_1 = arith.constant 0 : index
    %c0_2 = arith.constant 0 : index
    %1 = vector.load %arg2[%c0_1, %c0_2] : memref<512x768xbf16, #tpu.memory_space<vmem>>, vector<512x768xbf16>
    %cst = arith.constant dense<0.000000e+00> : vector<512x768xf32>
    %2 = tpu.matmul %0, %1, %cst {dimension_numbers = #tpu.dot_dimension_numbers<[1], [0], [0], [1], [0, 0, 1, 1], [], []>} : vector<512x512xbf16>, vector<512x768xbf16>, vector<512x768xf32> -> vector<512x768xf32>
    %3 = vector.extract_strided_slice %2 {offsets = [0, 0], sizes = [512, 384], strides = [1, 1]} : vector<512x768xf32> to vector<512x384xf32>
    %4 = vector.extract_strided_slice %2 {offsets = [0, 384], sizes = [512, 384], strides = [1, 1]} : vector<512x768xf32> to vector<512x384xf32>
    %5 = arith.mulf %3, %3 : vector<512x384xf32>
    %6 = arith.mulf %4, %4 : vector<512x384xf32>
    %7 = arith.addf %5, %6 : vector<512x384xf32>
    %c0_3 = arith.constant 0 : index
    %c0_4 = arith.constant 0 : index
    %8 = vector.load %arg3[%c0_3, %c0_4] : memref<384x128xf32, #tpu.memory_space<vmem>>, vector<384x128xf32>
    %cst_5 = arith.constant dense<0.000000e+00> : vector<512x128xf32>
    %9 = tpu.matmul %7, %8, %cst_5 {dimension_numbers = #tpu.dot_dimension_numbers<[1], [0], [0], [1], [0, 0, 1, 1], [], []>} : vector<512x384xf32>, vector<384x128xf32>, vector<512x128xf32> -> vector<512x128xf32>
    %cst_6 = arith.constant 1.1920929E-7 : f32
    %10 = vector.broadcast %cst_6 : f32 to vector<512x128xf32>
    %11 = arith.maximumf %9, %10 : vector<512x128xf32>
    %12 = math.log %11 : vector<512x128xf32>
    %cst_7 = arith.constant -4.2677393 : f32
    %13 = vector.broadcast %cst_7 : f32 to vector<512x128xf32>
    %14 = arith.subf %12, %13 : vector<512x128xf32>
    %cst_8 = arith.constant 0.109433196 : f32
    %15 = vector.broadcast %cst_8 : f32 to vector<512x128xf32>
    %16 = arith.mulf %14, %15 : vector<512x128xf32>
    %c0_9 = arith.constant 0 : index
    %c0_10 = arith.constant 0 : index
    %17 = vector.load %arg4[%c0_9, %c0_10] : memref<512x128xf32, #tpu.memory_space<vmem>>, vector<512x128xf32>
    tpu.vector_store %arg4[%c0_9, %c0_10], %16 {strides = array<i32>} : memref<512x128xf32, #tpu.memory_space<vmem>>, vector<512x128xf32>,
    return
  }
  func.func @transform_0(%arg0: i32) -> (i32, i32) {
    %c0_i32 = arith.constant 0 : i32
    %c0_i32_0 = arith.constant 0 : i32
    return %arg0, %c0_i32 : i32, i32
  }
  func.func @transform_1(%arg0: i32) -> (i32, i32) {
    %c0_i32 = arith.constant 0 : i32
    %c0_i32_0 = arith.constant 0 : i32
    %c0_i32_1 = arith.constant 0 : i32
    return %c0_i32, %c0_i32_0 : i32, i32
  }
  func.func @transform_2(%arg0: i32) -> (i32, i32) {
    %c0_i32 = arith.constant 0 : i32
    %c0_i32_0 = arith.constant 0 : i32
    %c0_i32_1 = arith.constant 0 : i32
    return %c0_i32, %c0_i32_0 : i32, i32
  }
  func.func @transform_3(%arg0: i32) -> (i32, i32) {
    %c0_i32 = arith.constant 0 : i32
    %c0_i32_0 = arith.constant 0 : i32
    return %arg0, %c0_i32 : i32, i32
  }
}

</mosaic_0001>

<llo_original>
// kernel: tpu_custom_call.1
$region0: #{tpu_custom_call.1}
  #allocation0 [shape = 'u32[]', space=smem, size = 0x4, offset = 0x4, fixed_abs, tag = 'smem constant byte address 0x4 - core index']
  #allocation1 [shape = 'u32[144,128]{1,0:T(1,128)}', space=vmem, size = 0x12000, scoped, tag = 'internal scratch']
  %s0 = inlined_call_operand.hbm [shape: bf16[512,512], index: 0, kind: input, shape index: {}]
  %s1 = inlined_call_operand.hbm [shape: bf16[512,768], index: 1, kind: input, shape index: {}]
  %s2 = inlined_call_operand.hbm [shape: f32[384,128], index: 2, kind: input, shape index: {}]
  %s3 = inlined_call_operand.hbm [shape: f32[512,128], index: 3, kind: output, shape index: {}]
  %s4 = sld [smem:[#allocation0]]
  $region34: #{tpu_custom_call.1} parent=0
    _
  %s6 = ssub.s32 1, %s4
  %s7 = scalar_select 0, %s6, %s4
  $region1: #{tpu_custom_call.1} parent=0
    #allocation2 [shape = 'u8[524288]{0}', space=vmem, size = 0x80000, scoped, tag = 'input window, operand 0, single buffered']
    #allocation3 [shape = 's32[1]{0}', space=sflag, size = 0x4, scoped, tag = 'scoped memory for tpu_custom_call.1']
    #allocation4 [shape = 's32[1]{0}', space=sflag, size = 0x4, scoped, tag = 'scoped memory for tpu_custom_call.1']
    #allocation5 [shape = 'u8[786432]{0}', space=vmem, size = 0xc0000, scoped, tag = 'input window, operand 1, single buffered']
    #allocation6 [shape = 's32[1]{0}', space=sflag, size = 0x4, scoped, tag = 'scoped memory for tpu_custom_call.1']
    #allocation7 [shape = 'u8[196608]{0}', space=vmem, size = 0x30000, scoped, tag = 'input window, operand 2, single buffered']
    #allocation8 [shape = 'u8[262144]{0}', space=vmem, size = 0x40000, scoped, tag = 'output window, operand 0, single buffered']
    %8 = vsyncpa [#allocation3], 0
    %9 = vsyncpa [#allocation6], 0
    %10 = vsyncpa [#allocation4], 0
    // Predicated region
    $region2: #{tpu_custom_call.1} parent=1 // pred_check
      _
    $region3: #{tpu_custom_call.1} parent=1 // pred_check_branch
      %12 = sbr.rel (0) target = $region5
    $region4: #{tpu_custom_call.1} parent=1 // pred_region
      %s14 = ssub.s32 16384, 16384
      %15 = vsyncadd [#allocation3], %s14
      %s16 = sshll.u32 [#allocation2], 4
      %s17 = int_to_ptr.vmem [resolvable:$true] %s16
      %22 = dma.hbm_to_vmem [thread:$0]  %s0, 16384, %s17, [#allocation3], 256, 256, 16
    $region5: #{tpu_custom_call.1} parent=1 // pred_fallthru
      _
    // Predicated region
    $region6: #{tpu_custom_call.1} parent=1 // pred_check
      _
    $region7: #{tpu_custom_call.1} parent=1 // pred_check_branch
      %24 = sbr.rel (0) target = $region9
    $region8: #{tpu_custom_call.1} parent=1 // pred_region
      %s26 = ssub.s32 24576, 24576
      %27 = vsyncadd [#allocation6], %s26
      %s28 = sshll.u32 [#allocation5], 4
      %s29 = int_to_ptr.vmem [resolvable:$true] %s28
      %34 = dma.hbm_to_vmem [thread:$0]  %s1, 24576, %s29, [#allocation6], 384, 384, 24
    $region9: #{tpu_custom_call.1} parent=1 // pred_fallthru
      _
    // Predicated region
    $region10: #{tpu_custom_call.1} parent=1 // pred_check
      _
    $region11: #{tpu_custom_call.1} parent=1 // pred_check_branch
      %36 = sbr.rel (0) target = $region13
    $region12: #{tpu_custom_call.1} parent=1 // pred_region
      %s38 = ssub.s32 6144, 6144
      %39 = vsyncadd [#allocation6], %s38
      %s40 = sshll.u32 [#allocation7], 4
      %s41 = int_to_ptr.vmem [resolvable:$true] %s40
      %46 = dma.hbm_to_vmem [thread:$0]  %s2, 6144, %s41, [#allocation6], 128, 128, 8
    $region13: #{tpu_custom_call.1} parent=1 // pred_fallthru
      _
    // Predicated region
    $region14: #{tpu_custom_call.1} parent=1 // pred_check
      _
    $region15: #{tpu_custom_call.1} parent=1 // pred_check_branch
      %48 = sbr.rel (0) target = $region17
    $region16: #{tpu_custom_call.1} parent=1 // pred_region
      %49 = dma.done [#allocation3], 16384
    $region17: #{tpu_custom_call.1} parent=1 // pred_fallthru
      _
    // Predicated region
    $region18: #{tpu_custom_call.1} parent=1 // pred_check
      _
    $region19: #{tpu_custom_call.1} parent=1 // pred_check_branch
      %51 = sbr.rel (0) target = $region21
    $region20: #{tpu_custom_call.1} parent=1 // pred_region
      %52 = dma.done [#allocation6], 24576
    $region21: #{tpu_custom_call.1} parent=1 // pred_fallthru
      _
    // Predicated region
    $region22: #{tpu_custom_call.1} parent=1 // pred_check
      _
    $region23: #{tpu_custom_call.1} parent=1 // pred_check_branch
      %54 = sbr.rel (0) target = $region25
    $region24: #{tpu_custom_call.1} parent=1 // pred_region
      %55 = dma.done [#allocation6], 6144
    $region25: #{tpu_custom_call.1} parent=1 // pred_fallthru
      _
    %v56 = vld [vmem:[#allocation2] sm:$0xff]
    %v57 = vld [vmem:[#allocation2 + $0x8] sm:$0xff]
    %v58 = vld [vmem:[#allocation2 + $0x10] sm:$0xff]
    %v59 = vld [vmem:[#allocation2 + $0x18] sm:$0xff]
    %v60 = vld [vmem:[#allocation2 + $0x20] sm:$0xff]
    %v61 = vld [vmem:[#allocation2 + $0x28] sm:$0xff]
    %v62 = vld [vmem:[#allocation2 + $0x30] sm:$0xff]
    %v63 = vld [vmem:[#allocation2 + $0x38] sm:$0xff]
    %v64 = vld [vmem:[#allocation2 + $0x40] sm:$0xff]
    %v65 = vld [vmem:[#allocation2 + $0x48] sm:$0xff]
    %v66 = vld [vmem:[#allocation2 + $0x50] sm:$0xff]
    %v67 = vld [vmem:[#allocation2 + $0x58] sm:$0xff]
    %v68 = vld [vmem:[#allocation2 + $0x60] sm:$0xff]
    %v69 = vld [vmem:[#allocation2 + $0x68] sm:$0xff]
    %v70 = vld [vmem:[#allocation2 + $0x70] sm:$0xff]
    %v71 = vld [vmem:[#allocation2 + $0x78] sm:$0xff]
    %v72 = vld [vmem:[#allocation2 + $0x80] sm:$0xff]
    %v73 = vld [vmem:[#allocation2 + $0x88] sm:$0xff]
    %v74 = vld [vmem:[#allocation2 + $0x90] sm:$0xff]
    %v75 = vld [vmem:[#allocation2 + $0x98] sm:$0xff]
    %v76 = vld [vmem:[#allocation2 + $0xa0] sm:$0xff]
    %v77 = vld [vmem:[#allocation2 + $0xa8] sm:$0xff]
    %v78 = vld [vmem:[#allocation2 + $0xb0] sm:$0xff]
    %v79 = vld [vmem:[#allocation2 + $0xb8] sm:$0xff]
    %v80 = vld [vmem:[#allocation2 + $0xc0] sm:$0xff]
    %v81 = vld [vmem:[#allocation2 + $0xc8] sm:$0xff]
    %v82 = vld [vmem:[#allocation2 + $0xd0] sm:$0xff]
    %v83 = vld [vmem:[#allocation2 + $0xd8] sm:$0xff]
    %v84 = vld [vmem:[#allocation2 + $0xe0] sm:$0xff]
    %v85 = vld [vmem:[#allocation2 + $0xe8] sm:$0xff]
    %v86 = vld [vmem:[#allocation2 + $0xf0] sm:$0xff]
    %v87 = vld [vmem:[#allocation2 + $0xf8] sm:$0xff]
    %v88 = vld [vmem:[#allocation2 + $0x100] sm:$0xff]
    %v89 = vld [vmem:[#allocation2 + $0x108] sm:$0xff]
    %v90 = vld [vmem:[#allocation2 + $0x110] sm:$0xff]
    %v91 = vld [vmem:[#allocation2 + $0x118] sm:$0xff]
    %v92 = vld [vmem:[#allocation2 + $0x120] sm:$0xff]
    %v93 = vld [vmem:[#allocation2 + $0x128] sm:$0xff]
    %v94 = vld [vmem:[#allocation2 + $0x130] sm:$0xff]
    %v95 = vld [vmem:[#allocation2 + $0x138] sm:$0xff]
    %v96 = vld [vmem:[#allocation2 + $0x140] sm:$0xff]
    %v97 = vld [vmem:[#allocation2 + $0x148] sm:$0xff]
    %v98 = vld [vmem:[#allocation2 + $0x150] sm:$0xff]
    %v99 = vld [vmem:[#allocation2 + $0x158] sm:$0xff]
    %v100 = vld [vmem:[#allocation2 + $0x160] sm:$0xff]
    %v101 = vld [vmem:[#allocation2 + $0x168] sm:$0xff]
    %v102 = vld [vmem:[#allocation2 + $0x170] sm:$0xff]
    %v103 = vld [vmem:[#allocation2 + $0x178] sm:$0xff]
    %v104 = vld [vmem:[#allocation2 + $0x180] sm:$0xff]
    %v105 = vld [vmem:[#allocation2 + $0x188] sm:$0xff]
    %v106 = vld [vmem:[#allocation2 + $0x190] sm:$0xff]
    %v107 = vld [vmem:[#allocation2 + $0x198] sm:$0xff]
    %v108 = vld [vmem:[#allocation2 + $0x1a0] sm:$0xff]
    %v109 = vld [vmem:[#allocation2 + $0x1a8] sm:$0xff]
    %v110 = vld [vmem:[#allocation2 + $0x1b0] sm:$0xff]
    %v111 = vld [vmem:[#allocation2 + $0x1b8] sm:$0xff]
    %v112 = vld [vmem:[#allocation2 + $0x1c0] sm:$0xff]
    %v113 = vld [vmem:[#allocation2 + $0x1c8] sm:$0xff]
    %v114 = vld [vmem:[#allocation2 + $0x1d0] sm:$0xff]
    %v115 = vld [vmem:[#allocation2 + $0x1d8] sm:$0xff]
    %v116 = vld [vmem:[#allocation2 + $0x1e0] sm:$0xff]
    %v117 = vld [vmem:[#allocation2 + $0x1e8] sm:$0xff]
    %v118 = vld [vmem:[#allocation2 + $0x1f0] sm:$0xff]
    %v119 = vld [vmem:[#allocation2 + $0x1f8] sm:$0xff]
    %v120 = vld [vmem:[#allocation2 + $0x200] sm:$0xff]
    %v121 = vld [vmem:[#allocation2 + $0x208] sm:$0xff]
    %v122 = vld [vmem:[#allocation2 + $0x210] sm:$0xff]
    %v123 = vld [vmem:[#allocation2 + $0x218] sm:$0xff]
    %v124 = vld [vmem:[#allocation2 + $0x220] sm:$0xff]
    %v125 = vld [vmem:[#allocation2 + $0x228] sm:$0xff]
    %v126 = vld [vmem:[#allocation2 + $0x230] sm:$0xff]
    %v127 = vld [vmem:[#allocation2 + $0x238] sm:$0xff]
    %v128 = vld [vmem:[#allocation2 + $0x240] sm:$0xff]
    %v129 = vld [vmem:[#allocation2 + $0x248] sm:$0xff]
    %v130 = vld [vmem:[#allocation2 + $0x250] sm:$0xff]
    %v131 = vld [vmem:[#allocation2 + $0x258] sm:$0xff]
    %v132 = vld [vmem:[#allocation2 + $0x260] sm:$0xff]
    %v133 = vld [vmem:[#allocation2 + $0x268] sm:$0xff]
    %v134 = vld [vmem:[#allocation2 + $0x270] sm:$0xff]
    %v135 = vld [vmem:[#allocation2 + $0x278] sm:$0xff]
    %v136 = vld [vmem:[#allocation2 + $0x280] sm:$0xff]
    %v137 = vld [vmem:[#allocation2 + $0x288] sm:$0xff]
    %v138 = vld [vmem:[#allocation2 + $0x290] sm:$0xff]
    %v139 = vld [vmem:[#allocation2 + $0x298] sm:$0xff]
    %v140 = vld [vmem:[#allocation2 + $0x2a0] sm:$0xff]
    %v141 = vld [vmem:[#allocation2 + $0x2a8] sm:$0xff]
    %v142 = vld [vmem:[#allocation2 + $0x2b0] sm:$0xff]
    %v143 = vld [vmem:[#allocation2 + $0x2b8] sm:$0xff]
    %v144 = vld [vmem:[#allocation2 + $0x2c0] sm:$0xff]
    %v145 = vld [vmem:[#allocation2 + $0x2c8] sm:$0xff]
    %v146 = vld [vmem:[#allocation2 + $0x2d0] sm:$0xff]
    %v147 = vld [vmem:[#allocation2 + $0x2d8] sm:$0xff]
    %v148 = vld [vmem:[#allocation2 + $0x2e0] sm:$0xff]
    %v149 = vld [vmem:[#allocation2 + $0x2e8] sm:$0xff]
    %v150 = vld [vmem:[#allocation2 + $0x2f0] sm:$0xff]
    %v151 = vld [vmem:[#allocation2 + $0x2f8] sm:$0xff]
    %v152 = vld [vmem:[#allocation2 + $0x300] sm:$0xff]
    %v153 = vld [vmem:[#allocation2 + $0x308] sm:$0xff]
    %v154 = vld [vmem:[#allocation2 + $0x310] sm:$0xff]
    %v155 = vld [vmem:[#allocation2 + $0x318] sm:$0xff]
    %v156 = vld [vmem:[#allocation2 + $0x320] sm:$0xff]
    %v157 = vld [vmem:[#allocation2 + $0x328] sm:$0xff]
    %v158 = vld [vmem:[#allocation2 + $0x330] sm:$0xff]
    %v159 = vld [vmem:[#allocation2 + $0x338] sm:$0xff]
    %v160 = vld [vmem:[#allocation2 + $0x340] sm:$0xff]
    %v161 = vld [vmem:[#allocation2 + $0x348] sm:$0xff]
    %v162 = vld [vmem:[#allocation2 + $0x350] sm:$0xff]
    %v163 = vld [vmem:[#allocation2 + $0x358] sm:$0xff]
    %v164 = vld [vmem:[#allocation2 + $0x360] sm:$0xff]
    %v165 = vld [vmem:[#allocation2 + $0x368] sm:$0xff]
    %v166 = vld [vmem:[#allocation2 + $0x370] sm:$0xff]
    %v167 = vld [vmem:[#allocation2 + $0x378] sm:$0xff]
    %v168 = vld [vmem:[#allocation2 + $0x380] sm:$0xff]
    %v169 = vld [vmem:[#allocation2 + $0x388] sm:$0xff]
    %v170 = vld [vmem:[#allocation2 + $0x390] sm:$0xff]
    %v171 = vld [vmem:[#allocation2 + $0x398] sm:$0xff]
    %v172 = vld [vmem:[#allocation2 + $0x3a0] sm:$0xff]
    %v173 = vld [vmem:[#allocation2 + $0x3a8] sm:$0xff]
    %v174 = vld [vmem:[#allocation2 + $0x3b0] sm:$0xff]
    %v175 = vld [vmem:[#allocation2 + $0x3b8] sm:$0xff]
    %v176 = vld [vmem:[#allocation2 + $0x3c0] sm:$0xff]
    %v177 = vld [vmem:[#allocation2 + $0x3c8] sm:$0xff]
    %v178 = vld [vmem:[#allocation2 + $0x3d0] sm:$0xff]
    %v179 = vld [vmem:[#allocation2 + $0x3d8] sm:$0xff]
    %v180 = vld [vmem:[#allocation2 + $0x3e0] sm:$0xff]
    %v181 = vld [vmem:[#allocation2 + $0x3e8] sm:$0xff]
    %v182 = vld [vmem:[#allocation2 + $0x3f0] sm:$0xff]
    %v183 = vld [vmem:[#allocation2 + $0x3f8] sm:$0xff]
    %v184 = vld [vmem:[#allocation5] sm:$0xff]
    %v185 = vld [vmem:[#allocation5 + $0x8] sm:$0xff]
    %v186 = vld [vmem:[#allocation5 + $0x10] sm:$0xff]
    %v187 = vld [vmem:[#allocation5 + $0x18] sm:$0xff]
    %v188 = vld [vmem:[#allocation5 + $0x20] sm:$0xff]
    %v189 = vld [vmem:[#allocation5 + $0x28] sm:$0xff]
    %v190 = vld [vmem:[#allocation5 + $0x30] sm:$0xff]
    %v191 = vld [vmem:[#allocation5 + $0x38] sm:$0xff]
    %v192 = vld [vmem:[#allocation5 + $0x40] sm:$0xff]
    %v193 = vld [vmem:[#allocation5 + $0x48] sm:$0xff]
    %v194 = vld [vmem:[#allocation5 + $0x50] sm:$0xff]
    %v195 = vld [vmem:[#allocation5 + $0x58] sm:$0xff]
    %v196 = vld [vmem:[#allocation5 + $0x60] sm:$0xff]
    %v197 = vld [vmem:[#allocation5 + $0x68] sm:$0xff]
    %v198 = vld [vmem:[#allocation5 + $0x70] sm:$0xff]
    %v199 = vld [vmem:[#allocation5 + $0x78] sm:$0xff]
    %v200 = vld [vmem:[#allocation5 + $0x80] sm:$0xff]
    %v201 = vld [vmem:[#allocation5 + $0x88] sm:$0xff]
    %v202 = vld [vmem:[#allocation5 + $0x90] sm:$0xff]
    %v203 = vld [vmem:[#allocation5 + $0x98] sm:$0xff]
    %v204 = vld [vmem:[#allocation5 + $0xa0] sm:$0xff]
    %v205 = vld [vmem:[#allocation5 + $0xa8] sm:$0xff]
    %v206 = vld [vmem:[#allocation5 + $0xb0] sm:$0xff]
    %v207 = vld [vmem:[#allocation5 + $0xb8] sm:$0xff]
    %v208 = vld [vmem:[#allocation5 + $0xc0] sm:$0xff]
    %v209 = vld [vmem:[#allocation5 + $0xc8] sm:$0xff]
    %v210 = vld [vmem:[#allocation5 + $0xd0] sm:$0xff]
    %v211 = vld [vmem:[#allocation5 + $0xd8] sm:$0xff]
    %v212 = vld [vmem:[#allocation5 + $0xe0] sm:$0xff]
    %v213 = vld [vmem:[#allocation5 + $0xe8] sm:$0xff]
    %v214 = vld [vmem:[#allocation5 + $0xf0] sm:$0xff]
    %v215 = vld [vmem:[#allocation5 + $0xf8] sm:$0xff]
    %v216 = vld [vmem:[#allocation5 + $0x100] sm:$0xff]
    %v217 = vld [vmem:[#allocation5 + $0x108] sm:$0xff]
    %v218 = vld [vmem:[#allocation5 + $0x110] sm:$0xff]
    %v219 = vld [vmem:[#allocation5 + $0x118] sm:$0xff]
    %v220 = vld [vmem:[#allocation5 + $0x120] sm:$0xff]
    %v221 = vld [vmem:[#allocation5 + $0x128] sm:$0xff]
    %v222 = vld [vmem:[#allocation5 + $0x130] sm:$0xff]
    %v223 = vld [vmem:[#allocation5 + $0x138] sm:$0xff]
    %v224 = vld [vmem:[#allocation5 + $0x140] sm:$0xff]
    %v225 = vld [vmem:[#allocation5 + $0x148] sm:$0xff]
    %v226 = vld [vmem:[#allocation5 + $0x150] sm:$0xff]
    %v227 = vld [vmem:[#allocation5 + $0x158] sm:$0xff]
    %v228 = vld [vmem:[#allocation5 + $0x160] sm:$0xff]
    %v229 = vld [vmem:[#allocation5 + $0x168] sm:$0xff]
    %v230 = vld [vmem:[#allocation5 + $0x170] sm:$0xff]
    %v231 = vld [vmem:[#allocation5 + $0x178] sm:$0xff]
    %v232 = vld [vmem:[#allocation5 + $0x180] sm:$0xff]
    %v233 = vld [vmem:[#allocation5 + $0x188] sm:$0xff]
    %v234 = vld [vmem:[#allocation5 + $0x190] sm:$0xff]
    %v235 = vld [vmem:[#allocation5 + $0x198] sm:$0xff]
    %v236 = vld [vmem:[#allocation5 + $0x1a0] sm:$0xff]
    %v237 = vld [vmem:[#allocation5 + $0x1a8] sm:$0xff]
    %v238 = vld [vmem:[#allocation5 + $0x1b0] sm:$0xff]
    %v239 = vld [vmem:[#allocation5 + $0x1b8] sm:$0xff]
    %v240 = vld [vmem:[#allocation5 + $0x1c0] sm:$0xff]
    %v241 = vld [vmem:[#allocation5 + $0x1c8] sm:$0xff]
    %v242 = vld [vmem:[#allocation5 + $0x1d0] sm:$0xff]
    %v243 = vld [vmem:[#allocation5 + $0x1d8] sm:$0xff]
    %v244 = vld [vmem:[#allocation5 + $0x1e0] sm:$0xff]
    %v245 = vld [vmem:[#allocation5 + $0x1e8] sm:$0xff]
    %v246 = vld [vmem:[#allocation5 + $0x1f0] sm:$0xff]
    %v247 = vld [vmem:[#allocation5 + $0x1f8] sm:$0xff]
    %v248 = vld [vmem:[#allocation5 + $0x200] sm:$0xff]
    %v249 = vld [vmem:[#allocation5 + $0x208] sm:$0xff]
    %v250 = vld [vmem:[#allocation5 + $0x210] sm:$0xff]
    %v251 = vld [vmem:[#allocation5 + $0x218] sm:$0xff]
    %v252 = vld [vmem:[#allocation5 + $0x220] sm:$0xff]
    %v253 = vld [vmem:[#allocation5 + $0x228] sm:$0xff]
    %v254 = vld [vmem:[#allocation5 + $0x230] sm:$0xff]
    %v255 = vld [vmem:[#allocation5 + $0x238] sm:$0xff]
    %v256 = vld [vmem:[#allocation5 + $0x240] sm:$0xff]
    %v257 = vld [vmem:[#allocation5 + $0x248] sm:$0xff]
    %v258 = vld [vmem:[#allocation5 + $0x250] sm:$0xff]
    %v259 = vld [vmem:[#allocation5 + $0x258] sm:$0xff]
    %v260 = vld [vmem:[#allocation5 + $0x260] sm:$0xff]
    %v261 = vld [vmem:[#allocation5 + $0x268] sm:$0xff]
    %v262 = vld [vmem:[#allocation5 + $0x270] sm:$0xff]
    %v263 = vld [vmem:[#allocation5 + $0x278] sm:$0xff]
    %v264 = vld [vmem:[#allocation5 + $0x280] sm:$0xff]
    %v265 = vld [vmem:[#allocation5 + $0x288] sm:$0xff]
    %v266 = vld [vmem:[#allocation5 + $0x290] sm:$0xff]
    %v267 = vld [vmem:[#allocation5 + $0x298] sm:$0xff]
    %v268 = vld [vmem:[#allocation5 + $0x2a0] sm:$0xff]
    %v269 = vld [vmem:[#allocation5 + $0x2a8] sm:$0xff]
    %v270 = vld [vmem:[#allocation5 + $0x2b0] sm:$0xff]
    %v271 = vld [vmem:[#allocation5 + $0x2b8] sm:$0xff]
    %v272 = vld [vmem:[#allocation5 + $0x2c0] sm:$0xff]
    %v273 = vld [vmem:[#allocation5 + $0x2c8] sm:$0xff]
    %v274 = vld [vmem:[#allocation5 + $0x2d0] sm:$0xff]
    %v275 = vld [vmem:[#allocation5 + $0x2d8] sm:$0xff]
    %v276 = vld [vmem:[#allocation5 + $0x2e0] sm:$0xff]
    %v277 = vld [vmem:[#allocation5 + $0x2e8] sm:$0xff]
    %v278 = vld [vmem:[#allocation5 + $0x2f0] sm:$0xff]
    %v279 = vld [vmem:[#allocation5 + $0x2f8] sm:$0xff]
    %v280 = vld [vmem:[#allocation5 + $0x300] sm:$0xff]
    %v281 = vld [vmem:[#allocation5 + $0x308] sm:$0xff]
    %v282 = vld [vmem:[#allocation5 + $0x310] sm:$0xff]
    %v283 = vld [vmem:[#allocation5 + $0x318] sm:$0xff]
    %v284 = vld [vmem:[#allocation5 + $0x320] sm:$0xff]
    %v285 = vld [vmem:[#allocation5 + $0x328] sm:$0xff]
    %v286 = vld [vmem:[#allocation5 + $0x330] sm:$0xff]
    %v287 = vld [vmem:[#allocation5 + $0x338] sm:$0xff]
    %v288 = vld [vmem:[#allocation5 + $0x340] sm:$0xff]
    %v289 = vld [vmem:[#allocation5 + $0x348] sm:$0xff]
    %v290 = vld [vmem:[#allocation5 + $0x350] sm:$0xff]
    %v291 = vld [vmem:[#allocation5 + $0x358] sm:$0xff]
    %v292 = vld [vmem:[#allocation5 + $0x360] sm:$0xff]
    %v293 = vld [vmem:[#allocation5 + $0x368] sm:$0xff]
    %v294 = vld [vmem:[#allocation5 + $0x370] sm:$0xff]
    %v295 = vld [vmem:[#allocation5 + $0x378] sm:$0xff]
    %v296 = vld [vmem:[#allocation5 + $0x380] sm:$0xff]
    %v297 = vld [vmem:[#allocation5 + $0x388] sm:$0xff]
    %v298 = vld [vmem:[#allocation5 + $0x390] sm:$0xff]
    %v299 = vld [vmem:[#allocation5 + $0x398] sm:$0xff]
    %v300 = vld [vmem:[#allocation5 + $0x3a0] sm:$0xff]
    %v301 = vld [vmem:[#allocation5 + $0x3a8] sm:$0xff]
    %v302 = vld [vmem:[#allocation5 + $0x3b0] sm:$0xff]
    %v303 = vld [vmem:[#allocation5 + $0x3b8] sm:$0xff]
    %v304 = vld [vmem:[#allocation5 + $0x3c0] sm:$0xff]
    %v305 = vld [vmem:[#allocation5 + $0x3c8] sm:$0xff]
    %v306 = vld [vmem:[#allocation5 + $0x3d0] sm:$0xff]
    %v307 = vld [vmem:[#allocation5 + $0x3d8] sm:$0xff]
    %v308 = vld [vmem:[#allocation5 + $0x3e0] sm:$0xff]
    %v309 = vld [vmem:[#allocation5 + $0x3e8] sm:$0xff]
    %v310 = vld [vmem:[#allocation5 + $0x3f0] sm:$0xff]
    %v311 = vld [vmem:[#allocation5 + $0x3f8] sm:$0xff]
    %v312 = vld [vmem:[#allocation5 + $0x400] sm:$0xff]
    %v313 = vld [vmem:[#allocation5 + $0x408] sm:$0xff]
    %v314 = vld [vmem:[#allocation5 + $0x410] sm:$0xff]
    %v315 = vld [vmem:[#allocation5 + $0x418] sm:$0xff]
    %v316 = vld [vmem:[#allocation5 + $0x420] sm:$0xff]
    %v317 = vld [vmem:[#allocation5 + $0x428] sm:$0xff]
    %v318 = vld [vmem:[#allocation5 + $0x430] sm:$0xff]
    %v319 = vld [vmem:[#allocation5 + $0x438] sm:$0xff]
    %v320 = vld [vmem:[#allocation5 + $0x440] sm:$0xff]
    %v321 = vld [vmem:[#allocation5 + $0x448] sm:$0xff]
    %v322 = vld [vmem:[#allocation5 + $0x450] sm:$0xff]
    %v323 = vld [vmem:[#allocation5 + $0x458] sm:$0xff]
    %v324 = vld [vmem:[#allocation5 + $0x460] sm:$0xff]
    %v325 = vld [vmem:[#allocation5 + $0x468] sm:$0xff]
    %v326 = vld [vmem:[#allocation5 + $0x470] sm:$0xff]
    %v327 = vld [vmem:[#allocation5 + $0x478] sm:$0xff]
    %v328 = vld [vmem:[#allocation5 + $0x480] sm:$0xff]
    %v329 = vld [vmem:[#allocation5 + $0x488] sm:$0xff]
    %v330 = vld [vmem:[#allocation5 + $0x490] sm:$0xff]
    %v331 = vld [vmem:[#allocation5 + $0x498] sm:$0xff]
    %v332 = vld [vmem:[#allocation5 + $0x4a0] sm:$0xff]
    %v333 = vld [vmem:[#allocation5 + $0x4a8] sm:$0xff]
    %v334 = vld [vmem:[#allocation5 + $0x4b0] sm:$0xff]
    %v335 = vld [vmem:[#allocation5 + $0x4b8] sm:$0xff]
    %v336 = vld [vmem:[#allocation5 + $0x4c0] sm:$0xff]
    %v337 = vld [vmem:[#allocation5 + $0x4c8] sm:$0xff]
    %v338 = vld [vmem:[#allocation5 + $0x4d0] sm:$0xff]
    %v339 = vld [vmem:[#allocation5 + $0x4d8] sm:$0xff]
    %v340 = vld [vmem:[#allocation5 + $0x4e0] sm:$0xff]
    %v341 = vld [vmem:[#allocation5 + $0x4e8] sm:$0xff]
    %v342 = vld [vmem:[#allocation5 + $0x4f0] sm:$0xff]
    %v343 = vld [vmem:[#allocation5 + $0x4f8] sm:$0xff]
    %v344 = vld [vmem:[#allocation5 + $0x500] sm:$0xff]
    %v345 = vld [vmem:[#allocation5 + $0x508] sm:$0xff]
    %v346 = vld [vmem:[#allocation5 + $0x510] sm:$0xff]
    %v347 = vld [vmem:[#allocation5 + $0x518] sm:$0xff]
    %v348 = vld [vmem:[#allocation5 + $0x520] sm:$0xff]
    %v349 = vld [vmem:[#allocation5 + $0x528] sm:$0xff]
    %v350 = vld [vmem:[#allocation5 + $0x530] sm:$0xff]
    %v351 = vld [vmem:[#allocation5 + $0x538] sm:$0xff]
    %v352 = vld [vmem:[#allocation5 + $0x540] sm:$0xff]
    %v353 = vld [vmem:[#allocation5 + $0x548] sm:$0xff]
    %v354 = vld [vmem:[#allocation5 + $0x550] sm:$0xff]
    %v355 = vld [vmem:[#allocation5 + $0x558] sm:$0xff]
    %v356 = vld [vmem:[#allocation5 + $0x560] sm:$0xff]
    %v357 = vld [vmem:[#allocation5 + $0x568] sm:$0xff]
    %v358 = vld [vmem:[#allocation5 + $0x570] sm:$0xff]
    %v359 = vld [vmem:[#allocation5 + $0x578] sm:$0xff]
    %v360 = vld [vmem:[#allocation5 + $0x580] sm:$0xff]
    %v361 = vld [vmem:[#allocation5 + $0x588] sm:$0xff]
    %v362 = vld [vmem:[#allocation5 + $0x590] sm:$0xff]
    %v363 = vld [vmem:[#allocation5 + $0x598] sm:$0xff]
    %v364 = vld [vmem:[#allocation5 + $0x5a0] sm:$0xff]
    %v365 = vld [vmem:[#allocation5 + $0x5a8] sm:$0xff]
    %v366 = vld [vmem:[#allocation5 + $0x5b0] sm:$0xff]
    %v367 = vld [vmem:[#allocation5 + $0x5b8] sm:$0xff]
    %v368 = vld [vmem:[#allocation5 + $0x5c0] sm:$0xff]
    %v369 = vld [vmem:[#allocation5 + $0x5c8] sm:$0xff]
    %v370 = vld [vmem:[#allocation5 + $0x5d0] sm:$0xff]
    %v371 = vld [vmem:[#allocation5 + $0x5d8] sm:$0xff]
    %v372 = vld [vmem:[#allocation5 + $0x5e0] sm:$0xff]
    %v373 = vld [vmem:[#allocation5 + $0x5e8] sm:$0xff]
    %v374 = vld [vmem:[#allocation5 + $0x5f0] sm:$0xff]
    %v375 = vld [vmem:[#allocation5 + $0x5f8] sm:$0xff]
    %v504 = vunpack.c.l.b16 %v56
    %v505 = vunpack.c.h.b16 %v56
    %v506 = vunpack.c.l.b16 %v57
    %v507 = vunpack.c.h.b16 %v57
    %v508 = vunpack.c.l.b16 %v58
    %v509 = vunpack.c.h.b16 %v58
    %v510 = vunpack.c.l.b16 %v59
    %v511 = vunpack.c.h.b16 %v59
    %v512 = vunpack.c.l.b16 %v60
    %v513 = vunpack.c.h.b16 %v60
    %v514 = vunpack.c.l.b16 %v61
    %v515 = vunpack.c.h.b16 %v61
    %v516 = vunpack.c.l.b16 %v62
    %v517 = vunpack.c.h.b16 %v62
    %v518 = vunpack.c.l.b16 %v63
    %v519 = vunpack.c.h.b16 %v63
    %v520 = vunpack.c.l.b16 %v64
    %v521 = vunpack.c.h.b16 %v64
    %v522 = vunpack.c.l.b16 %v65
    %v523 = vunpack.c.h.b16 %v65
    %v524 = vunpack.c.l.b16 %v66
    %v525 = vunpack.c.h.b16 %v66
    %v526 = vunpack.c.l.b16 %v67
    %v527 = vunpack.c.h.b16 %v67
    %v528 = vunpack.c.l.b16 %v68
    %v529 = vunpack.c.h.b16 %v68
    %v530 = vunpack.c.l.b16 %v69
    %v531 = vunpack.c.h.b16 %v69
    %v532 = vunpack.c.l.b16 %v70
    %v533 = vunpack.c.h.b16 %v70
    %v534 = vunpack.c.l.b16 %v71
    %v535 = vunpack.c.h.b16 %v71
    %v536 = vunpack.c.l.b16 %v72
    %v537 = vunpack.c.h.b16 %v72
    %v538 = vunpack.c.l.b16 %v73
    %v539 = vunpack.c.h.b16 %v73
    %v540 = vunpack.c.l.b16 %v74
    %v541 = vunpack.c.h.b16 %v74
    %v542 = vunpack.c.l.b16 %v75
    %v543 = vunpack.c.h.b16 %v75
    %v544 = vunpack.c.l.b16 %v76
    %v545 = vunpack.c.h.b16 %v76
    %v546 = vunpack.c.l.b16 %v77
    %v547 = vunpack.c.h.b16 %v77
    %v548 = vunpack.c.l.b16 %v78
    %v549 = vunpack.c.h.b16 %v78
    %v550 = vunpack.c.l.b16 %v79
    %v551 = vunpack.c.h.b16 %v79
    %v552 = vunpack.c.l.b16 %v80
    %v553 = vunpack.c.h.b16 %v80
    %v554 = vunpack.c.l.b16 %v81
    %v555 = vunpack.c.h.b16 %v81
    %v556 = vunpack.c.l.b16 %v82
    %v557 = vunpack.c.h.b16 %v82
    %v558 = vunpack.c.l.b16 %v83
    %v559 = vunpack.c.h.b16 %v83
    %v560 = vunpack.c.l.b16 %v84
    %v561 = vunpack.c.h.b16 %v84
    %v562 = vunpack.c.l.b16 %v85
    %v563 = vunpack.c.h.b16 %v85
    %v564 = vunpack.c.l.b16 %v86
    %v565 = vunpack.c.h.b16 %v86
    %v566 = vunpack.c.l.b16 %v87
    %v567 = vunpack.c.h.b16 %v87
    %v568 = vunpack.c.l.b16 %v88
    %v569 = vunpack.c.h.b16 %v88
    %v570 = vunpack.c.l.b16 %v89
    %v571 = vunpack.c.h.b16 %v89
    %v572 = vunpack.c.l.b16 %v90
    %v573 = vunpack.c.h.b16 %v90
    %v574 = vunpack.c.l.b16 %v91
    %v575 = vunpack.c.h.b16 %v91
    %v576 = vunpack.c.l.b16 %v92
    %v577 = vunpack.c.h.b16 %v92
    %v578 = vunpack.c.l.b16 %v93
    %v579 = vunpack.c.h.b16 %v93
    %v580 = vunpack.c.l.b16 %v94
    %v581 = vunpack.c.h.b16 %v94
    %v582 = vunpack.c.l.b16 %v95
    %v583 = vunpack.c.h.b16 %v95
    %v584 = vunpack.c.l.b16 %v96
    %v585 = vunpack.c.h.b16 %v96
    %v586 = vunpack.c.l.b16 %v97
    %v587 = vunpack.c.h.b16 %v97
    %v588 = vunpack.c.l.b16 %v98
    %v589 = vunpack.c.h.b16 %v98
    %v590 = vunpack.c.l.b16 %v99
    %v591 = vunpack.c.h.b16 %v99
    %v592 = vunpack.c.l.b16 %v100
    %v593 = vunpack.c.h.b16 %v100
    %v594 = vunpack.c.l.b16 %v101
    %v595 = vunpack.c.h.b16 %v101
    %v596 = vunpack.c.l.b16 %v102
    %v597 = vunpack.c.h.b16 %v102
    %v598 = vunpack.c.l.b16 %v103
    %v599 = vunpack.c.h.b16 %v103
    %v600 = vunpack.c.l.b16 %v104
    %v601 = vunpack.c.h.b16 %v104
    %v602 = vunpack.c.l.b16 %v105
    %v603 = vunpack.c.h.b16 %v105
    %v604 = vunpack.c.l.b16 %v106
    %v605 = vunpack.c.h.b16 %v106
    %v606 = vunpack.c.l.b16 %v107
    %v607 = vunpack.c.h.b16 %v107
    %v608 = vunpack.c.l.b16 %v108
    %v609 = vunpack.c.h.b16 %v108
    %v610 = vunpack.c.l.b16 %v109
    %v611 = vunpack.c.h.b16 %v109
    %v612 = vunpack.c.l.b16 %v110
    %v613 = vunpack.c.h.b16 %v110
    %v614 = vunpack.c.l.b16 %v111
    %v615 = vunpack.c.h.b16 %v111
    %v616 = vunpack.c.l.b16 %v112
    %v617 = vunpack.c.h.b16 %v112
    %v618 = vunpack.c.l.b16 %v113
    %v619 = vunpack.c.h.b16 %v113
    %v620 = vunpack.c.l.b16 %v114
    %v621 = vunpack.c.h.b16 %v114
    %v622 = vunpack.c.l.b16 %v115
    %v623 = vunpack.c.h.b16 %v115
    %v624 = vunpack.c.l.b16 %v116
    %v625 = vunpack.c.h.b16 %v116
    %v626 = vunpack.c.l.b16 %v117
    %v627 = vunpack.c.h.b16 %v117
    %v628 = vunpack.c.l.b16 %v118
    %v629 = vunpack.c.h.b16 %v118
    %v630 = vunpack.c.l.b16 %v119
    %v631 = vunpack.c.h.b16 %v119
    %v632 = vunpack.c.l.b16 %v120
    %v633 = vunpack.c.h.b16 %v120
    %v634 = vunpack.c.l.b16 %v121
    %v635 = vunpack.c.h.b16 %v121
    %v636 = vunpack.c.l.b16 %v122
    %v637 = vunpack.c.h.b16 %v122
    %v638 = vunpack.c.l.b16 %v123
    %v639 = vunpack.c.h.b16 %v123
    %v640 = vunpack.c.l.b16 %v124
    %v641 = vunpack.c.h.b16 %v124
    %v642 = vunpack.c.l.b16 %v125
    %v643 = vunpack.c.h.b16 %v125
    %v644 = vunpack.c.l.b16 %v126
    %v645 = vunpack.c.h.b16 %v126
    %v646 = vunpack.c.l.b16 %v127
    %v647 = vunpack.c.h.b16 %v127
    %v648 = vunpack.c.l.b16 %v128
    %v649 = vunpack.c.h.b16 %v128
    %v650 = vunpack.c.l.b16 %v129
    %v651 = vunpack.c.h.b16 %v129
    %v652 = vunpack.c.l.b16 %v130
    %v653 = vunpack.c.h.b16 %v130
    %v654 = vunpack.c.l.b16 %v131
    %v655 = vunpack.c.h.b16 %v131
    %v656 = vunpack.c.l.b16 %v132
    %v657 = vunpack.c.h.b16 %v132
    %v658 = vunpack.c.l.b16 %v133
    %v659 = vunpack.c.h.b16 %v133
    %v660 = vunpack.c.l.b16 %v134
    %v661 = vunpack.c.h.b16 %v134
    %v662 = vunpack.c.l.b16 %v135
    %v663 = vunpack.c.h.b16 %v135
    %v664 = vunpack.c.l.b16 %v136
    %v665 = vunpack.c.h.b16 %v136
    %v666 = vunpack.c.l.b16 %v137
    %v667 = vunpack.c.h.b16 %v137
    %v668 = vunpack.c.l.b16 %v138
    %v669 = vunpack.c.h.b16 %v138
    %v670 = vunpack.c.l.b16 %v139
    %v671 = vunpack.c.h.b16 %v139
    %v672 = vunpack.c.l.b16 %v140
    %v673 = vunpack.c.h.b16 %v140
    %v674 = vunpack.c.l.b16 %v141
    %v675 = vunpack.c.h.b16 %v141
    %v676 = vunpack.c.l.b16 %v142
    %v677 = vunpack.c.h.b16 %v142
    %v678 = vunpack.c.l.b16 %v143
    %v679 = vunpack.c.h.b16 %v143
    %v680 = vunpack.c.l.b16 %v144
    %v681 = vunpack.c.h.b16 %v144
    %v682 = vunpack.c.l.b16 %v145
    %v683 = vunpack.c.h.b16 %v145
    %v684 = vunpack.c.l.b16 %v146
    %v685 = vunpack.c.h.b16 %v146
    %v686 = vunpack.c.l.b16 %v147
    %v687 = vunpack.c.h.b16 %v147
    %v688 = vunpack.c.l.b16 %v148
    %v689 = vunpack.c.h.b16 %v148
    %v690 = vunpack.c.l.b16 %v149
    %v691 = vunpack.c.h.b16 %v149
    %v692 = vunpack.c.l.b16 %v150
    %v693 = vunpack.c.h.b16 %v150
    %v694 = vunpack.c.l.b16 %v151
    %v695 = vunpack.c.h.b16 %v151
    %v696 = vunpack.c.l.b16 %v152
    %v697 = vunpack.c.h.b16 %v152
    %v698 = vunpack.c.l.b16 %v153
    %v699 = vunpack.c.h.b16 %v153
    %v700 = vunpack.c.l.b16 %v154
    %v701 = vunpack.c.h.b16 %v154
    %v702 = vunpack.c.l.b16 %v155
    %v703 = vunpack.c.h.b16 %v155
    %v704 = vunpack.c.l.b16 %v156
    %v705 = vunpack.c.h.b16 %v156
    %v706 = vunpack.c.l.b16 %v157
    %v707 = vunpack.c.h.b16 %v157
    %v708 = vunpack.c.l.b16 %v158
    %v709 = vunpack.c.h.b16 %v158
    %v710 = vunpack.c.l.b16 %v159
    %v711 = vunpack.c.h.b16 %v159
    %v712 = vunpack.c.l.b16 %v160
    %v713 = vunpack.c.h.b16 %v160
    %v714 = vunpack.c.l.b16 %v161
    %v715 = vunpack.c.h.b16 %v161
    %v716 = vunpack.c.l.b16 %v162
    %v717 = vunpack.c.h.b16 %v162
    %v718 = vunpack.c.l.b16 %v163
    %v719 = vunpack.c.h.b16 %v163
    %v720 = vunpack.c.l.b16 %v164
    %v721 = vunpack.c.h.b16 %v164
    %v722 = vunpack.c.l.b16 %v165
    %v723 = vunpack.c.h.b16 %v165
    %v724 = vunpack.c.l.b16 %v166
    %v725 = vunpack.c.h.b16 %v166
    %v726 = vunpack.c.l.b16 %v167
    %v727 = vunpack.c.h.b16 %v167
    %v728 = vunpack.c.l.b16 %v168
    %v729 = vunpack.c.h.b16 %v168
    %v730 = vunpack.c.l.b16 %v169
    %v731 = vunpack.c.h.b16 %v169
    %v732 = vunpack.c.l.b16 %v170
    %v733 = vunpack.c.h.b16 %v170
    %v734 = vunpack.c.l.b16 %v171
    %v735 = vunpack.c.h.b16 %v171
    %v736 = vunpack.c.l.b16 %v172
    %v737 = vunpack.c.h.b16 %v172
    %v738 = vunpack.c.l.b16 %v173
    %v739 = vunpack.c.h.b16 %v173
    %v740 = vunpack.c.l.b16 %v174
    %v741 = vunpack.c.h.b16 %v174
    %v742 = vunpack.c.l.b16 %v175
    %v743 = vunpack.c.h.b16 %v175
    %v744 = vunpack.c.l.b16 %v176
    %v745 = vunpack.c.h.b16 %v176
    %v746 = vunpack.c.l.b16 %v177
    %v747 = vunpack.c.h.b16 %v177
    %v748 = vunpack.c.l.b16 %v178
    %v749 = vunpack.c.h.b16 %v178
    %v750 = vunpack.c.l.b16 %v179
    %v751 = vunpack.c.h.b16 %v179
    %v752 = vunpack.c.l.b16 %v180
    %v753 = vunpack.c.h.b16 %v180
    %v754 = vunpack.c.l.b16 %v181
    %v755 = vunpack.c.h.b16 %v181
    %v756 = vunpack.c.l.b16 %v182
    %v757 = vunpack.c.h.b16 %v182
    %v758 = vunpack.c.l.b16 %v183
    %v759 = vunpack.c.h.b16 %v183
    %v760 = vpack.c.b16 %v508, %v504
    %v761 = vpack.c.b16 %v509, %v505
    %v762 = vpack.c.b16 %v510, %v506
    %v763 = vpack.c.b16 %v511, %v507
    %v764 = vpack.c.b16 %v516, %v512
    %v765 = vpack.c.b16 %v517, %v513
    %v766 = vpack.c.b16 %v518, %v514
    %v767 = vpack.c.b16 %v519, %v515
    %v768 = vpack.c.b16 %v524, %v520
    %v769 = vpack.c.b16 %v525, %v521
    %v770 = vpack.c.b16 %v526, %v522
    %v771 = vpack.c.b16 %v527, %v523
    %v772 = vpack.c.b16 %v532, %v528
    %v773 = vpack.c.b16 %v533, %v529
    %v774 = vpack.c.b16 %v534, %v530
    %v775 = vpack.c.b16 %v535, %v531
    %v776 = vpack.c.b16 %v540, %v536
    %v777 = vpack.c.b16 %v541, %v537
    %v778 = vpack.c.b16 %v542, %v538
    %v779 = vpack.c.b16 %v543, %v539
    %v780 = vpack.c.b16 %v548, %v544
    %v781 = vpack.c.b16 %v549, %v545
    %v782 = vpack.c.b16 %v550, %v546
    %v783 = vpack.c.b16 %v551, %v547
    %v784 = vpack.c.b16 %v556, %v552
    %v785 = vpack.c.b16 %v557, %v553
    %v786 = vpack.c.b16 %v558, %v554
    %v787 = vpack.c.b16 %v559, %v555
    %v788 = vpack.c.b16 %v564, %v560
    %v789 = vpack.c.b16 %v565, %v561
    %v790 = vpack.c.b16 %v566, %v562
    %v791 = vpack.c.b16 %v567, %v563
    %v792 = vpack.c.b16 %v572, %v568
    %v793 = vpack.c.b16 %v573, %v569
    %v794 = vpack.c.b16 %v574, %v570
    %v795 = vpack.c.b16 %v575, %v571
    %v796 = vpack.c.b16 %v580, %v576
    %v797 = vpack.c.b16 %v581, %v577
    %v798 = vpack.c.b16 %v582, %v578
    %v799 = vpack.c.b16 %v583, %v579
    %v800 = vpack.c.b16 %v588, %v584
    %v801 = vpack.c.b16 %v589, %v585
    %v802 = vpack.c.b16 %v590, %v586
    %v803 = vpack.c.b16 %v591, %v587
    %v804 = vpack.c.b16 %v596, %v592
    %v805 = vpack.c.b16 %v597, %v593
    %v806 = vpack.c.b16 %v598, %v594
    %v807 = vpack.c.b16 %v599, %v595
    %v808 = vpack.c.b16 %v604, %v600
    %v809 = vpack.c.b16 %v605, %v601
    %v810 = vpack.c.b16 %v606, %v602
    %v811 = vpack.c.b16 %v607, %v603
    %v812 = vpack.c.b16 %v612, %v608
    %v813 = vpack.c.b16 %v613, %v609
    %v814 = vpack.c.b16 %v614, %v610
    %v815 = vpack.c.b16 %v615, %v611
    %v816 = vpack.c.b16 %v620, %v616
    %v817 = vpack.c.b16 %v621, %v617
    %v818 = vpack.c.b16 %v622, %v618
    %v819 = vpack.c.b16 %v623, %v619
    %v820 = vpack.c.b16 %v628, %v624
    %v821 = vpack.c.b16 %v629, %v625
    %v822 = vpack.c.b16 %v630, %v626
    %v823 = vpack.c.b16 %v631, %v627
    %v824 = vpack.c.b16 %v636, %v632
    %v825 = vpack.c.b16 %v637, %v633
    %v826 = vpack.c.b16 %v638, %v634
    %v827 = vpack.c.b16 %v639, %v635
    %v828 = vpack.c.b16 %v644, %v640
    %v829 = vpack.c.b16 %v645, %v641
    %v830 = vpack.c.b16 %v646, %v642
    %v831 = vpack.c.b16 %v647, %v643
    %v832 = vpack.c.b16 %v652, %v648
    %v833 = vpack.c.b16 %v653, %v649
    %v834 = vpack.c.b16 %v654, %v650
    %v835 = vpack.c.b16 %v655, %v651
    %v836 = vpack.c.b16 %v660, %v656
    %v837 = vpack.c.b16 %v661, %v657
    %v838 = vpack.c.b16 %v662, %v658
    %v839 = vpack.c.b16 %v663, %v659
    %v840 = vpack.c.b16 %v668, %v664
    %v841 = vpack.c.b16 %v669, %v665
    %v842 = vpack.c.b16 %v670, %v666
    %v843 = vpack.c.b16 %v671, %v667
    %v844 = vpack.c.b16 %v676, %v672
    %v845 = vpack.c.b16 %v677, %v673
    %v846 = vpack.c.b16 %v678, %v674
    %v847 = vpack.c.b16 %v679, %v675
    %v848 = vpack.c.b16 %v684, %v680
    %v849 = vpack.c.b16 %v685, %v681
    %v850 = vpack.c.b16 %v686, %v682
    %v851 = vpack.c.b16 %v687, %v683
    %v852 = vpack.c.b16 %v692, %v688
    %v853 = vpack.c.b16 %v693, %v689
    %v854 = vpack.c.b16 %v694, %v690
    %v855 = vpack.c.b16 %v695, %v691
    %v856 = vpack.c.b16 %v700, %v696
    %v857 = vpack.c.b16 %v701, %v697
    %v858 = vpack.c.b16 %v702, %v698
    %v859 = vpack.c.b16 %v703, %v699
    %v860 = vpack.c.b16 %v708, %v704
    %v861 = vpack.c.b16 %v709, %v705
    %v862 = vpack.c.b16 %v710, %v706
    %v863 = vpack.c.b16 %v711, %v707
    %v864 = vpack.c.b16 %v716, %v712
    %v865 = vpack.c.b16 %v717, %v713
    %v866 = vpack.c.b16 %v718, %v714
    %v867 = vpack.c.b16 %v719, %v715
    %v868 = vpack.c.b16 %v724, %v720
    %v869 = vpack.c.b16 %v725, %v721
    %v870 = vpack.c.b16 %v726, %v722
    %v871 = vpack.c.b16 %v727, %v723
    %v872 = vpack.c.b16 %v732, %v728
    %v873 = vpack.c.b16 %v733, %v729
    %v874 = vpack.c.b16 %v734, %v730
    %v875 = vpack.c.b16 %v735, %v731
    %v876 = vpack.c.b16 %v740, %v736
    %v877 = vpack.c.b16 %v741, %v737
    %v878 = vpack.c.b16 %v742, %v738
    %v879 = vpack.c.b16 %v743, %v739
    %v880 = vpack.c.b16 %v748, %v744
    %v881 = vpack.c.b16 %v749, %v745
    %v882 = vpack.c.b16 %v750, %v746
    %v883 = vpack.c.b16 %v751, %v747
    %v884 = vpack.c.b16 %v756, %v752
    %v885 = vpack.c.b16 %v757, %v753
    %v886 = vpack.c.b16 %v758, %v754
    %v887 = vpack.c.b16 %v759, %v755
    %v1208 = vunpack.c.l.b16 %v184
    %v1209 = vunpack.c.h.b16 %v184
    %v1210 = vunpack.c.l.b16 %v185
    %v1211 = vunpack.c.h.b16 %v185
    %v1212 = vunpack.c.l.b16 %v186
    %v1213 = vunpack.c.h.b16 %v186
    %v1214 = vunpack.c.l.b16 %v187
    %v1215 = vunpack.c.h.b16 %v187
    %v1216 = vunpack.c.l.b16 %v188
    %v1217 = vunpack.c.h.b16 %v188
    %v1218 = vunpack.c.l.b16 %v189
    %v1219 = vunpack.c.h.b16 %v189
    %v1220 = vunpack.c.l.b16 %v190
    %v1221 = vunpack.c.h.b16 %v190
    %v1222 = vunpack.c.l.b16 %v191
    %v1223 = vunpack.c.h.b16 %v191
    %v1224 = vunpack.c.l.b16 %v192
    %v1225 = vunpack.c.h.b16 %v192
    %v1226 = vunpack.c.l.b16 %v193
    %v1227 = vunpack.c.h.b16 %v193
    %v1228 = vunpack.c.l.b16 %v194
    %v1229 = vunpack.c.h.b16 %v194
    %v1230 = vunpack.c.l.b16 %v195
    %v1231 = vunpack.c.h.b16 %v195
    %v1232 = vunpack.c.l.b16 %v196
    %v1233 = vunpack.c.h.b16 %v196
    %v1234 = vunpack.c.l.b16 %v197
    %v1235 = vunpack.c.h.b16 %v197
    %v1236 = vunpack.c.l.b16 %v198
    %v1237 = vunpack.c.h.b16 %v198
    %v1238 = vunpack.c.l.b16 %v199
    %v1239 = vunpack.c.h.b16 %v199
    %v1240 = vunpack.c.l.b16 %v200
    %v1241 = vunpack.c.h.b16 %v200
    %v1242 = vunpack.c.l.b16 %v201
    %v1243 = vunpack.c.h.b16 %v201
    %v1244 = vunpack.c.l.b16 %v202
    %v1245 = vunpack.c.h.b16 %v202
    %v1246 = vunpack.c.l.b16 %v203
    %v1247 = vunpack.c.h.b16 %v203
    %v1248 = vunpack.c.l.b16 %v204
    %v1249 = vunpack.c.h.b16 %v204
    %v1250 = vunpack.c.l.b16 %v205
    %v1251 = vunpack.c.h.b16 %v205
    %v1252 = vunpack.c.l.b16 %v206
    %v1253 = vunpack.c.h.b16 %v206
    %v1254 = vunpack.c.l.b16 %v207
    %v1255 = vunpack.c.h.b16 %v207
    %v1256 = vunpack.c.l.b16 %v208
    %v1257 = vunpack.c.h.b16 %v208
    %v1258 = vunpack.c.l.b16 %v209
    %v1259 = vunpack.c.h.b16 %v209
    %v1260 = vunpack.c.l.b16 %v210
    %v1261 = vunpack.c.h.b16 %v210
    %v1262 = vunpack.c.l.b16 %v211
    %v1263 = vunpack.c.h.b16 %v211
    %v1264 = vunpack.c.l.b16 %v212
    %v1265 = vunpack.c.h.b16 %v212
    %v1266 = vunpack.c.l.b16 %v213
    %v1267 = vunpack.c.h.b16 %v213
    %v1268 = vunpack.c.l.b16 %v214
    %v1269 = vunpack.c.h.b16 %v214
    %v1270 = vunpack.c.l.b16 %v215
    %v1271 = vunpack.c.h.b16 %v215
    %v1272 = vunpack.c.l.b16 %v216
    %v1273 = vunpack.c.h.b16 %v216
    %v1274 = vunpack.c.l.b16 %v217
    %v1275 = vunpack.c.h.b16 %v217
    %v1276 = vunpack.c.l.b16 %v218
    %v1277 = vunpack.c.h.b16 %v218
    %v1278 = vunpack.c.l.b16 %v219
    %v1279 = vunpack.c.h.b16 %v219
    %v1280 = vunpack.c.l.b16 %v220
    %v1281 = vunpack.c.h.b16 %v220
    %v1282 = vunpack.c.l.b16 %v221
    %v1283 = vunpack.c.h.b16 %v221
    %v1284 = vunpack.c.l.b16 %v222
    %v1285 = vunpack.c.h.b16 %v222
    %v1286 = vunpack.c.l.b16 %v223
    %v1287 = vunpack.c.h.b16 %v223
    %v1288 = vunpack.c.l.b16 %v224
    %v1289 = vunpack.c.h.b16 %v224
    %v1290 = vunpack.c.l.b16 %v225
    %v1291 = vunpack.c.h.b16 %v225
    %v1292 = vunpack.c.l.b16 %v226
    %v1293 = vunpack.c.h.b16 %v226
    %v1294 = vunpack.c.l.b16 %v227
    %v1295 = vunpack.c.h.b16 %v227
    %v1296 = vunpack.c.l.b16 %v228
    %v1297 = vunpack.c.h.b16 %v228
    %v1298 = vunpack.c.l.b16 %v229
    %v1299 = vunpack.c.h.b16 %v229
    %v1300 = vunpack.c.l.b16 %v230
    %v1301 = vunpack.c.h.b16 %v230
    %v1302 = vunpack.c.l.b16 %v231
    %v1303 = vunpack.c.h.b16 %v231
    %v1304 = vunpack.c.l.b16 %v232
    %v1305 = vunpack.c.h.b16 %v232
    %v1306 = vunpack.c.l.b16 %v233
    %v1307 = vunpack.c.h.b16 %v233
    %v1308 = vunpack.c.l.b16 %v234
    %v1309 = vunpack.c.h.b16 %v234
    %v1310 = vunpack.c.l.b16 %v235
    %v1311 = vunpack.c.h.b16 %v235
    %v1312 = vunpack.c.l.b16 %v236
    %v1313 = vunpack.c.h.b16 %v236
    %v1314 = vunpack.c.l.b16 %v237
    %v1315 = vunpack.c.h.b16 %v237
    %v1316 = vunpack.c.l.b16 %v238
    %v1317 = vunpack.c.h.b16 %v238
    %v1318 = vunpack.c.l.b16 %v239
    %v1319 = vunpack.c.h.b16 %v239
    %v1320 = vunpack.c.l.b16 %v240
    %v1321 = vunpack.c.h.b16 %v240
    %v1322 = vunpack.c.l.b16 %v241
    %v1323 = vunpack.c.h.b16 %v241
    %v1324 = vunpack.c.l.b16 %v242
    %v1325 = vunpack.c.h.b16 %v242
    %v1326 = vunpack.c.l.b16 %v243
    %v1327 = vunpack.c.h.b16 %v243
    %v1328 = vunpack.c.l.b16 %v244
    %v1329 = vunpack.c.h.b16 %v244
    %v1330 = vunpack.c.l.b16 %v245
    %v1331 = vunpack.c.h.b16 %v245
    %v1332 = vunpack.c.l.b16 %v246
    %v1333 = vunpack.c.h.b16 %v246
    %v1334 = vunpack.c.l.b16 %v247
    %v1335 = vunpack.c.h.b16 %v247
    %v1336 = vunpack.c.l.b16 %v248
    %v1337 = vunpack.c.h.b16 %v248
    %v1338 = vunpack.c.l.b16 %v249
    %v1339 = vunpack.c.h.b16 %v249
    %v1340 = vunpack.c.l.b16 %v250
    %v1341 = vunpack.c.h.b16 %v250
    %v1342 = vunpack.c.l.b16 %v251
    %v1343 = vunpack.c.h.b16 %v251
    %v1344 = vunpack.c.l.b16 %v252
    %v1345 = vunpack.c.h.b16 %v252
    %v1346 = vunpack.c.l.b16 %v253
    %v1347 = vunpack.c.h.b16 %v253
    %v1348 = vunpack.c.l.b16 %v254
    %v1349 = vunpack.c.h.b16 %v254
    %v1350 = vunpack.c.l.b16 %v255
    %v1351 = vunpack.c.h.b16 %v255
    %v1352 = vunpack.c.l.b16 %v256
    %v1353 = vunpack.c.h.b16 %v256
    %v1354 = vunpack.c.l.b16 %v257
    %v1355 = vunpack.c.h.b16 %v257
    %v1356 = vunpack.c.l.b16 %v258
    %v1357 = vunpack.c.h.b16 %v258
    %v1358 = vunpack.c.l.b16 %v259
    %v1359 = vunpack.c.h.b16 %v259
    %v1360 = vunpack.c.l.b16 %v260
    %v1361 = vunpack.c.h.b16 %v260
    %v1362 = vunpack.c.l.b16 %v261
    %v1363 = vunpack.c.h.b16 %v261
    %v1364 = vunpack.c.l.b16 %v262
    %v1365 = vunpack.c.h.b16 %v262
    %v1366 = vunpack.c.l.b16 %v263
    %v1367 = vunpack.c.h.b16 %v263
    %v1368 = vunpack.c.l.b16 %v264
    %v1369 = vunpack.c.h.b16 %v264
    %v1370 = vunpack.c.l.b16 %v265
    %v1371 = vunpack.c.h.b16 %v265
    %v1372 = vunpack.c.l.b16 %v266
    %v1373 = vunpack.c.h.b16 %v266
    %v1374 = vunpack.c.l.b16 %v267
    %v1375 = vunpack.c.h.b16 %v267
    %v1376 = vunpack.c.l.b16 %v268
    %v1377 = vunpack.c.h.b16 %v268
    %v1378 = vunpack.c.l.b16 %v269
    %v1379 = vunpack.c.h.b16 %v269
    %v1380 = vunpack.c.l.b16 %v270
    %v1381 = vunpack.c.h.b16 %v270
    %v1382 = vunpack.c.l.b16 %v271
    %v1383 = vunpack.c.h.b16 %v271
    %v1384 = vunpack.c.l.b16 %v272
    %v1385 = vunpack.c.h.b16 %v272
    %v1386 = vunpack.c.l.b16 %v273
    %v1387 = vunpack.c.h.b16 %v273
    %v1388 = vunpack.c.l.b16 %v274
    %v1389 = vunpack.c.h.b16 %v274
    %v1390 = vunpack.c.l.b16 %v275
    %v1391 = vunpack.c.h.b16 %v275
    %v1392 = vunpack.c.l.b16 %v276
    %v1393 = vunpack.c.h.b16 %v276
    %v1394 = vunpack.c.l.b16 %v277
    %v1395 = vunpack.c.h.b16 %v277
    %v1396 = vunpack.c.l.b16 %v278
    %v1397 = vunpack.c.h.b16 %v278
    %v1398 = vunpack.c.l.b16 %v279
    %v1399 = vunpack.c.h.b16 %v279
    %v1400 = vunpack.c.l.b16 %v280
    %v1401 = vunpack.c.h.b16 %v280
    %v1402 = vunpack.c.l.b16 %v281
    %v1403 = vunpack.c.h.b16 %v281
    %v1404 = vunpack.c.l.b16 %v282
    %v1405 = vunpack.c.h.b16 %v282
    %v1406 = vunpack.c.l.b16 %v283
    %v1407 = vunpack.c.h.b16 %v283
    %v1408 = vunpack.c.l.b16 %v284
    %v1409 = vunpack.c.h.b16 %v284
    %v1410 = vunpack.c.l.b16 %v285
    %v1411 = vunpack.c.h.b16 %v285
    %v1412 = vunpack.c.l.b16 %v286
    %v1413 = vunpack.c.h.b16 %v286
    %v1414 = vunpack.c.l.b16 %v287
    %v1415 = vunpack.c.h.b16 %v287
    %v1416 = vunpack.c.l.b16 %v288
    %v1417 = vunpack.c.h.b16 %v288
    %v1418 = vunpack.c.l.b16 %v289
    %v1419 = vunpack.c.h.b16 %v289
    %v1420 = vunpack.c.l.b16 %v290
    %v1421 = vunpack.c.h.b16 %v290
    %v1422 = vunpack.c.l.b16 %v291
    %v1423 = vunpack.c.h.b16 %v291
    %v1424 = vunpack.c.l.b16 %v292
    %v1425 = vunpack.c.h.b16 %v292
    %v1426 = vunpack.c.l.b16 %v293
    %v1427 = vunpack.c.h.b16 %v293
    %v1428 = vunpack.c.l.b16 %v294
    %v1429 = vunpack.c.h.b16 %v294
    %v1430 = vunpack.c.l.b16 %v295
    %v1431 = vunpack.c.h.b16 %v295
    %v1432 = vunpack.c.l.b16 %v296
    %v1433 = vunpack.c.h.b16 %v296
    %v1434 = vunpack.c.l.b16 %v297
    %v1435 = vunpack.c.h.b16 %v297
    %v1436 = vunpack.c.l.b16 %v298
    %v1437 = vunpack.c.h.b16 %v298
    %v1438 = vunpack.c.l.b16 %v299
    %v1439 = vunpack.c.h.b16 %v299
    %v1440 = vunpack.c.l.b16 %v300
    %v1441 = vunpack.c.h.b16 %v300
    %v1442 = vunpack.c.l.b16 %v301
    %v1443 = vunpack.c.h.b16 %v301
    %v1444 = vunpack.c.l.b16 %v302
    %v1445 = vunpack.c.h.b16 %v302
    %v1446 = vunpack.c.l.b16 %v303
    %v1447 = vunpack.c.h.b16 %v303
    %v1448 = vunpack.c.l.b16 %v304
    %v1449 = vunpack.c.h.b16 %v304
    %v1450 = vunpack.c.l.b16 %v305
    %v1451 = vunpack.c.h.b16 %v305
    %v1452 = vunpack.c.l.b16 %v306
    %v1453 = vunpack.c.h.b16 %v306
    %v1454 = vunpack.c.l.b16 %v307
    %v1455 = vunpack.c.h.b16 %v307
    %v1456 = vunpack.c.l.b16 %v308
    %v1457 = vunpack.c.h.b16 %v308
    %v1458 = vunpack.c.l.b16 %v309
    %v1459 = vunpack.c.h.b16 %v309
    %v1460 = vunpack.c.l.b16 %v310
    %v1461 = vunpack.c.h.b16 %v310
    %v1462 = vunpack.c.l.b16 %v311
    %v1463 = vunpack.c.h.b16 %v311
    %v1464 = vunpack.c.l.b16 %v312
    %v1465 = vunpack.c.h.b16 %v312
    %v1466 = vunpack.c.l.b16 %v313
    %v1467 = vunpack.c.h.b16 %v313
    %v1468 = vunpack.c.l.b16 %v314
    %v1469 = vunpack.c.h.b16 %v314
    %v1470 = vunpack.c.l.b16 %v315
    %v1471 = vunpack.c.h.b16 %v315
    %v1472 = vunpack.c.l.b16 %v316
    %v1473 = vunpack.c.h.b16 %v316
    %v1474 = vunpack.c.l.b16 %v317
    %v1475 = vunpack.c.h.b16 %v317
    %v1476 = vunpack.c.l.b16 %v318
    %v1477 = vunpack.c.h.b16 %v318
    %v1478 = vunpack.c.l.b16 %v319
    %v1479 = vunpack.c.h.b16 %v319
    %v1480 = vunpack.c.l.b16 %v320
    %v1481 = vunpack.c.h.b16 %v320
    %v1482 = vunpack.c.l.b16 %v321
    %v1483 = vunpack.c.h.b16 %v321
    %v1484 = vunpack.c.l.b16 %v322
    %v1485 = vunpack.c.h.b16 %v322
    %v1486 = vunpack.c.l.b16 %v323
    %v1487 = vunpack.c.h.b16 %v323
    %v1488 = vunpack.c.l.b16 %v324
    %v1489 = vunpack.c.h.b16 %v324
    %v1490 = vunpack.c.l.b16 %v325
    %v1491 = vunpack.c.h.b16 %v325
    %v1492 = vunpack.c.l.b16 %v326
    %v1493 = vunpack.c.h.b16 %v326
    %v1494 = vunpack.c.l.b16 %v327
    %v1495 = vunpack.c.h.b16 %v327
    %v1496 = vunpack.c.l.b16 %v328
    %v1497 = vunpack.c.h.b16 %v328
    %v1498 = vunpack.c.l.b16 %v329
    %v1499 = vunpack.c.h.b16 %v329
    %v1500 = vunpack.c.l.b16 %v330
    %v1501 = vunpack.c.h.b16 %v330
    %v1502 = vunpack.c.l.b16 %v331
    %v1503 = vunpack.c.h.b16 %v331
    %v1504 = vunpack.c.l.b16 %v332
    %v1505 = vunpack.c.h.b16 %v332
    %v1506 = vunpack.c.l.b16 %v333
    %v1507 = vunpack.c.h.b16 %v333
    %v1508 = vunpack.c.l.b16 %v334
    %v1509 = vunpack.c.h.b16 %v334
    %v1510 = vunpack.c.l.b16 %v335
    %v1511 = vunpack.c.h.b16 %v335
    %v1512 = vunpack.c.l.b16 %v336
    %v1513 = vunpack.c.h.b16 %v336
    %v1514 = vunpack.c.l.b16 %v337
    %v1515 = vunpack.c.h.b16 %v337
    %v1516 = vunpack.c.l.b16 %v338
    %v1517 = vunpack.c.h.b16 %v338
    %v1518 = vunpack.c.l.b16 %v339
    %v1519 = vunpack.c.h.b16 %v339
    %v1520 = vunpack.c.l.b16 %v340
    %v1521 = vunpack.c.h.b16 %v340
    %v1522 = vunpack.c.l.b16 %v341
    %v1523 = vunpack.c.h.b16 %v341
    %v1524 = vunpack.c.l.b16 %v342
    %v1525 = vunpack.c.h.b16 %v342
    %v1526 = vunpack.c.l.b16 %v343
    %v1527 = vunpack.c.h.b16 %v343
    %v1528 = vunpack.c.l.b16 %v344
    %v1529 = vunpack.c.h.b16 %v344
    %v1530 = vunpack.c.l.b16 %v345
    %v1531 = vunpack.c.h.b16 %v345
    %v1532 = vunpack.c.l.b16 %v346
    %v1533 = vunpack.c.h.b16 %v346
    %v1534 = vunpack.c.l.b16 %v347
    %v1535 = vunpack.c.h.b16 %v347
    %v1536 = vunpack.c.l.b16 %v348
    %v1537 = vunpack.c.h.b16 %v348
    %v1538 = vunpack.c.l.b16 %v349
    %v1539 = vunpack.c.h.b16 %v349
    %v1540 = vunpack.c.l.b16 %v350
    %v1541 = vunpack.c.h.b16 %v350
    %v1542 = vunpack.c.l.b16 %v351
    %v1543 = vunpack.c.h.b16 %v351
    %v1544 = vunpack.c.l.b16 %v352
    %v1545 = vunpack.c.h.b16 %v352
    %v1546 = vunpack.c.l.b16 %v353
    %v1547 = vunpack.c.h.b16 %v353
    %v1548 = vunpack.c.l.b16 %v354
    %v1549 = vunpack.c.h.b16 %v354
    %v1550 = vunpack.c.l.b16 %v355
    %v1551 = vunpack.c.h.b16 %v355
    %v1552 = vunpack.c.l.b16 %v356
    %v1553 = vunpack.c.h.b16 %v356
    %v1554 = vunpack.c.l.b16 %v357
    %v1555 = vunpack.c.h.b16 %v357
    %v1556 = vunpack.c.l.b16 %v358
    %v1557 = vunpack.c.h.b16 %v358
    %v1558 = vunpack.c.l.b16 %v359
    %v1559 = vunpack.c.h.b16 %v359
    %v1560 = vunpack.c.l.b16 %v360
    %v1561 = vunpack.c.h.b16 %v360
    %v1562 = vunpack.c.l.b16 %v361
    %v1563 = vunpack.c.h.b16 %v361
    %v1564 = vunpack.c.l.b16 %v362
    %v1565 = vunpack.c.h.b16 %v362
    %v1566 = vunpack.c.l.b16 %v363
    %v1567 = vunpack.c.h.b16 %v363
    %v1568 = vunpack.c.l.b16 %v364
    %v1569 = vunpack.c.h.b16 %v364
    %v1570 = vunpack.c.l.b16 %v365
    %v1571 = vunpack.c.h.b16 %v365
    %v1572 = vunpack.c.l.b16 %v366
    %v1573 = vunpack.c.h.b16 %v366
    %v1574 = vunpack.c.l.b16 %v367
    %v1575 = vunpack.c.h.b16 %v367
    %v1576 = vunpack.c.l.b16 %v368
    %v1577 = vunpack.c.h.b16 %v368
    %v1578 = vunpack.c.l.b16 %v369
    %v1579 = vunpack.c.h.b16 %v369
    %v1580 = vunpack.c.l.b16 %v370
    %v1581 = vunpack.c.h.b16 %v370
    %v1582 = vunpack.c.l.b16 %v371
    %v1583 = vunpack.c.h.b16 %v371
    %v1584 = vunpack.c.l.b16 %v372
    %v1585 = vunpack.c.h.b16 %v372
    %v1586 = vunpack.c.l.b16 %v373
    %v1587 = vunpack.c.h.b16 %v373
    %v1588 = vunpack.c.l.b16 %v374
    %v1589 = vunpack.c.h.b16 %v374
    %v1590 = vunpack.c.l.b16 %v375
    %v1591 = vunpack.c.h.b16 %v375
    %v1592 = vpack.c.b16 %v1214, %v1208
    %v1593 = vpack.c.b16 %v1215, %v1209
    %v1594 = vpack.c.b16 %v1216, %v1210
    %v1595 = vpack.c.b16 %v1217, %v1211
    %v1596 = vpack.c.b16 %v1218, %v1212
    %v1597 = vpack.c.b16 %v1219, %v1213
    %v1598 = vpack.c.b16 %v1226, %v1220
    %v1599 = vpack.c.b16 %v1227, %v1221
    %v1600 = vpack.c.b16 %v1228, %v1222
    %v1601 = vpack.c.b16 %v1229, %v1223
    %v1602 = vpack.c.b16 %v1230, %v1224
    %v1603 = vpack.c.b16 %v1231, %v1225
    %v1604 = vpack.c.b16 %v1238, %v1232
    %v1605 = vpack.c.b16 %v1239, %v1233
    %v1606 = vpack.c.b16 %v1240, %v1234
    %v1607 = vpack.c.b16 %v1241, %v1235
    %v1608 = vpack.c.b16 %v1242, %v1236
    %v1609 = vpack.c.b16 %v1243, %v1237
    %v1610 = vpack.c.b16 %v1250, %v1244
    %v1611 = vpack.c.b16 %v1251, %v1245
    %v1612 = vpack.c.b16 %v1252, %v1246
    %v1613 = vpack.c.b16 %v1253, %v1247
    %v1614 = vpack.c.b16 %v1254, %v1248
    %v1615 = vpack.c.b16 %v1255, %v1249
    %v1616 = vpack.c.b16 %v1262, %v1256
    %v1617 = vpack.c.b16 %v1263, %v1257
    %v1618 = vpack.c.b16 %v1264, %v1258
    %v1619 = vpack.c.b16 %v1265, %v1259
    %v1620 = vpack.c.b16 %v1266, %v1260
    %v1621 = vpack.c.b16 %v1267, %v1261
    %v1622 = vpack.c.b16 %v1274, %v1268
    %v1623 = vpack.c.b16 %v1275, %v1269
    %v1624 = vpack.c.b16 %v1276, %v1270
    %v1625 = vpack.c.b16 %v1277, %v1271
    %v1626 = vpack.c.b16 %v1278, %v1272
    %v1627 = vpack.c.b16 %v1279, %v1273
    %v1628 = vpack.c.b16 %v1286, %v1280
    %v1629 = vpack.c.b16 %v1287, %v1281
    %v1630 = vpack.c.b16 %v1288, %v1282
    %v1631 = vpack.c.b16 %v1289, %v1283
    %v1632 = vpack.c.b16 %v1290, %v1284
    %v1633 = vpack.c.b16 %v1291, %v1285
    %v1634 = vpack.c.b16 %v1298, %v1292
    %v1635 = vpack.c.b16 %v1299, %v1293
    %v1636 = vpack.c.b16 %v1300, %v1294
    %v1637 = vpack.c.b16 %v1301, %v1295
    %v1638 = vpack.c.b16 %v1302, %v1296
    %v1639 = vpack.c.b16 %v1303, %v1297
    %v1640 = vpack.c.b16 %v1310, %v1304
    %v1641 = vpack.c.b16 %v1311, %v1305
    %v1642 = vpack.c.b16 %v1312, %v1306
    %v1643 = vpack.c.b16 %v1313, %v1307
    %v1644 = vpack.c.b16 %v1314, %v1308
    %v1645 = vpack.c.b16 %v1315, %v1309
    %v1646 = vpack.c.b16 %v1322, %v1316
    %v1647 = vpack.c.b16 %v1323, %v1317
    %v1648 = vpack.c.b16 %v1324, %v1318
    %v1649 = vpack.c.b16 %v1325, %v1319
    %v1650 = vpack.c.b16 %v1326, %v1320
    %v1651 = vpack.c.b16 %v1327, %v1321
    %v1652 = vpack.c.b16 %v1334, %v1328
    %v1653 = vpack.c.b16 %v1335, %v1329
    %v1654 = vpack.c.b16 %v1336, %v1330
    %v1655 = vpack.c.b16 %v1337, %v1331
    %v1656 = vpack.c.b16 %v1338, %v1332
    %v1657 = vpack.c.b16 %v1339, %v1333
    %v1658 = vpack.c.b16 %v1346, %v1340
    %v1659 = vpack.c.b16 %v1347, %v1341
    %v1660 = vpack.c.b16 %v1348, %v1342
    %v1661 = vpack.c.b16 %v1349, %v1343
    %v1662 = vpack.c.b16 %v1350, %v1344
    %v1663 = vpack.c.b16 %v1351, %v1345
    %v1664 = vpack.c.b16 %v1358, %v1352
    %v1665 = vpack.c.b16 %v1359, %v1353
    %v1666 = vpack.c.b16 %v1360, %v1354
    %v1667 = vpack.c.b16 %v1361, %v1355
    %v1668 = vpack.c.b16 %v1362, %v1356
    %v1669 = vpack.c.b16 %v1363, %v1357
    %v1670 = vpack.c.b16 %v1370, %v1364
    %v1671 = vpack.c.b16 %v1371, %v1365
    %v1672 = vpack.c.b16 %v1372, %v1366
    %v1673 = vpack.c.b16 %v1373, %v1367
    %v1674 = vpack.c.b16 %v1374, %v1368
    %v1675 = vpack.c.b16 %v1375, %v1369
    %v1676 = vpack.c.b16 %v1382, %v1376
    %v1677 = vpack.c.b16 %v1383, %v1377
    %v1678 = vpack.c.b16 %v1384, %v1378
    %v1679 = vpack.c.b16 %v1385, %v1379
    %v1680 = vpack.c.b16 %v1386, %v1380
    %v1681 = vpack.c.b16 %v1387, %v1381
    %v1682 = vpack.c.b16 %v1394, %v1388
    %v1683 = vpack.c.b16 %v1395, %v1389
    %v1684 = vpack.c.b16 %v1396, %v1390
    %v1685 = vpack.c.b16 %v1397, %v1391
    %v1686 = vpack.c.b16 %v1398, %v1392
    %v1687 = vpack.c.b16 %v1399, %v1393
    %v1688 = vpack.c.b16 %v1406, %v1400
    %v1689 = vpack.c.b16 %v1407, %v1401
    %v1690 = vpack.c.b16 %v1408, %v1402
    %v1691 = vpack.c.b16 %v1409, %v1403
    %v1692 = vpack.c.b16 %v1410, %v1404
    %v1693 = vpack.c.b16 %v1411, %v1405
    %v1694 = vpack.c.b16 %v1418, %v1412
    %v1695 = vpack.c.b16 %v1419, %v1413
    %v1696 = vpack.c.b16 %v1420, %v1414
    %v1697 = vpack.c.b16 %v1421, %v1415
    %v1698 = vpack.c.b16 %v1422, %v1416
    %v1699 = vpack.c.b16 %v1423, %v1417
    %v1700 = vpack.c.b16 %v1430, %v1424
    %v1701 = vpack.c.b16 %v1431, %v1425
    %v1702 = vpack.c.b16 %v1432, %v1426
    %v1703 = vpack.c.b16 %v1433, %v1427
    %v1704 = vpack.c.b16 %v1434, %v1428
    %v1705 = vpack.c.b16 %v1435, %v1429
    %v1706 = vpack.c.b16 %v1442, %v1436
    %v1707 = vpack.c.b16 %v1443, %v1437
    %v1708 = vpack.c.b16 %v1444, %v1438
    %v1709 = vpack.c.b16 %v1445, %v1439
    %v1710 = vpack.c.b16 %v1446, %v1440
    %v1711 = vpack.c.b16 %v1447, %v1441
    %v1712 = vpack.c.b16 %v1454, %v1448
    %v1713 = vpack.c.b16 %v1455, %v1449
    %v1714 = vpack.c.b16 %v1456, %v1450
    %v1715 = vpack.c.b16 %v1457, %v1451
    %v1716 = vpack.c.b16 %v1458, %v1452
    %v1717 = vpack.c.b16 %v1459, %v1453
    %v1718 = vpack.c.b16 %v1466, %v1460
    %v1719 = vpack.c.b16 %v1467, %v1461
    %v1720 = vpack.c.b16 %v1468, %v1462
    %v1721 = vpack.c.b16 %v1469, %v1463
    %v1722 = vpack.c.b16 %v1470, %v1464
    %v1723 = vpack.c.b16 %v1471, %v1465
    %v1724 = vpack.c.b16 %v1478, %v1472
    %v1725 = vpack.c.b16 %v1479, %v1473
    %v1726 = vpack.c.b16 %v1480, %v1474
    %v1727 = vpack.c.b16 %v1481, %v1475
    %v1728 = vpack.c.b16 %v1482, %v1476
    %v1729 = vpack.c.b16 %v1483, %v1477
    %v1730 = vpack.c.b16 %v1490, %v1484
    %v1731 = vpack.c.b16 %v1491, %v1485
    %v1732 = vpack.c.b16 %v1492, %v1486
    %v1733 = vpack.c.b16 %v1493, %v1487
    %v1734 = vpack.c.b16 %v1494, %v1488
    %v1735 = vpack.c.b16 %v1495, %v1489
    %v1736 = vpack.c.b16 %v1502, %v1496
    %v1737 = vpack.c.b16 %v1503, %v1497
    %v1738 = vpack.c.b16 %v1504, %v1498
    %v1739 = vpack.c.b16 %v1505, %v1499
    %v1740 = vpack.c.b16 %v1506, %v1500
    %v1741 = vpack.c.b16 %v1507, %v1501
    %v1742 = vpack.c.b16 %v1514, %v1508
    %v1743 = vpack.c.b16 %v1515, %v1509
    %v1744 = vpack.c.b16 %v1516, %v1510
    %v1745 = vpack.c.b16 %v1517, %v1511
    %v1746 = vpack.c.b16 %v1518, %v1512
    %v1747 = vpack.c.b16 %v1519, %v1513
    %v1748 = vpack.c.b16 %v1526, %v1520
    %v1749 = vpack.c.b16 %v1527, %v1521
    %v1750 = vpack.c.b16 %v1528, %v1522
    %v1751 = vpack.c.b16 %v1529, %v1523
    %v1752 = vpack.c.b16 %v1530, %v1524
    %v1753 = vpack.c.b16 %v1531, %v1525
    %v1754 = vpack.c.b16 %v1538, %v1532
    %v1755 = vpack.c.b16 %v1539, %v1533
    %v1756 = vpack.c.b16 %v1540, %v1534
    %v1757 = vpack.c.b16 %v1541, %v1535
    %v1758 = vpack.c.b16 %v1542, %v1536
    %v1759 = vpack.c.b16 %v1543, %v1537
    %v1760 = vpack.c.b16 %v1550, %v1544
    %v1761 = vpack.c.b16 %v1551, %v1545
    %v1762 = vpack.c.b16 %v1552, %v1546
    %v1763 = vpack.c.b16 %v1553, %v1547
    %v1764 = vpack.c.b16 %v1554, %v1548
    %v1765 = vpack.c.b16 %v1555, %v1549
    %v1766 = vpack.c.b16 %v1562, %v1556
    %v1767 = vpack.c.b16 %v1563, %v1557
    %v1768 = vpack.c.b16 %v1564, %v1558
    %v1769 = vpack.c.b16 %v1565, %v1559
    %v1770 = vpack.c.b16 %v1566, %v1560
    %v1771 = vpack.c.b16 %v1567, %v1561
    %v1772 = vpack.c.b16 %v1574, %v1568
    %v1773 = vpack.c.b16 %v1575, %v1569
    %v1774 = vpack.c.b16 %v1576, %v1570
    %v1775 = vpack.c.b16 %v1577, %v1571
    %v1776 = vpack.c.b16 %v1578, %v1572
    %v1777 = vpack.c.b16 %v1579, %v1573
    %v1778 = vpack.c.b16 %v1586, %v1580
    %v1779 = vpack.c.b16 %v1587, %v1581
    %v1780 = vpack.c.b16 %v1588, %v1582
    %v1781 = vpack.c.b16 %v1589, %v1583
    %v1782 = vpack.c.b16 %v1590, %v1584
    %v1783 = vpack.c.b16 %v1591, %v1585
    %1976 = vmatprep.subr.bf16.mxu0 %v1635
    %1977 = vmatpush1.bf16.msra.mxu0 %v1634
    %1978 = vmatprep.subr.bf16.mxu0 %v1629
    %1979 = vmatpush1.bf16.msra.mxu0 %v1628
    %1980 = vmatprep.subr.bf16.mxu0 %v1623
    %1981 = vmatpush1.bf16.msra.mxu0 %v1622
    %1982 = vmatprep.subr.bf16.mxu0 %v1617
    %1983 = vmatpush1.bf16.msra.mxu0 %v1616
    %1984 = vmatprep.subr.bf16.mxu0 %v1611
    %1985 = vmatpush1.bf16.msra.mxu0 %v1610
    %1986 = vmatprep.subr.bf16.mxu0 %v1605
    %1987 = vmatpush1.bf16.msra.mxu0 %v1604
    %1988 = vmatprep.subr.bf16.mxu0 %v1599
    %1989 = vmatpush1.bf16.msra.mxu0 %v1598
    %1990 = vmatprep.subr.bf16.mxu0 %v1593
    %1991 = vmatpush1.bf16.msra.mxu0 %v1592
    %1992 = vmatprep.subr.bf16.mxu0 %v1683
    %1993 = vmatpush2.bf16.msra.mxu0 %v1682
    %1994 = vmatprep.subr.bf16.mxu0 %v1677
    %1995 = vmatpush2.bf16.msra.mxu0 %v1676
    %1996 = vmatprep.subr.bf16.mxu0 %v1671
    %1997 = vmatpush2.bf16.msra.mxu0 %v1670
    %1998 = vmatprep.subr.bf16.mxu0 %v1665
    %1999 = vmatpush2.bf16.msra.mxu0 %v1664
    %2000 = vmatprep.subr.bf16.mxu0 %v1659
    %2001 = vmatpush2.bf16.msra.mxu0 %v1658
    %2002 = vmatprep.subr.bf16.mxu0 %v1653
    %2003 = vmatpush2.bf16.msra.mxu0 %v1652
    %2004 = vmatprep.subr.bf16.mxu0 %v1647
    %2005 = vmatpush2.bf16.msra.mxu0 %v1646
    %2006 = vmatprep.subr.bf16.mxu0 %v1641
    %2007 = vmatpush2.bf16.msra.mxu0 %v1640
    %2008 = vmatprep.mubr.bf16.mxu0 %v761
    %2009 = vmatmul.mubr.bf16.gmra.mxu0 %v760
    %v2010 = vpop.f32.mrf.mxu0
    %v2011 = vadd.f32 0.0, %v2010
    %v2012 = vpop.f32.mrf.mxu0
    %v2013 = vadd.f32 0.0, %v2012
    %v2014 = vpop.f32.mrf.mxu0
    %v2015 = vadd.f32 0.0, %v2014
    %v2016 = vpop.f32.mrf.mxu0
    %v2017 = vadd.f32 0.0, %v2016
    %2018 = vmatprep.mubr.bf16.mxu0 %v765
    %2019 = vmatmul.mubr.bf16.gmra.mxu0 %v764
    %v2020 = vpop.f32.mrf.mxu0
    %v2021 = vadd.f32 0.0, %v2020
    %v2022 = vpop.f32.mrf.mxu0
    %v2023 = vadd.f32 0.0, %v2022
    %v2024 = vpop.f32.mrf.mxu0
    %v2025 = vadd.f32 0.0, %v2024
    %v2026 = vpop.f32.mrf.mxu0
    %v2027 = vadd.f32 0.0, %v2026
    %2028 = vmatprep.mubr.bf16.mxu0 %v769
    %2029 = vmatmul.mubr.bf16.gmra.mxu0 %v768
    %v2030 = vpop.f32.mrf.mxu0
    %v2031 = vadd.f32 0.0, %v2030
    %v2032 = vpop.f32.mrf.mxu0
    %v2033 = vadd.f32 0.0, %v2032
    %v2034 = vpop.f32.mrf.mxu0
    %v2035 = vadd.f32 0.0, %v2034
    %v2036 = vpop.f32.mrf.mxu0
    %v2037 = vadd.f32 0.0, %v2036
    %2038 = vmatprep.mubr.bf16.mxu0 %v773
    %2039 = vmatmul.mubr.bf16.gmra.mxu0 %v772
    %v2040 = vpop.f32.mrf.mxu0
    %v2041 = vadd.f32 0.0, %v2040
    %v2042 = vpop.f32.mrf.mxu0
    %v2043 = vadd.f32 0.0, %v2042
    %v2044 = vpop.f32.mrf.mxu0
    %v2045 = vadd.f32 0.0, %v2044
    %v2046 = vpop.f32.mrf.mxu0
    %v2047 = vadd.f32 0.0, %v2046
    %2048 = vmatprep.mubr.bf16.mxu0 %v777
    %2049 = vmatmul.mubr.bf16.gmra.mxu0 %v776
    %v2050 = vpop.f32.mrf.mxu0
    %v2051 = vadd.f32 0.0, %v2050
    %v2052 = vpop.f32.mrf.mxu0
    %v2053 = vadd.f32 0.0, %v2052
    %v2054 = vpop.f32.mrf.mxu0
    %v2055 = vadd.f32 0.0, %v2054
    %v2056 = vpop.f32.mrf.mxu0
    %v2057 = vadd.f32 0.0, %v2056
    %2058 = vmatprep.mubr.bf16.mxu0 %v781
    %2059 = vmatmul.mubr.bf16.gmra.mxu0 %v780
    %v2060 = vpop.f32.mrf.mxu0
    %v2061 = vadd.f32 0.0, %v2060
    %v2062 = vpop.f32.mrf.mxu0
    %v2063 = vadd.f32 0.0, %v2062
    %v2064 = vpop.f32.mrf.mxu0
    %v2065 = vadd.f32 0.0, %v2064
    %v2066 = vpop.f32.mrf.mxu0
    %v2067 = vadd.f32 0.0, %v2066
    %2068 = vmatprep.mubr.bf16.mxu0 %v785
    %2069 = vmatmul.mubr.bf16.gmra.mxu0 %v784
    %v2070 = vpop.f32.mrf.mxu0
    %v2071 = vadd.f32 0.0, %v2070
    %v2072 = vpop.f32.mrf.mxu0
    %v2073 = vadd.f32 0.0, %v2072
    %v2074 = vpop.f32.mrf.mxu0
    %v2075 = vadd.f32 0.0, %v2074
    %v2076 = vpop.f32.mrf.mxu0
    %v2077 = vadd.f32 0.0, %v2076
    %2078 = vmatprep.mubr.bf16.mxu0 %v789
    %2079 = vmatmul.mubr.bf16.gmra.mxu0 %v788
    %v2080 = vpop.f32.mrf.mxu0
    %v2081 = vadd.f32 0.0, %v2080
    %v2082 = vpop.f32.mrf.mxu0
    %v2083 = vadd.f32 0.0, %v2082
    %v2084 = vpop.f32.mrf.mxu0
    %v2085 = vadd.f32 0.0, %v2084
    %v2086 = vpop.f32.mrf.mxu0
    %v2087 = vadd.f32 0.0, %v2086
    %2088 = vmatprep.mubr.bf16.mxu0 %v793
    %2089 = vmatmul.mubr.bf16.gmra.mxu0 %v792
    %v2090 = vpop.f32.mrf.mxu0
    %v2091 = vadd.f32 0.0, %v2090
    %v2092 = vpop.f32.mrf.mxu0
    %v2093 = vadd.f32 0.0, %v2092
    %v2094 = vpop.f32.mrf.mxu0
    %v2095 = vadd.f32 0.0, %v2094
    %v2096 = vpop.f32.mrf.mxu0
    %v2097 = vadd.f32 0.0, %v2096
    %2098 = vmatprep.mubr.bf16.mxu0 %v797
    %2099 = vmatmul.mubr.bf16.gmra.mxu0 %v796
    %v2100 = vpop.f32.mrf.mxu0
    %v2101 = vadd.f32 0.0, %v2100
    %v2102 = vpop.f32.mrf.mxu0
    %v2103 = vadd.f32 0.0, %v2102
    %v2104 = vpop.f32.mrf.mxu0
    %v2105 = vadd.f32 0.0, %v2104
    %v2106 = vpop.f32.mrf.mxu0
    %v2107 = vadd.f32 0.0, %v2106
    %2108 = vmatprep.mubr.bf16.mxu0 %v801
    %2109 = vmatmul.mubr.bf16.gmra.mxu0 %v800
    %v2110 = vpop.f32.mrf.mxu0
    %v2111 = vadd.f32 0.0, %v2110
    %v2112 = vpop.f32.mrf.mxu0
    %v2113 = vadd.f32 0.0, %v2112
    %v2114 = vpop.f32.mrf.mxu0
    %v2115 = vadd.f32 0.0, %v2114
    %v2116 = vpop.f32.mrf.mxu0
    %v2117 = vadd.f32 0.0, %v2116
    %2118 = vmatprep.mubr.bf16.mxu0 %v805
    %2119 = vmatmul.mubr.bf16.gmra.mxu0 %v804
    %v2120 = vpop.f32.mrf.mxu0
    %v2121 = vadd.f32 0.0, %v2120
    %v2122 = vpop.f32.mrf.mxu0
    %v2123 = vadd.f32 0.0, %v2122
    %v2124 = vpop.f32.mrf.mxu0
    %v2125 = vadd.f32 0.0, %v2124
    %v2126 = vpop.f32.mrf.mxu0
    %v2127 = vadd.f32 0.0, %v2126
    %2128 = vmatprep.mubr.bf16.mxu0 %v809
    %2129 = vmatmul.mubr.bf16.gmra.mxu0 %v808
    %v2130 = vpop.f32.mrf.mxu0
    %v2131 = vadd.f32 0.0, %v2130
    %v2132 = vpop.f32.mrf.mxu0
    %v2133 = vadd.f32 0.0, %v2132
    %v2134 = vpop.f32.mrf.mxu0
    %v2135 = vadd.f32 0.0, %v2134
    %v2136 = vpop.f32.mrf.mxu0
    %v2137 = vadd.f32 0.0, %v2136
    %2138 = vmatprep.mubr.bf16.mxu0 %v813
    %2139 = vmatmul.mubr.bf16.gmra.mxu0 %v812
    %v2140 = vpop.f32.mrf.mxu0
    %v2141 = vadd.f32 0.0, %v2140
    %v2142 = vpop.f32.mrf.mxu0
    %v2143 = vadd.f32 0.0, %v2142
    %v2144 = vpop.f32.mrf.mxu0
    %v2145 = vadd.f32 0.0, %v2144
    %v2146 = vpop.f32.mrf.mxu0
    %v2147 = vadd.f32 0.0, %v2146
    %2148 = vmatprep.mubr.bf16.mxu0 %v817
    %2149 = vmatmul.mubr.bf16.gmra.mxu0 %v816
    %v2150 = vpop.f32.mrf.mxu0
    %v2151 = vadd.f32 0.0, %v2150
    %v2152 = vpop.f32.mrf.mxu0
    %v2153 = vadd.f32 0.0, %v2152
    %v2154 = vpop.f32.mrf.mxu0
    %v2155 = vadd.f32 0.0, %v2154
    %v2156 = vpop.f32.mrf.mxu0
    %v2157 = vadd.f32 0.0, %v2156
    %2158 = vmatprep.mubr.bf16.mxu0 %v821
    %2159 = vmatmul.mubr.bf16.gmra.mxu0 %v820
    %v2160 = vpop.f32.mrf.mxu0
    %v2161 = vadd.f32 0.0, %v2160
    %v2162 = vpop.f32.mrf.mxu0
    %v2163 = vadd.f32 0.0, %v2162
    %v2164 = vpop.f32.mrf.mxu0
    %v2165 = vadd.f32 0.0, %v2164
    %v2166 = vpop.f32.mrf.mxu0
    %v2167 = vadd.f32 0.0, %v2166
    %2168 = vmatprep.mubr.bf16.mxu0 %v825
    %2169 = vmatmul.mubr.bf16.gmra.mxu0 %v824
    %v2170 = vpop.f32.mrf.mxu0
    %v2171 = vadd.f32 0.0, %v2170
    %v2172 = vpop.f32.mrf.mxu0
    %v2173 = vadd.f32 0.0, %v2172
    %v2174 = vpop.f32.mrf.mxu0
    %v2175 = vadd.f32 0.0, %v2174
    %v2176 = vpop.f32.mrf.mxu0
    %v2177 = vadd.f32 0.0, %v2176
    %2178 = vmatprep.mubr.bf16.mxu0 %v829
    %2179 = vmatmul.mubr.bf16.gmra.mxu0 %v828
    %v2180 = vpop.f32.mrf.mxu0
    %v2181 = vadd.f32 0.0, %v2180
    %v2182 = vpop.f32.mrf.mxu0
    %v2183 = vadd.f32 0.0, %v2182
    %v2184 = vpop.f32.mrf.mxu0
    %v2185 = vadd.f32 0.0, %v2184
    %v2186 = vpop.f32.mrf.mxu0
    %v2187 = vadd.f32 0.0, %v2186
    %2188 = vmatprep.mubr.bf16.mxu0 %v833
    %2189 = vmatmul.mubr.bf16.gmra.mxu0 %v832
    %v2190 = vpop.f32.mrf.mxu0
    %v2191 = vadd.f32 0.0, %v2190
    %v2192 = vpop.f32.mrf.mxu0
    %v2193 = vadd.f32 0.0, %v2192
    %v2194 = vpop.f32.mrf.mxu0
    %v2195 = vadd.f32 0.0, %v2194
    %v2196 = vpop.f32.mrf.mxu0
    %v2197 = vadd.f32 0.0, %v2196
    %2198 = vmatprep.mubr.bf16.mxu0 %v837
    %2199 = vmatmul.mubr.bf16.gmra.mxu0 %v836
    %v2200 = vpop.f32.mrf.mxu0
    %v2201 = vadd.f32 0.0, %v2200
    %v2202 = vpop.f32.mrf.mxu0
    %v2203 = vadd.f32 0.0, %v2202
    %v2204 = vpop.f32.mrf.mxu0
    %v2205 = vadd.f32 0.0, %v2204
    %v2206 = vpop.f32.mrf.mxu0
    %v2207 = vadd.f32 0.0, %v2206
    %2208 = vmatprep.mubr.bf16.mxu0 %v841
    %2209 = vmatmul.mubr.bf16.gmra.mxu0 %v840
    %v2210 = vpop.f32.mrf.mxu0
    %v2211 = vadd.f32 0.0, %v2210
    %v2212 = vpop.f32.mrf.mxu0
    %v2213 = vadd.f32 0.0, %v2212
    %v2214 = vpop.f32.mrf.mxu0
    %v2215 = vadd.f32 0.0, %v2214
    %v2216 = vpop.f32.mrf.mxu0
    %v2217 = vadd.f32 0.0, %v2216
    %2218 = vmatprep.mubr.bf16.mxu0 %v845
    %2219 = vmatmul.mubr.bf16.gmra.mxu0 %v844
    %v2220 = vpop.f32.mrf.mxu0
    %v2221 = vadd.f32 0.0, %v2220
    %v2222 = vpop.f32.mrf.mxu0
    %v2223 = vadd.f32 0.0, %v2222
    %v2224 = vpop.f32.mrf.mxu0
    %v2225 = vadd.f32 0.0, %v2224
    %v2226 = vpop.f32.mrf.mxu0
    %v2227 = vadd.f32 0.0, %v2226
    %2228 = vmatprep.mubr.bf16.mxu0 %v849
    %2229 = vmatmul.mubr.bf16.gmra.mxu0 %v848
    %v2230 = vpop.f32.mrf.mxu0
    %v2231 = vadd.f32 0.0, %v2230
    %v2232 = vpop.f32.mrf.mxu0
    %v2233 = vadd.f32 0.0, %v2232
    %v2234 = vpop.f32.mrf.mxu0
    %v2235 = vadd.f32 0.0, %v2234
    %v2236 = vpop.f32.mrf.mxu0
    %v2237 = vadd.f32 0.0, %v2236
    %2238 = vmatprep.mubr.bf16.mxu0 %v853
    %2239 = vmatmul.mubr.bf16.gmra.mxu0 %v852
    %v2240 = vpop.f32.mrf.mxu0
    %v2241 = vadd.f32 0.0, %v2240
    %v2242 = vpop.f32.mrf.mxu0
    %v2243 = vadd.f32 0.0, %v2242
    %v2244 = vpop.f32.mrf.mxu0
    %v2245 = vadd.f32 0.0, %v2244
    %v2246 = vpop.f32.mrf.mxu0
    %v2247 = vadd.f32 0.0, %v2246
    %2248 = vmatprep.mubr.bf16.mxu0 %v857
    %2249 = vmatmul.mubr.bf16.gmra.mxu0 %v856
    %v2250 = vpop.f32.mrf.mxu0
    %v2251 = vadd.f32 0.0, %v2250
    %v2252 = vpop.f32.mrf.mxu0
    %v2253 = vadd.f32 0.0, %v2252
    %v2254 = vpop.f32.mrf.mxu0
    %v2255 = vadd.f32 0.0, %v2254
    %v2256 = vpop.f32.mrf.mxu0
    %v2257 = vadd.f32 0.0, %v2256
    %2258 = vmatprep.mubr.bf16.mxu0 %v861
    %2259 = vmatmul.mubr.bf16.gmra.mxu0 %v860
    %v2260 = vpop.f32.mrf.mxu0
    %v2261 = vadd.f32 0.0, %v2260
    %v2262 = vpop.f32.mrf.mxu0
    %v2263 = vadd.f32 0.0, %v2262
    %v2264 = vpop.f32.mrf.mxu0
    %v2265 = vadd.f32 0.0, %v2264
    %v2266 = vpop.f32.mrf.mxu0
    %v2267 = vadd.f32 0.0, %v2266
    %2268 = vmatprep.mubr.bf16.mxu0 %v865
    %2269 = vmatmul.mubr.bf16.gmra.mxu0 %v864
    %v2270 = vpop.f32.mrf.mxu0
    %v2271 = vadd.f32 0.0, %v2270
    %v2272 = vpop.f32.mrf.mxu0
    %v2273 = vadd.f32 0.0, %v2272
    %v2274 = vpop.f32.mrf.mxu0
    %v2275 = vadd.f32 0.0, %v2274
    %v2276 = vpop.f32.mrf.mxu0
    %v2277 = vadd.f32 0.0, %v2276
    %2278 = vmatprep.mubr.bf16.mxu0 %v869
    %2279 = vmatmul.mubr.bf16.gmra.mxu0 %v868
    %v2280 = vpop.f32.mrf.mxu0
    %v2281 = vadd.f32 0.0, %v2280
    %v2282 = vpop.f32.mrf.mxu0
    %v2283 = vadd.f32 0.0, %v2282
    %v2284 = vpop.f32.mrf.mxu0
    %v2285 = vadd.f32 0.0, %v2284
    %v2286 = vpop.f32.mrf.mxu0
    %v2287 = vadd.f32 0.0, %v2286
    %2288 = vmatprep.mubr.bf16.mxu0 %v873
    %2289 = vmatmul.mubr.bf16.gmra.mxu0 %v872
    %v2290 = vpop.f32.mrf.mxu0
    %v2291 = vadd.f32 0.0, %v2290
    %v2292 = vpop.f32.mrf.mxu0
    %v2293 = vadd.f32 0.0, %v2292
    %v2294 = vpop.f32.mrf.mxu0
    %v2295 = vadd.f32 0.0, %v2294
    %v2296 = vpop.f32.mrf.mxu0
    %v2297 = vadd.f32 0.0, %v2296
    %2298 = vmatprep.mubr.bf16.mxu0 %v877
    %2299 = vmatmul.mubr.bf16.gmra.mxu0 %v876
    %v2300 = vpop.f32.mrf.mxu0
    %v2301 = vadd.f32 0.0, %v2300
    %v2302 = vpop.f32.mrf.mxu0
    %v2303 = vadd.f32 0.0, %v2302
    %v2304 = vpop.f32.mrf.mxu0
    %v2305 = vadd.f32 0.0, %v2304
    %v2306 = vpop.f32.mrf.mxu0
    %v2307 = vadd.f32 0.0, %v2306
    %2308 = vmatprep.mubr.bf16.mxu0 %v881
    %2309 = vmatmul.mubr.bf16.gmra.mxu0 %v880
    %v2310 = vpop.f32.mrf.mxu0
    %v2311 = vadd.f32 0.0, %v2310
    %v2312 = vpop.f32.mrf.mxu0
    %v2313 = vadd.f32 0.0, %v2312
    %v2314 = vpop.f32.mrf.mxu0
    %v2315 = vadd.f32 0.0, %v2314
    %v2316 = vpop.f32.mrf.mxu0
    %v2317 = vadd.f32 0.0, %v2316
    %2318 = vmatprep.mubr.bf16.mxu0 %v885
    %2319 = vmatmul.mubr.bf16.gmra.mxu0 %v884
    %v2320 = vpop.f32.mrf.mxu0
    %v2321 = vadd.f32 0.0, %v2320
    %v2322 = vpop.f32.mrf.mxu0
    %v2323 = vadd.f32 0.0, %v2322
    %v2324 = vpop.f32.mrf.mxu0
    %v2325 = vadd.f32 0.0, %v2324
    %v2326 = vpop.f32.mrf.mxu0
    %v2327 = vadd.f32 0.0, %v2326
    %2328 = vdwg.mxu0
    %2329 = vmatprep.subr.bf16.mxu0 %v1731
    %2330 = vmatpush1.bf16.msra.mxu0 %v1730
    %2331 = vmatprep.subr.bf16.mxu0 %v1725
    %2332 = vmatpush1.bf16.msra.mxu0 %v1724
    %2333 = vmatprep.subr.bf16.mxu0 %v1719
    %2334 = vmatpush1.bf16.msra.mxu0 %v1718
    %2335 = vmatprep.subr.bf16.mxu0 %v1713
    %2336 = vmatpush1.bf16.msra.mxu0 %v1712
    %2337 = vmatprep.subr.bf16.mxu0 %v1707
    %2338 = vmatpush1.bf16.msra.mxu0 %v1706
    %2339 = vmatprep.subr.bf16.mxu0 %v1701
    %2340 = vmatpush1.bf16.msra.mxu0 %v1700
    %2341 = vmatprep.subr.bf16.mxu0 %v1695
    %2342 = vmatpush1.bf16.msra.mxu0 %v1694
    %2343 = vmatprep.subr.bf16.mxu0 %v1689
    %2344 = vmatpush1.bf16.msra.mxu0 %v1688
    %2345 = vmatprep.subr.bf16.mxu0 %v1779
    %2346 = vmatpush2.bf16.msra.mxu0 %v1778
    %2347 = vmatprep.subr.bf16.mxu0 %v1773
    %2348 = vmatpush2.bf16.msra.mxu0 %v1772
    %2349 = vmatprep.subr.bf16.mxu0 %v1767
    %2350 = vmatpush2.bf16.msra.mxu0 %v1766
    %2351 = vmatprep.subr.bf16.mxu0 %v1761
    %2352 = vmatpush2.bf16.msra.mxu0 %v1760
    %2353 = vmatprep.subr.bf16.mxu0 %v1755
    %2354 = vmatpush2.bf16.msra.mxu0 %v1754
    %2355 = vmatprep.subr.bf16.mxu0 %v1749
    %2356 = vmatpush2.bf16.msra.mxu0 %v1748
    %2357 = vmatprep.subr.bf16.mxu0 %v1743
    %2358 = vmatpush2.bf16.msra.mxu0 %v1742
    %2359 = vmatprep.subr.bf16.mxu0 %v1737
    %2360 = vmatpush2.bf16.msra.mxu0 %v1736
    %2361 = vmatprep.mubr.bf16.mxu0 %v763
    %2362 = vmatmul.mubr.bf16.gmra.mxu0 %v762
    %v2363 = vpop.f32.mrf.mxu0
    %v2364 = vadd.f32 %v2011, %v2363
    %v2365 = vpop.f32.mrf.mxu0
    %v2366 = vadd.f32 %v2013, %v2365
    %v2367 = vpop.f32.mrf.mxu0
    %v2368 = vadd.f32 %v2015, %v2367
    %v2369 = vpop.f32.mrf.mxu0
    %v2370 = vadd.f32 %v2017, %v2369
    %2371 = vmatprep.mubr.bf16.mxu0 %v767
    %2372 = vmatmul.mubr.bf16.gmra.mxu0 %v766
    %v2373 = vpop.f32.mrf.mxu0
    %v2374 = vadd.f32 %v2021, %v2373
    %v2375 = vpop.f32.mrf.mxu0
    %v2376 = vadd.f32 %v2023, %v2375
    %v2377 = vpop.f32.mrf.mxu0
    %v2378 = vadd.f32 %v2025, %v2377
    %v2379 = vpop.f32.mrf.mxu0
    %v2380 = vadd.f32 %v2027, %v2379
    %2381 = vmatprep.mubr.bf16.mxu0 %v771
    %2382 = vmatmul.mubr.bf16.gmra.mxu0 %v770
    %v2383 = vpop.f32.mrf.mxu0
    %v2384 = vadd.f32 %v2031, %v2383
    %v2385 = vpop.f32.mrf.mxu0
    %v2386 = vadd.f32 %v2033, %v2385
    %v2387 = vpop.f32.mrf.mxu0
    %v2388 = vadd.f32 %v2035, %v2387
    %v2389 = vpop.f32.mrf.mxu0
    %v2390 = vadd.f32 %v2037, %v2389
    %2391 = vmatprep.mubr.bf16.mxu0 %v775
    %2392 = vmatmul.mubr.bf16.gmra.mxu0 %v774
    %v2393 = vpop.f32.mrf.mxu0
    %v2394 = vadd.f32 %v2041, %v2393
    %v2395 = vpop.f32.mrf.mxu0
    %v2396 = vadd.f32 %v2043, %v2395
    %v2397 = vpop.f32.mrf.mxu0
    %v2398 = vadd.f32 %v2045, %v2397
    %v2399 = vpop.f32.mrf.mxu0
    %v2400 = vadd.f32 %v2047, %v2399
    %2401 = vmatprep.mubr.bf16.mxu0 %v779
    %2402 = vmatmul.mubr.bf16.gmra.mxu0 %v778
    %v2403 = vpop.f32.mrf.mxu0
    %v2404 = vadd.f32 %v2051, %v2403
    %v2405 = vpop.f32.mrf.mxu0
    %v2406 = vadd.f32 %v2053, %v2405
    %v2407 = vpop.f32.mrf.mxu0
    %v2408 = vadd.f32 %v2055, %v2407
    %v2409 = vpop.f32.mrf.mxu0
    %v2410 = vadd.f32 %v2057, %v2409
    %2411 = vmatprep.mubr.bf16.mxu0 %v783
    %2412 = vmatmul.mubr.bf16.gmra.mxu0 %v782
    %v2413 = vpop.f32.mrf.mxu0
    %v2414 = vadd.f32 %v2061, %v2413
    %v2415 = vpop.f32.mrf.mxu0
    %v2416 = vadd.f32 %v2063, %v2415
    %v2417 = vpop.f32.mrf.mxu0
    %v2418 = vadd.f32 %v2065, %v2417
    %v2419 = vpop.f32.mrf.mxu0
    %v2420 = vadd.f32 %v2067, %v2419
    %2421 = vmatprep.mubr.bf16.mxu0 %v787
    %2422 = vmatmul.mubr.bf16.gmra.mxu0 %v786
    %v2423 = vpop.f32.mrf.mxu0
    %v2424 = vadd.f32 %v2071, %v2423
    %v2425 = vpop.f32.mrf.mxu0
    %v2426 = vadd.f32 %v2073, %v2425
    %v2427 = vpop.f32.mrf.mxu0
    %v2428 = vadd.f32 %v2075, %v2427
    %v2429 = vpop.f32.mrf.mxu0
    %v2430 = vadd.f32 %v2077, %v2429
    %2431 = vmatprep.mubr.bf16.mxu0 %v791
    %2432 = vmatmul.mubr.bf16.gmra.mxu0 %v790
    %v2433 = vpop.f32.mrf.mxu0
    %v2434 = vadd.f32 %v2081, %v2433
    %v2435 = vpop.f32.mrf.mxu0
    %v2436 = vadd.f32 %v2083, %v2435
    %v2437 = vpop.f32.mrf.mxu0
    %v2438 = vadd.f32 %v2085, %v2437
    %v2439 = vpop.f32.mrf.mxu0
    %v2440 = vadd.f32 %v2087, %v2439
    %2441 = vmatprep.mubr.bf16.mxu0 %v795
    %2442 = vmatmul.mubr.bf16.gmra.mxu0 %v794
    %v2443 = vpop.f32.mrf.mxu0
    %v2444 = vadd.f32 %v2091, %v2443
    %v2445 = vpop.f32.mrf.mxu0
    %v2446 = vadd.f32 %v2093, %v2445
    %v2447 = vpop.f32.mrf.mxu0
    %v2448 = vadd.f32 %v2095, %v2447
    %v2449 = vpop.f32.mrf.mxu0
    %v2450 = vadd.f32 %v2097, %v2449
    %2451 = vmatprep.mubr.bf16.mxu0 %v799
    %2452 = vmatmul.mubr.bf16.gmra.mxu0 %v798
    %v2453 = vpop.f32.mrf.mxu0
    %v2454 = vadd.f32 %v2101, %v2453
    %v2455 = vpop.f32.mrf.mxu0
    %v2456 = vadd.f32 %v2103, %v2455
    %v2457 = vpop.f32.mrf.mxu0
    %v2458 = vadd.f32 %v2105, %v2457
    %v2459 = vpop.f32.mrf.mxu0
    %v2460 = vadd.f32 %v2107, %v2459
    %2461 = vmatprep.mubr.bf16.mxu0 %v803
    %2462 = vmatmul.mubr.bf16.gmra.mxu0 %v802
    %v2463 = vpop.f32.mrf.mxu0
    %v2464 = vadd.f32 %v2111, %v2463
    %v2465 = vpop.f32.mrf.mxu0
    %v2466 = vadd.f32 %v2113, %v2465
    %v2467 = vpop.f32.mrf.mxu0
    %v2468 = vadd.f32 %v2115, %v2467
    %v2469 = vpop.f32.mrf.mxu0
    %v2470 = vadd.f32 %v2117, %v2469
    %2471 = vmatprep.mubr.bf16.mxu0 %v807
    %2472 = vmatmul.mubr.bf16.gmra.mxu0 %v806
    %v2473 = vpop.f32.mrf.mxu0
    %v2474 = vadd.f32 %v2121, %v2473
    %v2475 = vpop.f32.mrf.mxu0
    %v2476 = vadd.f32 %v2123, %v2475
    %v2477 = vpop.f32.mrf.mxu0
    %v2478 = vadd.f32 %v2125, %v2477
    %v2479 = vpop.f32.mrf.mxu0
    %v2480 = vadd.f32 %v2127, %v2479
    %2481 = vmatprep.mubr.bf16.mxu0 %v811
    %2482 = vmatmul.mubr.bf16.gmra.mxu0 %v810
    %v2483 = vpop.f32.mrf.mxu0
    %v2484 = vadd.f32 %v2131, %v2483
    %v2485 = vpop.f32.mrf.mxu0
    %v2486 = vadd.f32 %v2133, %v2485
    %v2487 = vpop.f32.mrf.mxu0
    %v2488 = vadd.f32 %v2135, %v2487
    %v2489 = vpop.f32.mrf.mxu0
    %v2490 = vadd.f32 %v2137, %v2489
    %2491 = vmatprep.mubr.bf16.mxu0 %v815
    %2492 = vmatmul.mubr.bf16.gmra.mxu0 %v814
    %v2493 = vpop.f32.mrf.mxu0
    %v2494 = vadd.f32 %v2141, %v2493
    %v2495 = vpop.f32.mrf.mxu0
    %v2496 = vadd.f32 %v2143, %v2495
    %v2497 = vpop.f32.mrf.mxu0
    %v2498 = vadd.f32 %v2145, %v2497
    %v2499 = vpop.f32.mrf.mxu0
    %v2500 = vadd.f32 %v2147, %v2499
    %2501 = vmatprep.mubr.bf16.mxu0 %v819
    %2502 = vmatmul.mubr.bf16.gmra.mxu0 %v818
    %v2503 = vpop.f32.mrf.mxu0
    %v2504 = vadd.f32 %v2151, %v2503
    %v2505 = vpop.f32.mrf.mxu0
    %v2506 = vadd.f32 %v2153, %v2505
    %v2507 = vpop.f32.mrf.mxu0
    %v2508 = vadd.f32 %v2155, %v2507
    %v2509 = vpop.f32.mrf.mxu0
    %v2510 = vadd.f32 %v2157, %v2509
    %2511 = vmatprep.mubr.bf16.mxu0 %v823
    %2512 = vmatmul.mubr.bf16.gmra.mxu0 %v822
    %v2513 = vpop.f32.mrf.mxu0
    %v2514 = vadd.f32 %v2161, %v2513
    %v2515 = vpop.f32.mrf.mxu0
    %v2516 = vadd.f32 %v2163, %v2515
    %v2517 = vpop.f32.mrf.mxu0
    %v2518 = vadd.f32 %v2165, %v2517
    %v2519 = vpop.f32.mrf.mxu0
    %v2520 = vadd.f32 %v2167, %v2519
    %2521 = vmatprep.mubr.bf16.mxu0 %v827
    %2522 = vmatmul.mubr.bf16.gmra.mxu0 %v826
    %v2523 = vpop.f32.mrf.mxu0
    %v2524 = vadd.f32 %v2171, %v2523
    %v2525 = vpop.f32.mrf.mxu0
    %v2526 = vadd.f32 %v2173, %v2525
    %v2527 = vpop.f32.mrf.mxu0
    %v2528 = vadd.f32 %v2175, %v2527
    %v2529 = vpop.f32.mrf.mxu0
    %v2530 = vadd.f32 %v2177, %v2529
    %2531 = vmatprep.mubr.bf16.mxu0 %v831
    %2532 = vmatmul.mubr.bf16.gmra.mxu0 %v830
    %v2533 = vpop.f32.mrf.mxu0
    %v2534 = vadd.f32 %v2181, %v2533
    %v2535 = vpop.f32.mrf.mxu0
    %v2536 = vadd.f32 %v2183, %v2535
    %v2537 = vpop.f32.mrf.mxu0
    %v2538 = vadd.f32 %v2185, %v2537
    %v2539 = vpop.f32.mrf.mxu0
    %v2540 = vadd.f32 %v2187, %v2539
    %2541 = vmatprep.mubr.bf16.mxu0 %v835
    %2542 = vmatmul.mubr.bf16.gmra.mxu0 %v834
    %v2543 = vpop.f32.mrf.mxu0
    %v2544 = vadd.f32 %v2191, %v2543
    %v2545 = vpop.f32.mrf.mxu0
    %v2546 = vadd.f32 %v2193, %v2545
    %v2547 = vpop.f32.mrf.mxu0
    %v2548 = vadd.f32 %v2195, %v2547
    %v2549 = vpop.f32.mrf.mxu0
    %v2550 = vadd.f32 %v2197, %v2549
    %2551 = vmatprep.mubr.bf16.mxu0 %v839
    %2552 = vmatmul.mubr.bf16.gmra.mxu0 %v838
    %v2553 = vpop.f32.mrf.mxu0
    %v2554 = vadd.f32 %v2201, %v2553
    %v2555 = vpop.f32.mrf.mxu0
    %v2556 = vadd.f32 %v2203, %v2555
    %v2557 = vpop.f32.mrf.mxu0
    %v2558 = vadd.f32 %v2205, %v2557
    %v2559 = vpop.f32.mrf.mxu0
    %v2560 = vadd.f32 %v2207, %v2559
    %2561 = vmatprep.mubr.bf16.mxu0 %v843
    %2562 = vmatmul.mubr.bf16.gmra.mxu0 %v842
    %v2563 = vpop.f32.mrf.mxu0
    %v2564 = vadd.f32 %v2211, %v2563
    %v2565 = vpop.f32.mrf.mxu0
    %v2566 = vadd.f32 %v2213, %v2565
    %v2567 = vpop.f32.mrf.mxu0
    %v2568 = vadd.f32 %v2215, %v2567
    %v2569 = vpop.f32.mrf.mxu0
    %v2570 = vadd.f32 %v2217, %v2569
    %2571 = vmatprep.mubr.bf16.mxu0 %v847
    %2572 = vmatmul.mubr.bf16.gmra.mxu0 %v846
    %v2573 = vpop.f32.mrf.mxu0
    %v2574 = vadd.f32 %v2221, %v2573
    %v2575 = vpop.f32.mrf.mxu0
    %v2576 = vadd.f32 %v2223, %v2575
    %v2577 = vpop.f32.mrf.mxu0
    %v2578 = vadd.f32 %v2225, %v2577
    %v2579 = vpop.f32.mrf.mxu0
    %v2580 = vadd.f32 %v2227, %v2579
    %2581 = vmatprep.mubr.bf16.mxu0 %v851
    %2582 = vmatmul.mubr.bf16.gmra.mxu0 %v850
    %v2583 = vpop.f32.mrf.mxu0
    %v2584 = vadd.f32 %v2231, %v2583
    %v2585 = vpop.f32.mrf.mxu0
    %v2586 = vadd.f32 %v2233, %v2585
    %v2587 = vpop.f32.mrf.mxu0
    %v2588 = vadd.f32 %v2235, %v2587
    %v2589 = vpop.f32.mrf.mxu0
    %v2590 = vadd.f32 %v2237, %v2589
    %2591 = vmatprep.mubr.bf16.mxu0 %v855
    %2592 = vmatmul.mubr.bf16.gmra.mxu0 %v854
    %v2593 = vpop.f32.mrf.mxu0
    %v2594 = vadd.f32 %v2241, %v2593
    %v2595 = vpop.f32.mrf.mxu0
    %v2596 = vadd.f32 %v2243, %v2595
    %v2597 = vpop.f32.mrf.mxu0
    %v2598 = vadd.f32 %v2245, %v2597
    %v2599 = vpop.f32.mrf.mxu0
    %v2600 = vadd.f32 %v2247, %v2599
    %2601 = vmatprep.mubr.bf16.mxu0 %v859
    %2602 = vmatmul.mubr.bf16.gmra.mxu0 %v858
    %v2603 = vpop.f32.mrf.mxu0
    %v2604 = vadd.f32 %v2251, %v2603
    %v2605 = vpop.f32.mrf.mxu0
    %v2606 = vadd.f32 %v2253, %v2605
    %v2607 = vpop.f32.mrf.mxu0
    %v2608 = vadd.f32 %v2255, %v2607
    %v2609 = vpop.f32.mrf.mxu0
    %v2610 = vadd.f32 %v2257, %v2609
    %2611 = vmatprep.mubr.bf16.mxu0 %v863
    %2612 = vmatmul.mubr.bf16.gmra.mxu0 %v862
    %v2613 = vpop.f32.mrf.mxu0
    %v2614 = vadd.f32 %v2261, %v2613
    %v2615 = vpop.f32.mrf.mxu0
    %v2616 = vadd.f32 %v2263, %v2615
    %v2617 = vpop.f32.mrf.mxu0
    %v2618 = vadd.f32 %v2265, %v2617
    %v2619 = vpop.f32.mrf.mxu0
    %v2620 = vadd.f32 %v2267, %v2619
    %2621 = vmatprep.mubr.bf16.mxu0 %v867
    %2622 = vmatmul.mubr.bf16.gmra.mxu0 %v866
    %v2623 = vpop.f32.mrf.mxu0
    %v2624 = vadd.f32 %v2271, %v2623
    %v2625 = vpop.f32.mrf.mxu0
    %v2626 = vadd.f32 %v2273, %v2625
    %v2627 = vpop.f32.mrf.mxu0
    %v2628 = vadd.f32 %v2275, %v2627
    %v2629 = vpop.f32.mrf.mxu0
    %v2630 = vadd.f32 %v2277, %v2629
    %2631 = vmatprep.mubr.bf16.mxu0 %v871
    %2632 = vmatmul.mubr.bf16.gmra.mxu0 %v870
    %v2633 = vpop.f32.mrf.mxu0
    %v2634 = vadd.f32 %v2281, %v2633
    %v2635 = vpop.f32.mrf.mxu0
    %v2636 = vadd.f32 %v2283, %v2635
    %v2637 = vpop.f32.mrf.mxu0
    %v2638 = vadd.f32 %v2285, %v2637
    %v2639 = vpop.f32.mrf.mxu0
    %v2640 = vadd.f32 %v2287, %v2639
    %2641 = vmatprep.mubr.bf16.mxu0 %v875
    %2642 = vmatmul.mubr.bf16.gmra.mxu0 %v874
    %v2643 = vpop.f32.mrf.mxu0
    %v2644 = vadd.f32 %v2291, %v2643
    %v2645 = vpop.f32.mrf.mxu0
    %v2646 = vadd.f32 %v2293, %v2645
    %v2647 = vpop.f32.mrf.mxu0
    %v2648 = vadd.f32 %v2295, %v2647
    %v2649 = vpop.f32.mrf.mxu0
    %v2650 = vadd.f32 %v2297, %v2649
    %2651 = vmatprep.mubr.bf16.mxu0 %v879
    %2652 = vmatmul.mubr.bf16.gmra.mxu0 %v878
    %v2653 = vpop.f32.mrf.mxu0
    %v2654 = vadd.f32 %v2301, %v2653
    %v2655 = vpop.f32.mrf.mxu0
    %v2656 = vadd.f32 %v2303, %v2655
    %v2657 = vpop.f32.mrf.mxu0
    %v2658 = vadd.f32 %v2305, %v2657
    %v2659 = vpop.f32.mrf.mxu0
    %v2660 = vadd.f32 %v2307, %v2659
    %2661 = vmatprep.mubr.bf16.mxu0 %v883
    %2662 = vmatmul.mubr.bf16.gmra.mxu0 %v882
    %v2663 = vpop.f32.mrf.mxu0
    %v2664 = vadd.f32 %v2311, %v2663
    %v2665 = vpop.f32.mrf.mxu0
    %v2666 = vadd.f32 %v2313, %v2665
    %v2667 = vpop.f32.mrf.mxu0
    %v2668 = vadd.f32 %v2315, %v2667
    %v2669 = vpop.f32.mrf.mxu0
    %v2670 = vadd.f32 %v2317, %v2669
    %2671 = vmatprep.mubr.bf16.mxu0 %v887
    %2672 = vmatmul.mubr.bf16.gmra.mxu0 %v886
    %v2673 = vpop.f32.mrf.mxu0
    %v2674 = vadd.f32 %v2321, %v2673
    %v2675 = vpop.f32.mrf.mxu0
    %v2676 = vadd.f32 %v2323, %v2675
    %v2677 = vpop.f32.mrf.mxu0
    %v2678 = vadd.f32 %v2325, %v2677
    %v2679 = vpop.f32.mrf.mxu0
    %v2680 = vadd.f32 %v2327, %v2679
    %2681 = vdwg.mxu0
    %2682 = vmatprep.subr.bf16.mxu0 %v1637
    %2683 = vmatpush1.bf16.msra.mxu0 %v1636
    %2684 = vmatprep.subr.bf16.mxu0 %v1631
    %2685 = vmatpush1.bf16.msra.mxu0 %v1630
    %2686 = vmatprep.subr.bf16.mxu0 %v1625
    %2687 = vmatpush1.bf16.msra.mxu0 %v1624
    %2688 = vmatprep.subr.bf16.mxu0 %v1619
    %2689 = vmatpush1.bf16.msra.mxu0 %v1618
    %2690 = vmatprep.subr.bf16.mxu0 %v1613
    %2691 = vmatpush1.bf16.msra.mxu0 %v1612
    %2692 = vmatprep.subr.bf16.mxu0 %v1607
    %2693 = vmatpush1.bf16.msra.mxu0 %v1606
    %2694 = vmatprep.subr.bf16.mxu0 %v1601
    %2695 = vmatpush1.bf16.msra.mxu0 %v1600
    %2696 = vmatprep.subr.bf16.mxu0 %v1595
    %2697 = vmatpush1.bf16.msra.mxu0 %v1594
    %2698 = vmatprep.subr.bf16.mxu0 %v1685
    %2699 = vmatpush2.bf16.msra.mxu0 %v1684
    %2700 = vmatprep.subr.bf16.mxu0 %v1679
    %2701 = vmatpush2.bf16.msra.mxu0 %v1678
    %2702 = vmatprep.subr.bf16.mxu0 %v1673
    %2703 = vmatpush2.bf16.msra.mxu0 %v1672
    %2704 = vmatprep.subr.bf16.mxu0 %v1667
    %2705 = vmatpush2.bf16.msra.mxu0 %v1666
    %2706 = vmatprep.subr.bf16.mxu0 %v1661
    %2707 = vmatpush2.bf16.msra.mxu0 %v1660
    %2708 = vmatprep.subr.bf16.mxu0 %v1655
    %2709 = vmatpush2.bf16.msra.mxu0 %v1654
    %2710 = vmatprep.subr.bf16.mxu0 %v1649
    %2711 = vmatpush2.bf16.msra.mxu0 %v1648
    %2712 = vmatprep.subr.bf16.mxu0 %v1643
    %2713 = vmatpush2.bf16.msra.mxu0 %v1642
    %2714 = vmatprep.mubr.bf16.mxu0 %v761
    %2715 = vmatmul.mubr.bf16.gmra.mxu0 %v760
    %v2716 = vpop.f32.mrf.mxu0
    %v2717 = vadd.f32 0.0, %v2716
    %v2718 = vpop.f32.mrf.mxu0
    %v2719 = vadd.f32 0.0, %v2718
    %v2720 = vpop.f32.mrf.mxu0
    %v2721 = vadd.f32 0.0, %v2720
    %v2722 = vpop.f32.mrf.mxu0
    %v2723 = vadd.f32 0.0, %v2722
    %2724 = vmatprep.mubr.bf16.mxu0 %v765
    %2725 = vmatmul.mubr.bf16.gmra.mxu0 %v764
    %v2726 = vpop.f32.mrf.mxu0
    %v2727 = vadd.f32 0.0, %v2726
    %v2728 = vpop.f32.mrf.mxu0
    %v2729 = vadd.f32 0.0, %v2728
    %v2730 = vpop.f32.mrf.mxu0
    %v2731 = vadd.f32 0.0, %v2730
    %v2732 = vpop.f32.mrf.mxu0
    %v2733 = vadd.f32 0.0, %v2732
    %2734 = vmatprep.mubr.bf16.mxu0 %v769
    %2735 = vmatmul.mubr.bf16.gmra.mxu0 %v768
    %v2736 = vpop.f32.mrf.mxu0
    %v2737 = vadd.f32 0.0, %v2736
    %v2738 = vpop.f32.mrf.mxu0
    %v2739 = vadd.f32 0.0, %v2738
    %v2740 = vpop.f32.mrf.mxu0
    %v2741 = vadd.f32 0.0, %v2740
    %v2742 = vpop.f32.mrf.mxu0
    %v2743 = vadd.f32 0.0, %v2742
    %2744 = vmatprep.mubr.bf16.mxu0 %v773
    %2745 = vmatmul.mubr.bf16.gmra.mxu0 %v772
    %v2746 = vpop.f32.mrf.mxu0
    %v2747 = vadd.f32 0.0, %v2746
    %v2748 = vpop.f32.mrf.mxu0
    %v2749 = vadd.f32 0.0, %v2748
    %v2750 = vpop.f32.mrf.mxu0
    %v2751 = vadd.f32 0.0, %v2750
    %v2752 = vpop.f32.mrf.mxu0
    %v2753 = vadd.f32 0.0, %v2752
    %2754 = vmatprep.mubr.bf16.mxu0 %v777
    %2755 = vmatmul.mubr.bf16.gmra.mxu0 %v776
    %v2756 = vpop.f32.mrf.mxu0
    %v2757 = vadd.f32 0.0, %v2756
    %v2758 = vpop.f32.mrf.mxu0
    %v2759 = vadd.f32 0.0, %v2758
    %v2760 = vpop.f32.mrf.mxu0
    %v2761 = vadd.f32 0.0, %v2760
    %v2762 = vpop.f32.mrf.mxu0
    %v2763 = vadd.f32 0.0, %v2762
    %2764 = vmatprep.mubr.bf16.mxu0 %v781
    %2765 = vmatmul.mubr.bf16.gmra.mxu0 %v780
    %v2766 = vpop.f32.mrf.mxu0
    %v2767 = vadd.f32 0.0, %v2766
    %v2768 = vpop.f32.mrf.mxu0
    %v2769 = vadd.f32 0.0, %v2768
    %v2770 = vpop.f32.mrf.mxu0
    %v2771 = vadd.f32 0.0, %v2770
    %v2772 = vpop.f32.mrf.mxu0
    %v2773 = vadd.f32 0.0, %v2772
    %2774 = vmatprep.mubr.bf16.mxu0 %v785
    %2775 = vmatmul.mubr.bf16.gmra.mxu0 %v784
    %v2776 = vpop.f32.mrf.mxu0
    %v2777 = vadd.f32 0.0, %v2776
    %v2778 = vpop.f32.mrf.mxu0
    %v2779 = vadd.f32 0.0, %v2778
    %v2780 = vpop.f32.mrf.mxu0
    %v2781 = vadd.f32 0.0, %v2780
    %v2782 = vpop.f32.mrf.mxu0
    %v2783 = vadd.f32 0.0, %v2782
    %2784 = vmatprep.mubr.bf16.mxu0 %v789
    %2785 = vmatmul.mubr.bf16.gmra.mxu0 %v788
    %v2786 = vpop.f32.mrf.mxu0
    %v2787 = vadd.f32 0.0, %v2786
    %v2788 = vpop.f32.mrf.mxu0
    %v2789 = vadd.f32 0.0, %v2788
    %v2790 = vpop.f32.mrf.mxu0
    %v2791 = vadd.f32 0.0, %v2790
    %v2792 = vpop.f32.mrf.mxu0
    %v2793 = vadd.f32 0.0, %v2792
    %2794 = vmatprep.mubr.bf16.mxu0 %v793
    %2795 = vmatmul.mubr.bf16.gmra.mxu0 %v792
    %v2796 = vpop.f32.mrf.mxu0
    %v2797 = vadd.f32 0.0, %v2796
    %v2798 = vpop.f32.mrf.mxu0
    %v2799 = vadd.f32 0.0, %v2798
    %v2800 = vpop.f32.mrf.mxu0
    %v2801 = vadd.f32 0.0, %v2800
    %v2802 = vpop.f32.mrf.mxu0
    %v2803 = vadd.f32 0.0, %v2802
    %2804 = vmatprep.mubr.bf16.mxu0 %v797
    %2805 = vmatmul.mubr.bf16.gmra.mxu0 %v796
    %v2806 = vpop.f32.mrf.mxu0
    %v2807 = vadd.f32 0.0, %v2806
    %v2808 = vpop.f32.mrf.mxu0
    %v2809 = vadd.f32 0.0, %v2808
    %v2810 = vpop.f32.mrf.mxu0
    %v2811 = vadd.f32 0.0, %v2810
    %v2812 = vpop.f32.mrf.mxu0
    %v2813 = vadd.f32 0.0, %v2812
    %2814 = vmatprep.mubr.bf16.mxu0 %v801
    %2815 = vmatmul.mubr.bf16.gmra.mxu0 %v800
    %v2816 = vpop.f32.mrf.mxu0
    %v2817 = vadd.f32 0.0, %v2816
    %v2818 = vpop.f32.mrf.mxu0
    %v2819 = vadd.f32 0.0, %v2818
    %v2820 = vpop.f32.mrf.mxu0
    %v2821 = vadd.f32 0.0, %v2820
    %v2822 = vpop.f32.mrf.mxu0
    %v2823 = vadd.f32 0.0, %v2822
    %2824 = vmatprep.mubr.bf16.mxu0 %v805
    %2825 = vmatmul.mubr.bf16.gmra.mxu0 %v804
    %v2826 = vpop.f32.mrf.mxu0
    %v2827 = vadd.f32 0.0, %v2826
    %v2828 = vpop.f32.mrf.mxu0
    %v2829 = vadd.f32 0.0, %v2828
    %v2830 = vpop.f32.mrf.mxu0
    %v2831 = vadd.f32 0.0, %v2830
    %v2832 = vpop.f32.mrf.mxu0
    %v2833 = vadd.f32 0.0, %v2832
    %2834 = vmatprep.mubr.bf16.mxu0 %v809
    %2835 = vmatmul.mubr.bf16.gmra.mxu0 %v808
    %v2836 = vpop.f32.mrf.mxu0
    %v2837 = vadd.f32 0.0, %v2836
    %v2838 = vpop.f32.mrf.mxu0
    %v2839 = vadd.f32 0.0, %v2838
    %v2840 = vpop.f32.mrf.mxu0
    %v2841 = vadd.f32 0.0, %v2840
    %v2842 = vpop.f32.mrf.mxu0
    %v2843 = vadd.f32 0.0, %v2842
    %2844 = vmatprep.mubr.bf16.mxu0 %v813
    %2845 = vmatmul.mubr.bf16.gmra.mxu0 %v812
    %v2846 = vpop.f32.mrf.mxu0
    %v2847 = vadd.f32 0.0, %v2846
    %v2848 = vpop.f32.mrf.mxu0
    %v2849 = vadd.f32 0.0, %v2848
    %v2850 = vpop.f32.mrf.mxu0
    %v2851 = vadd.f32 0.0, %v2850
    %v2852 = vpop.f32.mrf.mxu0
    %v2853 = vadd.f32 0.0, %v2852
    %2854 = vmatprep.mubr.bf16.mxu0 %v817
    %2855 = vmatmul.mubr.bf16.gmra.mxu0 %v816
    %v2856 = vpop.f32.mrf.mxu0
    %v2857 = vadd.f32 0.0, %v2856
    %v2858 = vpop.f32.mrf.mxu0
    %v2859 = vadd.f32 0.0, %v2858
    %v2860 = vpop.f32.mrf.mxu0
    %v2861 = vadd.f32 0.0, %v2860
    %v2862 = vpop.f32.mrf.mxu0
    %v2863 = vadd.f32 0.0, %v2862
    %2864 = vmatprep.mubr.bf16.mxu0 %v821
    %2865 = vmatmul.mubr.bf16.gmra.mxu0 %v820
    %v2866 = vpop.f32.mrf.mxu0
    %v2867 = vadd.f32 0.0, %v2866
    %v2868 = vpop.f32.mrf.mxu0
    %v2869 = vadd.f32 0.0, %v2868
    %v2870 = vpop.f32.mrf.mxu0
    %v2871 = vadd.f32 0.0, %v2870
    %v2872 = vpop.f32.mrf.mxu0
    %v2873 = vadd.f32 0.0, %v2872
    %2874 = vmatprep.mubr.bf16.mxu0 %v825
    %2875 = vmatmul.mubr.bf16.gmra.mxu0 %v824
    %v2876 = vpop.f32.mrf.mxu0
    %v2877 = vadd.f32 0.0, %v2876
    %v2878 = vpop.f32.mrf.mxu0
    %v2879 = vadd.f32 0.0, %v2878
    %v2880 = vpop.f32.mrf.mxu0
    %v2881 = vadd.f32 0.0, %v2880
    %v2882 = vpop.f32.mrf.mxu0
    %v2883 = vadd.f32 0.0, %v2882
    %2884 = vmatprep.mubr.bf16.mxu0 %v829
    %2885 = vmatmul.mubr.bf16.gmra.mxu0 %v828
    %v2886 = vpop.f32.mrf.mxu0
    %v2887 = vadd.f32 0.0, %v2886
    %v2888 = vpop.f32.mrf.mxu0
    %v2889 = vadd.f32 0.0, %v2888
    %v2890 = vpop.f32.mrf.mxu0
    %v2891 = vadd.f32 0.0, %v2890
    %v2892 = vpop.f32.mrf.mxu0
    %v2893 = vadd.f32 0.0, %v2892
    %2894 = vmatprep.mubr.bf16.mxu0 %v833
    %2895 = vmatmul.mubr.bf16.gmra.mxu0 %v832
    %v2896 = vpop.f32.mrf.mxu0
    %v2897 = vadd.f32 0.0, %v2896
    %v2898 = vpop.f32.mrf.mxu0
    %v2899 = vadd.f32 0.0, %v2898
    %v2900 = vpop.f32.mrf.mxu0
    %v2901 = vadd.f32 0.0, %v2900
    %v2902 = vpop.f32.mrf.mxu0
    %v2903 = vadd.f32 0.0, %v2902
    %2904 = vmatprep.mubr.bf16.mxu0 %v837
    %2905 = vmatmul.mubr.bf16.gmra.mxu0 %v836
    %v2906 = vpop.f32.mrf.mxu0
    %v2907 = vadd.f32 0.0, %v2906
    %v2908 = vpop.f32.mrf.mxu0
    %v2909 = vadd.f32 0.0, %v2908
    %v2910 = vpop.f32.mrf.mxu0
    %v2911 = vadd.f32 0.0, %v2910
    %v2912 = vpop.f32.mrf.mxu0
    %v2913 = vadd.f32 0.0, %v2912
    %2914 = vmatprep.mubr.bf16.mxu0 %v841
    %2915 = vmatmul.mubr.bf16.gmra.mxu0 %v840
    %v2916 = vpop.f32.mrf.mxu0
    %v2917 = vadd.f32 0.0, %v2916
    %v2918 = vpop.f32.mrf.mxu0
    %v2919 = vadd.f32 0.0, %v2918
    %v2920 = vpop.f32.mrf.mxu0
    %v2921 = vadd.f32 0.0, %v2920
    %v2922 = vpop.f32.mrf.mxu0
    %v2923 = vadd.f32 0.0, %v2922
    %2924 = vmatprep.mubr.bf16.mxu0 %v845
    %2925 = vmatmul.mubr.bf16.gmra.mxu0 %v844
    %v2926 = vpop.f32.mrf.mxu0
    %v2927 = vadd.f32 0.0, %v2926
    %v2928 = vpop.f32.mrf.mxu0
    %v2929 = vadd.f32 0.0, %v2928
    %v2930 = vpop.f32.mrf.mxu0
    %v2931 = vadd.f32 0.0, %v2930
    %v2932 = vpop.f32.mrf.mxu0
    %v2933 = vadd.f32 0.0, %v2932
    %2934 = vmatprep.mubr.bf16.mxu0 %v849
    %2935 = vmatmul.mubr.bf16.gmra.mxu0 %v848
    %v2936 = vpop.f32.mrf.mxu0
    %v2937 = vadd.f32 0.0, %v2936
    %v2938 = vpop.f32.mrf.mxu0
    %v2939 = vadd.f32 0.0, %v2938
    %v2940 = vpop.f32.mrf.mxu0
    %v2941 = vadd.f32 0.0, %v2940
    %v2942 = vpop.f32.mrf.mxu0
    %v2943 = vadd.f32 0.0, %v2942
    %2944 = vmatprep.mubr.bf16.mxu0 %v853
    %2945 = vmatmul.mubr.bf16.gmra.mxu0 %v852
    %v2946 = vpop.f32.mrf.mxu0
    %v2947 = vadd.f32 0.0, %v2946
    %v2948 = vpop.f32.mrf.mxu0
    %v2949 = vadd.f32 0.0, %v2948
    %v2950 = vpop.f32.mrf.mxu0
    %v2951 = vadd.f32 0.0, %v2950
    %v2952 = vpop.f32.mrf.mxu0
    %v2953 = vadd.f32 0.0, %v2952
    %2954 = vmatprep.mubr.bf16.mxu0 %v857
    %2955 = vmatmul.mubr.bf16.gmra.mxu0 %v856
    %v2956 = vpop.f32.mrf.mxu0
    %v2957 = vadd.f32 0.0, %v2956
    %v2958 = vpop.f32.mrf.mxu0
    %v2959 = vadd.f32 0.0, %v2958
    %v2960 = vpop.f32.mrf.mxu0
    %v2961 = vadd.f32 0.0, %v2960
    %v2962 = vpop.f32.mrf.mxu0
    %v2963 = vadd.f32 0.0, %v2962
    %2964 = vmatprep.mubr.bf16.mxu0 %v861
    %2965 = vmatmul.mubr.bf16.gmra.mxu0 %v860
    %v2966 = vpop.f32.mrf.mxu0
    %v2967 = vadd.f32 0.0, %v2966
    %v2968 = vpop.f32.mrf.mxu0
    %v2969 = vadd.f32 0.0, %v2968
    %v2970 = vpop.f32.mrf.mxu0
    %v2971 = vadd.f32 0.0, %v2970
    %v2972 = vpop.f32.mrf.mxu0
    %v2973 = vadd.f32 0.0, %v2972
    %2974 = vmatprep.mubr.bf16.mxu0 %v865
    %2975 = vmatmul.mubr.bf16.gmra.mxu0 %v864
    %v2976 = vpop.f32.mrf.mxu0
    %v2977 = vadd.f32 0.0, %v2976
    %v2978 = vpop.f32.mrf.mxu0
    %v2979 = vadd.f32 0.0, %v2978
    %v2980 = vpop.f32.mrf.mxu0
    %v2981 = vadd.f32 0.0, %v2980
    %v2982 = vpop.f32.mrf.mxu0
    %v2983 = vadd.f32 0.0, %v2982
    %2984 = vmatprep.mubr.bf16.mxu0 %v869
    %2985 = vmatmul.mubr.bf16.gmra.mxu0 %v868
    %v2986 = vpop.f32.mrf.mxu0
    %v2987 = vadd.f32 0.0, %v2986
    %v2988 = vpop.f32.mrf.mxu0
    %v2989 = vadd.f32 0.0, %v2988
    %v2990 = vpop.f32.mrf.mxu0
    %v2991 = vadd.f32 0.0, %v2990
    %v2992 = vpop.f32.mrf.mxu0
    %v2993 = vadd.f32 0.0, %v2992
    %2994 = vmatprep.mubr.bf16.mxu0 %v873
    %2995 = vmatmul.mubr.bf16.gmra.mxu0 %v872
    %v2996 = vpop.f32.mrf.mxu0
    %v2997 = vadd.f32 0.0, %v2996
    %v2998 = vpop.f32.mrf.mxu0
    %v2999 = vadd.f32 0.0, %v2998
    %v3000 = vpop.f32.mrf.mxu0
    %v3001 = vadd.f32 0.0, %v3000
    %v3002 = vpop.f32.mrf.mxu0
    %v3003 = vadd.f32 0.0, %v3002
    %3004 = vmatprep.mubr.bf16.mxu0 %v877
    %3005 = vmatmul.mubr.bf16.gmra.mxu0 %v876
    %v3006 = vpop.f32.mrf.mxu0
    %v3007 = vadd.f32 0.0, %v3006
    %v3008 = vpop.f32.mrf.mxu0
    %v3009 = vadd.f32 0.0, %v3008
    %v3010 = vpop.f32.mrf.mxu0
    %v3011 = vadd.f32 0.0, %v3010
    %v3012 = vpop.f32.mrf.mxu0
    %v3013 = vadd.f32 0.0, %v3012
    %3014 = vmatprep.mubr.bf16.mxu0 %v881
    %3015 = vmatmul.mubr.bf16.gmra.mxu0 %v880
    %v3016 = vpop.f32.mrf.mxu0
    %v3017 = vadd.f32 0.0, %v3016
    %v3018 = vpop.f32.mrf.mxu0
    %v3019 = vadd.f32 0.0, %v3018
    %v3020 = vpop.f32.mrf.mxu0
    %v3021 = vadd.f32 0.0, %v3020
    %v3022 = vpop.f32.mrf.mxu0
    %v3023 = vadd.f32 0.0, %v3022
    %3024 = vmatprep.mubr.bf16.mxu0 %v885
    %3025 = vmatmul.mubr.bf16.gmra.mxu0 %v884
    %v3026 = vpop.f32.mrf.mxu0
    %v3027 = vadd.f32 0.0, %v3026
    %v3028 = vpop.f32.mrf.mxu0
    %v3029 = vadd.f32 0.0, %v3028
    %v3030 = vpop.f32.mrf.mxu0
    %v3031 = vadd.f32 0.0, %v3030
    %v3032 = vpop.f32.mrf.mxu0
    %v3033 = vadd.f32 0.0, %v3032
    %3034 = vdwg.mxu0
    %3035 = vmatprep.subr.bf16.mxu0 %v1733
    %3036 = vmatpush1.bf16.msra.mxu0 %v1732
    %3037 = vmatprep.subr.bf16.mxu0 %v1727
    %3038 = vmatpush1.bf16.msra.mxu0 %v1726
    %3039 = vmatprep.subr.bf16.mxu0 %v1721
    %3040 = vmatpush1.bf16.msra.mxu0 %v1720
    %3041 = vmatprep.subr.bf16.mxu0 %v1715
    %3042 = vmatpush1.bf16.msra.mxu0 %v1714
    %3043 = vmatprep.subr.bf16.mxu0 %v1709
    %3044 = vmatpush1.bf16.msra.mxu0 %v1708
    %3045 = vmatprep.subr.bf16.mxu0 %v1703
    %3046 = vmatpush1.bf16.msra.mxu0 %v1702
    %3047 = vmatprep.subr.bf16.mxu0 %v1697
    %3048 = vmatpush1.bf16.msra.mxu0 %v1696
    %3049 = vmatprep.subr.bf16.mxu0 %v1691
    %3050 = vmatpush1.bf16.msra.mxu0 %v1690
    %3051 = vmatprep.subr.bf16.mxu0 %v1781
    %3052 = vmatpush2.bf16.msra.mxu0 %v1780
    %3053 = vmatprep.subr.bf16.mxu0 %v1775
    %3054 = vmatpush2.bf16.msra.mxu0 %v1774
    %3055 = vmatprep.subr.bf16.mxu0 %v1769
    %3056 = vmatpush2.bf16.msra.mxu0 %v1768
    %3057 = vmatprep.subr.bf16.mxu0 %v1763
    %3058 = vmatpush2.bf16.msra.mxu0 %v1762
    %3059 = vmatprep.subr.bf16.mxu0 %v1757
    %3060 = vmatpush2.bf16.msra.mxu0 %v1756
    %3061 = vmatprep.subr.bf16.mxu0 %v1751
    %3062 = vmatpush2.bf16.msra.mxu0 %v1750
    %3063 = vmatprep.subr.bf16.mxu0 %v1745
    %3064 = vmatpush2.bf16.msra.mxu0 %v1744
    %3065 = vmatprep.subr.bf16.mxu0 %v1739
    %3066 = vmatpush2.bf16.msra.mxu0 %v1738
    %3067 = vmatprep.mubr.bf16.mxu0 %v763
    %3068 = vmatmul.mubr.bf16.gmra.mxu0 %v762
    %v3069 = vpop.f32.mrf.mxu0
    %v3070 = vadd.f32 %v2717, %v3069
    %v3071 = vpop.f32.mrf.mxu0
    %v3072 = vadd.f32 %v2719, %v3071
    %v3073 = vpop.f32.mrf.mxu0
    %v3074 = vadd.f32 %v2721, %v3073
    %v3075 = vpop.f32.mrf.mxu0
    %v3076 = vadd.f32 %v2723, %v3075
    %3077 = vmatprep.mubr.bf16.mxu0 %v767
    %3078 = vmatmul.mubr.bf16.gmra.mxu0 %v766
    %v3079 = vpop.f32.mrf.mxu0
    %v3080 = vadd.f32 %v2727, %v3079
    %v3081 = vpop.f32.mrf.mxu0
    %v3082 = vadd.f32 %v2729, %v3081
    %v3083 = vpop.f32.mrf.mxu0
    %v3084 = vadd.f32 %v2731, %v3083
    %v3085 = vpop.f32.mrf.mxu0
    %v3086 = vadd.f32 %v2733, %v3085
    %3087 = vmatprep.mubr.bf16.mxu0 %v771
    %3088 = vmatmul.mubr.bf16.gmra.mxu0 %v770
    %v3089 = vpop.f32.mrf.mxu0
    %v3090 = vadd.f32 %v2737, %v3089
    %v3091 = vpop.f32.mrf.mxu0
    %v3092 = vadd.f32 %v2739, %v3091
    %v3093 = vpop.f32.mrf.mxu0
    %v3094 = vadd.f32 %v2741, %v3093
    %v3095 = vpop.f32.mrf.mxu0
    %v3096 = vadd.f32 %v2743, %v3095
    %3097 = vmatprep.mubr.bf16.mxu0 %v775
    %3098 = vmatmul.mubr.bf16.gmra.mxu0 %v774
    %v3099 = vpop.f32.mrf.mxu0
    %v3100 = vadd.f32 %v2747, %v3099
    %v3101 = vpop.f32.mrf.mxu0
    %v3102 = vadd.f32 %v2749, %v3101
    %v3103 = vpop.f32.mrf.mxu0
    %v3104 = vadd.f32 %v2751, %v3103
    %v3105 = vpop.f32.mrf.mxu0
    %v3106 = vadd.f32 %v2753, %v3105
    %3107 = vmatprep.mubr.bf16.mxu0 %v779
    %3108 = vmatmul.mubr.bf16.gmra.mxu0 %v778
    %v3109 = vpop.f32.mrf.mxu0
    %v3110 = vadd.f32 %v2757, %v3109
    %v3111 = vpop.f32.mrf.mxu0
    %v3112 = vadd.f32 %v2759, %v3111
    %v3113 = vpop.f32.mrf.mxu0
    %v3114 = vadd.f32 %v2761, %v3113
    %v3115 = vpop.f32.mrf.mxu0
    %v3116 = vadd.f32 %v2763, %v3115
    %3117 = vmatprep.mubr.bf16.mxu0 %v783
    %3118 = vmatmul.mubr.bf16.gmra.mxu0 %v782
    %v3119 = vpop.f32.mrf.mxu0
    %v3120 = vadd.f32 %v2767, %v3119
    %v3121 = vpop.f32.mrf.mxu0
    %v3122 = vadd.f32 %v2769, %v3121
    %v3123 = vpop.f32.mrf.mxu0
    %v3124 = vadd.f32 %v2771, %v3123
    %v3125 = vpop.f32.mrf.mxu0
    %v3126 = vadd.f32 %v2773, %v3125
    %3127 = vmatprep.mubr.bf16.mxu0 %v787
    %3128 = vmatmul.mubr.bf16.gmra.mxu0 %v786
    %v3129 = vpop.f32.mrf.mxu0
    %v3130 = vadd.f32 %v2777, %v3129
    %v3131 = vpop.f32.mrf.mxu0
    %v3132 = vadd.f32 %v2779, %v3131
    %v3133 = vpop.f32.mrf.mxu0
    %v3134 = vadd.f32 %v2781, %v3133
    %v3135 = vpop.f32.mrf.mxu0
    %v3136 = vadd.f32 %v2783, %v3135
    %3137 = vmatprep.mubr.bf16.mxu0 %v791
    %3138 = vmatmul.mubr.bf16.gmra.mxu0 %v790
    %v3139 = vpop.f32.mrf.mxu0
    %v3140 = vadd.f32 %v2787, %v3139
    %v3141 = vpop.f32.mrf.mxu0
    %v3142 = vadd.f32 %v2789, %v3141
    %v3143 = vpop.f32.mrf.mxu0
    %v3144 = vadd.f32 %v2791, %v3143
    %v3145 = vpop.f32.mrf.mxu0
    %v3146 = vadd.f32 %v2793, %v3145
    %3147 = vmatprep.mubr.bf16.mxu0 %v795
    %3148 = vmatmul.mubr.bf16.gmra.mxu0 %v794
    %v3149 = vpop.f32.mrf.mxu0
    %v3150 = vadd.f32 %v2797, %v3149
    %v3151 = vpop.f32.mrf.mxu0
    %v3152 = vadd.f32 %v2799, %v3151
    %v3153 = vpop.f32.mrf.mxu0
    %v3154 = vadd.f32 %v2801, %v3153
    %v3155 = vpop.f32.mrf.mxu0
    %v3156 = vadd.f32 %v2803, %v3155
    %3157 = vmatprep.mubr.bf16.mxu0 %v799
    %3158 = vmatmul.mubr.bf16.gmra.mxu0 %v798
    %v3159 = vpop.f32.mrf.mxu0
    %v3160 = vadd.f32 %v2807, %v3159
    %v3161 = vpop.f32.mrf.mxu0
    %v3162 = vadd.f32 %v2809, %v3161
    %v3163 = vpop.f32.mrf.mxu0
    %v3164 = vadd.f32 %v2811, %v3163
    %v3165 = vpop.f32.mrf.mxu0
    %v3166 = vadd.f32 %v2813, %v3165
    %3167 = vmatprep.mubr.bf16.mxu0 %v803
    %3168 = vmatmul.mubr.bf16.gmra.mxu0 %v802
    %v3169 = vpop.f32.mrf.mxu0
    %v3170 = vadd.f32 %v2817, %v3169
    %v3171 = vpop.f32.mrf.mxu0
    %v3172 = vadd.f32 %v2819, %v3171
    %v3173 = vpop.f32.mrf.mxu0
    %v3174 = vadd.f32 %v2821, %v3173
    %v3175 = vpop.f32.mrf.mxu0
    %v3176 = vadd.f32 %v2823, %v3175
    %3177 = vmatprep.mubr.bf16.mxu0 %v807
    %3178 = vmatmul.mubr.bf16.gmra.mxu0 %v806
    %v3179 = vpop.f32.mrf.mxu0
    %v3180 = vadd.f32 %v2827, %v3179
    %v3181 = vpop.f32.mrf.mxu0
    %v3182 = vadd.f32 %v2829, %v3181
    %v3183 = vpop.f32.mrf.mxu0
    %v3184 = vadd.f32 %v2831, %v3183
    %v3185 = vpop.f32.mrf.mxu0
    %v3186 = vadd.f32 %v2833, %v3185
    %3187 = vmatprep.mubr.bf16.mxu0 %v811
    %3188 = vmatmul.mubr.bf16.gmra.mxu0 %v810
    %v3189 = vpop.f32.mrf.mxu0
    %v3190 = vadd.f32 %v2837, %v3189
    %v3191 = vpop.f32.mrf.mxu0
    %v3192 = vadd.f32 %v2839, %v3191
    %v3193 = vpop.f32.mrf.mxu0
    %v3194 = vadd.f32 %v2841, %v3193
    %v3195 = vpop.f32.mrf.mxu0
    %v3196 = vadd.f32 %v2843, %v3195
    %3197 = vmatprep.mubr.bf16.mxu0 %v815
    %3198 = vmatmul.mubr.bf16.gmra.mxu0 %v814
    %v3199 = vpop.f32.mrf.mxu0
    %v3200 = vadd.f32 %v2847, %v3199
    %v3201 = vpop.f32.mrf.mxu0
    %v3202 = vadd.f32 %v2849, %v3201
    %v3203 = vpop.f32.mrf.mxu0
    %v3204 = vadd.f32 %v2851, %v3203
    %v3205 = vpop.f32.mrf.mxu0
    %v3206 = vadd.f32 %v2853, %v3205
    %3207 = vmatprep.mubr.bf16.mxu0 %v819
    %3208 = vmatmul.mubr.bf16.gmra.mxu0 %v818
    %v3209 = vpop.f32.mrf.mxu0
    %v3210 = vadd.f32 %v2857, %v3209
    %v3211 = vpop.f32.mrf.mxu0
    %v3212 = vadd.f32 %v2859, %v3211
    %v3213 = vpop.f32.mrf.mxu0
    %v3214 = vadd.f32 %v2861, %v3213
    %v3215 = vpop.f32.mrf.mxu0
    %v3216 = vadd.f32 %v2863, %v3215
    %3217 = vmatprep.mubr.bf16.mxu0 %v823
    %3218 = vmatmul.mubr.bf16.gmra.mxu0 %v822
    %v3219 = vpop.f32.mrf.mxu0
    %v3220 = vadd.f32 %v2867, %v3219
    %v3221 = vpop.f32.mrf.mxu0
    %v3222 = vadd.f32 %v2869, %v3221
    %v3223 = vpop.f32.mrf.mxu0
    %v3224 = vadd.f32 %v2871, %v3223
    %v3225 = vpop.f32.mrf.mxu0
    %v3226 = vadd.f32 %v2873, %v3225
    %3227 = vmatprep.mubr.bf16.mxu0 %v827
    %3228 = vmatmul.mubr.bf16.gmra.mxu0 %v826
    %v3229 = vpop.f32.mrf.mxu0
    %v3230 = vadd.f32 %v2877, %v3229
    %v3231 = vpop.f32.mrf.mxu0
    %v3232 = vadd.f32 %v2879, %v3231
    %v3233 = vpop.f32.mrf.mxu0
    %v3234 = vadd.f32 %v2881, %v3233
    %v3235 = vpop.f32.mrf.mxu0
    %v3236 = vadd.f32 %v2883, %v3235
    %3237 = vmatprep.mubr.bf16.mxu0 %v831
    %3238 = vmatmul.mubr.bf16.gmra.mxu0 %v830
    %v3239 = vpop.f32.mrf.mxu0
    %v3240 = vadd.f32 %v2887, %v3239
    %v3241 = vpop.f32.mrf.mxu0
    %v3242 = vadd.f32 %v2889, %v3241
    %v3243 = vpop.f32.mrf.mxu0
    %v3244 = vadd.f32 %v2891, %v3243
    %v3245 = vpop.f32.mrf.mxu0
    %v3246 = vadd.f32 %v2893, %v3245
    %3247 = vmatprep.mubr.bf16.mxu0 %v835
    %3248 = vmatmul.mubr.bf16.gmra.mxu0 %v834
    %v3249 = vpop.f32.mrf.mxu0
    %v3250 = vadd.f32 %v2897, %v3249
    %v3251 = vpop.f32.mrf.mxu0
    %v3252 = vadd.f32 %v2899, %v3251
    %v3253 = vpop.f32.mrf.mxu0
    %v3254 = vadd.f32 %v2901, %v3253
    %v3255 = vpop.f32.mrf.mxu0
    %v3256 = vadd.f32 %v2903, %v3255
    %3257 = vmatprep.mubr.bf16.mxu0 %v839
    %3258 = vmatmul.mubr.bf16.gmra.mxu0 %v838
    %v3259 = vpop.f32.mrf.mxu0
    %v3260 = vadd.f32 %v2907, %v3259
    %v3261 = vpop.f32.mrf.mxu0
    %v3262 = vadd.f32 %v2909, %v3261
    %v3263 = vpop.f32.mrf.mxu0
    %v3264 = vadd.f32 %v2911, %v3263
    %v3265 = vpop.f32.mrf.mxu0
    %v3266 = vadd.f32 %v2913, %v3265
    %3267 = vmatprep.mubr.bf16.mxu0 %v843
    %3268 = vmatmul.mubr.bf16.gmra.mxu0 %v842
    %v3269 = vpop.f32.mrf.mxu0
    %v3270 = vadd.f32 %v2917, %v3269
    %v3271 = vpop.f32.mrf.mxu0
    %v3272 = vadd.f32 %v2919, %v3271
    %v3273 = vpop.f32.mrf.mxu0
    %v3274 = vadd.f32 %v2921, %v3273
    %v3275 = vpop.f32.mrf.mxu0
    %v3276 = vadd.f32 %v2923, %v3275
    %3277 = vmatprep.mubr.bf16.mxu0 %v847
    %3278 = vmatmul.mubr.bf16.gmra.mxu0 %v846
    %v3279 = vpop.f32.mrf.mxu0
    %v3280 = vadd.f32 %v2927, %v3279
    %v3281 = vpop.f32.mrf.mxu0
    %v3282 = vadd.f32 %v2929, %v3281
    %v3283 = vpop.f32.mrf.mxu0
    %v3284 = vadd.f32 %v2931, %v3283
    %v3285 = vpop.f32.mrf.mxu0
    %v3286 = vadd.f32 %v2933, %v3285
    %3287 = vmatprep.mubr.bf16.mxu0 %v851
    %3288 = vmatmul.mubr.bf16.gmra.mxu0 %v850
    %v3289 = vpop.f32.mrf.mxu0
    %v3290 = vadd.f32 %v2937, %v3289
    %v3291 = vpop.f32.mrf.mxu0
    %v3292 = vadd.f32 %v2939, %v3291
    %v3293 = vpop.f32.mrf.mxu0
    %v3294 = vadd.f32 %v2941, %v3293
    %v3295 = vpop.f32.mrf.mxu0
    %v3296 = vadd.f32 %v2943, %v3295
    %3297 = vmatprep.mubr.bf16.mxu0 %v855
    %3298 = vmatmul.mubr.bf16.gmra.mxu0 %v854
    %v3299 = vpop.f32.mrf.mxu0
    %v3300 = vadd.f32 %v2947, %v3299
    %v3301 = vpop.f32.mrf.mxu0
    %v3302 = vadd.f32 %v2949, %v3301
    %v3303 = vpop.f32.mrf.mxu0
    %v3304 = vadd.f32 %v2951, %v3303
    %v3305 = vpop.f32.mrf.mxu0
    %v3306 = vadd.f32 %v2953, %v3305
    %3307 = vmatprep.mubr.bf16.mxu0 %v859
    %3308 = vmatmul.mubr.bf16.gmra.mxu0 %v858
    %v3309 = vpop.f32.mrf.mxu0
    %v3310 = vadd.f32 %v2957, %v3309
    %v3311 = vpop.f32.mrf.mxu0
    %v3312 = vadd.f32 %v2959, %v3311
    %v3313 = vpop.f32.mrf.mxu0
    %v3314 = vadd.f32 %v2961, %v3313
    %v3315 = vpop.f32.mrf.mxu0
    %v3316 = vadd.f32 %v2963, %v3315
    %3317 = vmatprep.mubr.bf16.mxu0 %v863
    %3318 = vmatmul.mubr.bf16.gmra.mxu0 %v862
    %v3319 = vpop.f32.mrf.mxu0
    %v3320 = vadd.f32 %v2967, %v3319
    %v3321 = vpop.f32.mrf.mxu0
    %v3322 = vadd.f32 %v2969, %v3321
    %v3323 = vpop.f32.mrf.mxu0
    %v3324 = vadd.f32 %v2971, %v3323
    %v3325 = vpop.f32.mrf.mxu0
    %v3326 = vadd.f32 %v2973, %v3325
    %3327 = vmatprep.mubr.bf16.mxu0 %v867
    %3328 = vmatmul.mubr.bf16.gmra.mxu0 %v866
    %v3329 = vpop.f32.mrf.mxu0
    %v3330 = vadd.f32 %v2977, %v3329
    %v3331 = vpop.f32.mrf.mxu0
    %v3332 = vadd.f32 %v2979, %v3331
    %v3333 = vpop.f32.mrf.mxu0
    %v3334 = vadd.f32 %v2981, %v3333
    %v3335 = vpop.f32.mrf.mxu0
    %v3336 = vadd.f32 %v2983, %v3335
    %3337 = vmatprep.mubr.bf16.mxu0 %v871
    %3338 = vmatmul.mubr.bf16.gmra.mxu0 %v870
    %v3339 = vpop.f32.mrf.mxu0
    %v3340 = vadd.f32 %v2987, %v3339
    %v3341 = vpop.f32.mrf.mxu0
    %v3342 = vadd.f32 %v2989, %v3341
    %v3343 = vpop.f32.mrf.mxu0
    %v3344 = vadd.f32 %v2991, %v3343
    %v3345 = vpop.f32.mrf.mxu0
    %v3346 = vadd.f32 %v2993, %v3345
    %3347 = vmatprep.mubr.bf16.mxu0 %v875
    %3348 = vmatmul.mubr.bf16.gmra.mxu0 %v874
    %v3349 = vpop.f32.mrf.mxu0
    %v3350 = vadd.f32 %v2997, %v3349
    %v3351 = vpop.f32.mrf.mxu0
    %v3352 = vadd.f32 %v2999, %v3351
    %v3353 = vpop.f32.mrf.mxu0
    %v3354 = vadd.f32 %v3001, %v3353
    %v3355 = vpop.f32.mrf.mxu0
    %v3356 = vadd.f32 %v3003, %v3355
    %3357 = vmatprep.mubr.bf16.mxu0 %v879
    %3358 = vmatmul.mubr.bf16.gmra.mxu0 %v878
    %v3359 = vpop.f32.mrf.mxu0
    %v3360 = vadd.f32 %v3007, %v3359
    %v3361 = vpop.f32.mrf.mxu0
    %v3362 = vadd.f32 %v3009, %v3361
    %v3363 = vpop.f32.mrf.mxu0
    %v3364 = vadd.f32 %v3011, %v3363
    %v3365 = vpop.f32.mrf.mxu0
    %v3366 = vadd.f32 %v3013, %v3365
    %3367 = vmatprep.mubr.bf16.mxu0 %v883
    %3368 = vmatmul.mubr.bf16.gmra.mxu0 %v882
    %v3369 = vpop.f32.mrf.mxu0
    %v3370 = vadd.f32 %v3017, %v3369
    %v3371 = vpop.f32.mrf.mxu0
    %v3372 = vadd.f32 %v3019, %v3371
    %v3373 = vpop.f32.mrf.mxu0
    %v3374 = vadd.f32 %v3021, %v3373
    %v3375 = vpop.f32.mrf.mxu0
    %v3376 = vadd.f32 %v3023, %v3375
    %3377 = vmatprep.mubr.bf16.mxu0 %v887
    %3378 = vmatmul.mubr.bf16.gmra.mxu0 %v886
    %v3379 = vpop.f32.mrf.mxu0
    %v3380 = vadd.f32 %v3027, %v3379
    %v3381 = vpop.f32.mrf.mxu0
    %v3382 = vadd.f32 %v3029, %v3381
    %v3383 = vpop.f32.mrf.mxu0
    %v3384 = vadd.f32 %v3031, %v3383
    %v3385 = vpop.f32.mrf.mxu0
    %v3386 = vadd.f32 %v3033, %v3385
    %3387 = vdwg.mxu0
    %3388 = vmatprep.subr.bf16.mxu0 %v1639
    %3389 = vmatpush1.bf16.msra.mxu0 %v1638
    %3390 = vmatprep.subr.bf16.mxu0 %v1633
    %3391 = vmatpush1.bf16.msra.mxu0 %v1632
    %3392 = vmatprep.subr.bf16.mxu0 %v1627
    %3393 = vmatpush1.bf16.msra.mxu0 %v1626
    %3394 = vmatprep.subr.bf16.mxu0 %v1621
    %3395 = vmatpush1.bf16.msra.mxu0 %v1620
    %3396 = vmatprep.subr.bf16.mxu0 %v1615
    %3397 = vmatpush1.bf16.msra.mxu0 %v1614
    %3398 = vmatprep.subr.bf16.mxu0 %v1609
    %3399 = vmatpush1.bf16.msra.mxu0 %v1608
    %3400 = vmatprep.subr.bf16.mxu0 %v1603
    %3401 = vmatpush1.bf16.msra.mxu0 %v1602
    %3402 = vmatprep.subr.bf16.mxu0 %v1597
    %3403 = vmatpush1.bf16.msra.mxu0 %v1596
    %3404 = vmatprep.subr.bf16.mxu0 %v1687
    %3405 = vmatpush2.bf16.msra.mxu0 %v1686
    %3406 = vmatprep.subr.bf16.mxu0 %v1681
    %3407 = vmatpush2.bf16.msra.mxu0 %v1680
    %3408 = vmatprep.subr.bf16.mxu0 %v1675
    %3409 = vmatpush2.bf16.msra.mxu0 %v1674
    %3410 = vmatprep.subr.bf16.mxu0 %v1669
    %3411 = vmatpush2.bf16.msra.mxu0 %v1668
    %3412 = vmatprep.subr.bf16.mxu0 %v1663
    %3413 = vmatpush2.bf16.msra.mxu0 %v1662
    %3414 = vmatprep.subr.bf16.mxu0 %v1657
    %3415 = vmatpush2.bf16.msra.mxu0 %v1656
    %3416 = vmatprep.subr.bf16.mxu0 %v1651
    %3417 = vmatpush2.bf16.msra.mxu0 %v1650
    %3418 = vmatprep.subr.bf16.mxu0 %v1645
    %3419 = vmatpush2.bf16.msra.mxu0 %v1644
    %3420 = vmatprep.mubr.bf16.mxu0 %v761
    %3421 = vmatmul.mubr.bf16.gmra.mxu0 %v760
    %v3422 = vpop.f32.mrf.mxu0
    %v3423 = vadd.f32 0.0, %v3422
    %v3424 = vpop.f32.mrf.mxu0
    %v3425 = vadd.f32 0.0, %v3424
    %v3426 = vpop.f32.mrf.mxu0
    %v3427 = vadd.f32 0.0, %v3426
    %v3428 = vpop.f32.mrf.mxu0
    %v3429 = vadd.f32 0.0, %v3428
    %3430 = vmatprep.mubr.bf16.mxu0 %v765
    %3431 = vmatmul.mubr.bf16.gmra.mxu0 %v764
    %v3432 = vpop.f32.mrf.mxu0
    %v3433 = vadd.f32 0.0, %v3432
    %v3434 = vpop.f32.mrf.mxu0
    %v3435 = vadd.f32 0.0, %v3434
    %v3436 = vpop.f32.mrf.mxu0
    %v3437 = vadd.f32 0.0, %v3436
    %v3438 = vpop.f32.mrf.mxu0
    %v3439 = vadd.f32 0.0, %v3438
    %3440 = vmatprep.mubr.bf16.mxu0 %v769
    %3441 = vmatmul.mubr.bf16.gmra.mxu0 %v768
    %v3442 = vpop.f32.mrf.mxu0
    %v3443 = vadd.f32 0.0, %v3442
    %v3444 = vpop.f32.mrf.mxu0
    %v3445 = vadd.f32 0.0, %v3444
    %v3446 = vpop.f32.mrf.mxu0
    %v3447 = vadd.f32 0.0, %v3446
    %v3448 = vpop.f32.mrf.mxu0
    %v3449 = vadd.f32 0.0, %v3448
    %3450 = vmatprep.mubr.bf16.mxu0 %v773
    %3451 = vmatmul.mubr.bf16.gmra.mxu0 %v772
    %v3452 = vpop.f32.mrf.mxu0
    %v3453 = vadd.f32 0.0, %v3452
    %v3454 = vpop.f32.mrf.mxu0
    %v3455 = vadd.f32 0.0, %v3454
    %v3456 = vpop.f32.mrf.mxu0
    %v3457 = vadd.f32 0.0, %v3456
    %v3458 = vpop.f32.mrf.mxu0
    %v3459 = vadd.f32 0.0, %v3458
    %3460 = vmatprep.mubr.bf16.mxu0 %v777
    %3461 = vmatmul.mubr.bf16.gmra.mxu0 %v776
    %v3462 = vpop.f32.mrf.mxu0
    %v3463 = vadd.f32 0.0, %v3462
    %v3464 = vpop.f32.mrf.mxu0
    %v3465 = vadd.f32 0.0, %v3464
    %v3466 = vpop.f32.mrf.mxu0
    %v3467 = vadd.f32 0.0, %v3466
    %v3468 = vpop.f32.mrf.mxu0
    %v3469 = vadd.f32 0.0, %v3468
    %3470 = vmatprep.mubr.bf16.mxu0 %v781
    %3471 = vmatmul.mubr.bf16.gmra.mxu0 %v780
    %v3472 = vpop.f32.mrf.mxu0
    %v3473 = vadd.f32 0.0, %v3472
    %v3474 = vpop.f32.mrf.mxu0
    %v3475 = vadd.f32 0.0, %v3474
    %v3476 = vpop.f32.mrf.mxu0
    %v3477 = vadd.f32 0.0, %v3476
    %v3478 = vpop.f32.mrf.mxu0
    %v3479 = vadd.f32 0.0, %v3478
    %3480 = vmatprep.mubr.bf16.mxu0 %v785
    %3481 = vmatmul.mubr.bf16.gmra.mxu0 %v784
    %v3482 = vpop.f32.mrf.mxu0
    %v3483 = vadd.f32 0.0, %v3482
    %v3484 = vpop.f32.mrf.mxu0
    %v3485 = vadd.f32 0.0, %v3484
    %v3486 = vpop.f32.mrf.mxu0
    %v3487 = vadd.f32 0.0, %v3486
    %v3488 = vpop.f32.mrf.mxu0
    %v3489 = vadd.f32 0.0, %v3488
    %3490 = vmatprep.mubr.bf16.mxu0 %v789
    %3491 = vmatmul.mubr.bf16.gmra.mxu0 %v788
    %v3492 = vpop.f32.mrf.mxu0
    %v3493 = vadd.f32 0.0, %v3492
    %v3494 = vpop.f32.mrf.mxu0
    %v3495 = vadd.f32 0.0, %v3494
    %v3496 = vpop.f32.mrf.mxu0
    %v3497 = vadd.f32 0.0, %v3496
    %v3498 = vpop.f32.mrf.mxu0
    %v3499 = vadd.f32 0.0, %v3498
    %3500 = vmatprep.mubr.bf16.mxu0 %v793
    %3501 = vmatmul.mubr.bf16.gmra.mxu0 %v792
    %v3502 = vpop.f32.mrf.mxu0
    %v3503 = vadd.f32 0.0, %v3502
    %v3504 = vpop.f32.mrf.mxu0
    %v3505 = vadd.f32 0.0, %v3504
    %v3506 = vpop.f32.mrf.mxu0
    %v3507 = vadd.f32 0.0, %v3506
    %v3508 = vpop.f32.mrf.mxu0
    %v3509 = vadd.f32 0.0, %v3508
    %3510 = vmatprep.mubr.bf16.mxu0 %v797
    %3511 = vmatmul.mubr.bf16.gmra.mxu0 %v796
    %v3512 = vpop.f32.mrf.mxu0
    %v3513 = vadd.f32 0.0, %v3512
    %v3514 = vpop.f32.mrf.mxu0
    %v3515 = vadd.f32 0.0, %v3514
    %v3516 = vpop.f32.mrf.mxu0
    %v3517 = vadd.f32 0.0, %v3516
    %v3518 = vpop.f32.mrf.mxu0
    %v3519 = vadd.f32 0.0, %v3518
    %3520 = vmatprep.mubr.bf16.mxu0 %v801
    %3521 = vmatmul.mubr.bf16.gmra.mxu0 %v800
    %v3522 = vpop.f32.mrf.mxu0
    %v3523 = vadd.f32 0.0, %v3522
    %v3524 = vpop.f32.mrf.mxu0
    %v3525 = vadd.f32 0.0, %v3524
    %v3526 = vpop.f32.mrf.mxu0
    %v3527 = vadd.f32 0.0, %v3526
    %v3528 = vpop.f32.mrf.mxu0
    %v3529 = vadd.f32 0.0, %v3528
    %3530 = vmatprep.mubr.bf16.mxu0 %v805
    %3531 = vmatmul.mubr.bf16.gmra.mxu0 %v804
    %v3532 = vpop.f32.mrf.mxu0
    %v3533 = vadd.f32 0.0, %v3532
    %v3534 = vpop.f32.mrf.mxu0
    %v3535 = vadd.f32 0.0, %v3534
    %v3536 = vpop.f32.mrf.mxu0
    %v3537 = vadd.f32 0.0, %v3536
    %v3538 = vpop.f32.mrf.mxu0
    %v3539 = vadd.f32 0.0, %v3538
    %3540 = vmatprep.mubr.bf16.mxu0 %v809
    %3541 = vmatmul.mubr.bf16.gmra.mxu0 %v808
    %v3542 = vpop.f32.mrf.mxu0
    %v3543 = vadd.f32 0.0, %v3542
    %v3544 = vpop.f32.mrf.mxu0
    %v3545 = vadd.f32 0.0, %v3544
    %v3546 = vpop.f32.mrf.mxu0
    %v3547 = vadd.f32 0.0, %v3546
    %v3548 = vpop.f32.mrf.mxu0
    %v3549 = vadd.f32 0.0, %v3548
    %3550 = vmatprep.mubr.bf16.mxu0 %v813
    %3551 = vmatmul.mubr.bf16.gmra.mxu0 %v812
    %v3552 = vpop.f32.mrf.mxu0
    %v3553 = vadd.f32 0.0, %v3552
    %v3554 = vpop.f32.mrf.mxu0
    %v3555 = vadd.f32 0.0, %v3554
    %v3556 = vpop.f32.mrf.mxu0
    %v3557 = vadd.f32 0.0, %v3556
    %v3558 = vpop.f32.mrf.mxu0
    %v3559 = vadd.f32 0.0, %v3558
    %3560 = vmatprep.mubr.bf16.mxu0 %v817
    %3561 = vmatmul.mubr.bf16.gmra.mxu0 %v816
    %v3562 = vpop.f32.mrf.mxu0
    %v3563 = vadd.f32 0.0, %v3562
    %v3564 = vpop.f32.mrf.mxu0
    %v3565 = vadd.f32 0.0, %v3564
    %v3566 = vpop.f32.mrf.mxu0
    %v3567 = vadd.f32 0.0, %v3566
    %v3568 = vpop.f32.mrf.mxu0
    %v3569 = vadd.f32 0.0, %v3568
    %3570 = vmatprep.mubr.bf16.mxu0 %v821
    %3571 = vmatmul.mubr.bf16.gmra.mxu0 %v820
    %v3572 = vpop.f32.mrf.mxu0
    %v3573 = vadd.f32 0.0, %v3572
    %v3574 = vpop.f32.mrf.mxu0
    %v3575 = vadd.f32 0.0, %v3574
    %v3576 = vpop.f32.mrf.mxu0
    %v3577 = vadd.f32 0.0, %v3576
    %v3578 = vpop.f32.mrf.mxu0
    %v3579 = vadd.f32 0.0, %v3578
    %3580 = vmatprep.mubr.bf16.mxu0 %v825
    %3581 = vmatmul.mubr.bf16.gmra.mxu0 %v824
    %v3582 = vpop.f32.mrf.mxu0
    %v3583 = vadd.f32 0.0, %v3582
    %v3584 = vpop.f32.mrf.mxu0
    %v3585 = vadd.f32 0.0, %v3584
    %v3586 = vpop.f32.mrf.mxu0
    %v3587 = vadd.f32 0.0, %v3586
    %v3588 = vpop.f32.mrf.mxu0
    %v3589 = vadd.f32 0.0, %v3588
    %3590 = vmatprep.mubr.bf16.mxu0 %v829
    %3591 = vmatmul.mubr.bf16.gmra.mxu0 %v828
    %v3592 = vpop.f32.mrf.mxu0
    %v3593 = vadd.f32 0.0, %v3592
    %v3594 = vpop.f32.mrf.mxu0
    %v3595 = vadd.f32 0.0, %v3594
    %v3596 = vpop.f32.mrf.mxu0
    %v3597 = vadd.f32 0.0, %v3596
    %v3598 = vpop.f32.mrf.mxu0
    %v3599 = vadd.f32 0.0, %v3598
    %3600 = vmatprep.mubr.bf16.mxu0 %v833
    %3601 = vmatmul.mubr.bf16.gmra.mxu0 %v832
    %v3602 = vpop.f32.mrf.mxu0
    %v3603 = vadd.f32 0.0, %v3602
    %v3604 = vpop.f32.mrf.mxu0
    %v3605 = vadd.f32 0.0, %v3604
    %v3606 = vpop.f32.mrf.mxu0
    %v3607 = vadd.f32 0.0, %v3606
    %v3608 = vpop.f32.mrf.mxu0
    %v3609 = vadd.f32 0.0, %v3608
    %3610 = vmatprep.mubr.bf16.mxu0 %v837
    %3611 = vmatmul.mubr.bf16.gmra.mxu0 %v836
    %v3612 = vpop.f32.mrf.mxu0
    %v3613 = vadd.f32 0.0, %v3612
    %v3614 = vpop.f32.mrf.mxu0
    %v3615 = vadd.f32 0.0, %v3614
    %v3616 = vpop.f32.mrf.mxu0
    %v3617 = vadd.f32 0.0, %v3616
    %v3618 = vpop.f32.mrf.mxu0
    %v3619 = vadd.f32 0.0, %v3618
    %3620 = vmatprep.mubr.bf16.mxu0 %v841
    %3621 = vmatmul.mubr.bf16.gmra.mxu0 %v840
    %v3622 = vpop.f32.mrf.mxu0
    %v3623 = vadd.f32 0.0, %v3622
    %v3624 = vpop.f32.mrf.mxu0
    %v3625 = vadd.f32 0.0, %v3624
    %v3626 = vpop.f32.mrf.mxu0
    %v3627 = vadd.f32 0.0, %v3626
    %v3628 = vpop.f32.mrf.mxu0
    %v3629 = vadd.f32 0.0, %v3628
    %3630 = vmatprep.mubr.bf16.mxu0 %v845
    %3631 = vmatmul.mubr.bf16.gmra.mxu0 %v844
    %v3632 = vpop.f32.mrf.mxu0
    %v3633 = vadd.f32 0.0, %v3632
    %v3634 = vpop.f32.mrf.mxu0
    %v3635 = vadd.f32 0.0, %v3634
    %v3636 = vpop.f32.mrf.mxu0
    %v3637 = vadd.f32 0.0, %v3636
    %v3638 = vpop.f32.mrf.mxu0
    %v3639 = vadd.f32 0.0, %v3638
    %3640 = vmatprep.mubr.bf16.mxu0 %v849
    %3641 = vmatmul.mubr.bf16.gmra.mxu0 %v848
    %v3642 = vpop.f32.mrf.mxu0
    %v3643 = vadd.f32 0.0, %v3642
    %v3644 = vpop.f32.mrf.mxu0
    %v3645 = vadd.f32 0.0, %v3644
    %v3646 = vpop.f32.mrf.mxu0
    %v3647 = vadd.f32 0.0, %v3646
    %v3648 = vpop.f32.mrf.mxu0
    %v3649 = vadd.f32 0.0, %v3648
    %3650 = vmatprep.mubr.bf16.mxu0 %v853
    %3651 = vmatmul.mubr.bf16.gmra.mxu0 %v852
    %v3652 = vpop.f32.mrf.mxu0
    %v3653 = vadd.f32 0.0, %v3652
    %v3654 = vpop.f32.mrf.mxu0
    %v3655 = vadd.f32 0.0, %v3654
    %v3656 = vpop.f32.mrf.mxu0
    %v3657 = vadd.f32 0.0, %v3656
    %v3658 = vpop.f32.mrf.mxu0
    %v3659 = vadd.f32 0.0, %v3658
    %3660 = vmatprep.mubr.bf16.mxu0 %v857
    %3661 = vmatmul.mubr.bf16.gmra.mxu0 %v856
    %v3662 = vpop.f32.mrf.mxu0
    %v3663 = vadd.f32 0.0, %v3662
    %v3664 = vpop.f32.mrf.mxu0
    %v3665 = vadd.f32 0.0, %v3664
    %v3666 = vpop.f32.mrf.mxu0
    %v3667 = vadd.f32 0.0, %v3666
    %v3668 = vpop.f32.mrf.mxu0
    %v3669 = vadd.f32 0.0, %v3668
    %3670 = vmatprep.mubr.bf16.mxu0 %v861
    %3671 = vmatmul.mubr.bf16.gmra.mxu0 %v860
    %v3672 = vpop.f32.mrf.mxu0
    %v3673 = vadd.f32 0.0, %v3672
    %v3674 = vpop.f32.mrf.mxu0
    %v3675 = vadd.f32 0.0, %v3674
    %v3676 = vpop.f32.mrf.mxu0
    %v3677 = vadd.f32 0.0, %v3676
    %v3678 = vpop.f32.mrf.mxu0
    %v3679 = vadd.f32 0.0, %v3678
    %3680 = vmatprep.mubr.bf16.mxu0 %v865
    %3681 = vmatmul.mubr.bf16.gmra.mxu0 %v864
    %v3682 = vpop.f32.mrf.mxu0
    %v3683 = vadd.f32 0.0, %v3682
    %v3684 = vpop.f32.mrf.mxu0
    %v3685 = vadd.f32 0.0, %v3684
    %v3686 = vpop.f32.mrf.mxu0
    %v3687 = vadd.f32 0.0, %v3686
    %v3688 = vpop.f32.mrf.mxu0
    %v3689 = vadd.f32 0.0, %v3688
    %3690 = vmatprep.mubr.bf16.mxu0 %v869
    %3691 = vmatmul.mubr.bf16.gmra.mxu0 %v868
    %v3692 = vpop.f32.mrf.mxu0
    %v3693 = vadd.f32 0.0, %v3692
    %v3694 = vpop.f32.mrf.mxu0
    %v3695 = vadd.f32 0.0, %v3694
    %v3696 = vpop.f32.mrf.mxu0
    %v3697 = vadd.f32 0.0, %v3696
    %v3698 = vpop.f32.mrf.mxu0
    %v3699 = vadd.f32 0.0, %v3698
    %3700 = vmatprep.mubr.bf16.mxu0 %v873
    %3701 = vmatmul.mubr.bf16.gmra.mxu0 %v872
    %v3702 = vpop.f32.mrf.mxu0
    %v3703 = vadd.f32 0.0, %v3702
    %v3704 = vpop.f32.mrf.mxu0
    %v3705 = vadd.f32 0.0, %v3704
    %v3706 = vpop.f32.mrf.mxu0
    %v3707 = vadd.f32 0.0, %v3706
    %v3708 = vpop.f32.mrf.mxu0
    %v3709 = vadd.f32 0.0, %v3708
    %3710 = vmatprep.mubr.bf16.mxu0 %v877
    %3711 = vmatmul.mubr.bf16.gmra.mxu0 %v876
    %v3712 = vpop.f32.mrf.mxu0
    %v3713 = vadd.f32 0.0, %v3712
    %v3714 = vpop.f32.mrf.mxu0
    %v3715 = vadd.f32 0.0, %v3714
    %v3716 = vpop.f32.mrf.mxu0
    %v3717 = vadd.f32 0.0, %v3716
    %v3718 = vpop.f32.mrf.mxu0
    %v3719 = vadd.f32 0.0, %v3718
    %3720 = vmatprep.mubr.bf16.mxu0 %v881
    %3721 = vmatmul.mubr.bf16.gmra.mxu0 %v880
    %v3722 = vpop.f32.mrf.mxu0
    %v3723 = vadd.f32 0.0, %v3722
    %v3724 = vpop.f32.mrf.mxu0
    %v3725 = vadd.f32 0.0, %v3724
    %v3726 = vpop.f32.mrf.mxu0
    %v3727 = vadd.f32 0.0, %v3726
    %v3728 = vpop.f32.mrf.mxu0
    %v3729 = vadd.f32 0.0, %v3728
    %3730 = vmatprep.mubr.bf16.mxu0 %v885
    %3731 = vmatmul.mubr.bf16.gmra.mxu0 %v884
    %v3732 = vpop.f32.mrf.mxu0
    %v3733 = vadd.f32 0.0, %v3732
    %v3734 = vpop.f32.mrf.mxu0
    %v3735 = vadd.f32 0.0, %v3734
    %v3736 = vpop.f32.mrf.mxu0
    %v3737 = vadd.f32 0.0, %v3736
    %v3738 = vpop.f32.mrf.mxu0
    %v3739 = vadd.f32 0.0, %v3738
    %3740 = vdwg.mxu0
    %3741 = vmatprep.subr.bf16.mxu0 %v1735
    %3742 = vmatpush1.bf16.msra.mxu0 %v1734
    %3743 = vmatprep.subr.bf16.mxu0 %v1729
    %3744 = vmatpush1.bf16.msra.mxu0 %v1728
    %3745 = vmatprep.subr.bf16.mxu0 %v1723
    %3746 = vmatpush1.bf16.msra.mxu0 %v1722
    %3747 = vmatprep.subr.bf16.mxu0 %v1717
    %3748 = vmatpush1.bf16.msra.mxu0 %v1716
    %3749 = vmatprep.subr.bf16.mxu0 %v1711
    %3750 = vmatpush1.bf16.msra.mxu0 %v1710
    %3751 = vmatprep.subr.bf16.mxu0 %v1705
    %3752 = vmatpush1.bf16.msra.mxu0 %v1704
    %3753 = vmatprep.subr.bf16.mxu0 %v1699
    %3754 = vmatpush1.bf16.msra.mxu0 %v1698
    %3755 = vmatprep.subr.bf16.mxu0 %v1693
    %3756 = vmatpush1.bf16.msra.mxu0 %v1692
    %3757 = vmatprep.subr.bf16.mxu0 %v1783
    %3758 = vmatpush2.bf16.msra.mxu0 %v1782
    %3759 = vmatprep.subr.bf16.mxu0 %v1777
    %3760 = vmatpush2.bf16.msra.mxu0 %v1776
    %3761 = vmatprep.subr.bf16.mxu0 %v1771
    %3762 = vmatpush2.bf16.msra.mxu0 %v1770
    %3763 = vmatprep.subr.bf16.mxu0 %v1765
    %3764 = vmatpush2.bf16.msra.mxu0 %v1764
    %3765 = vmatprep.subr.bf16.mxu0 %v1759
    %3766 = vmatpush2.bf16.msra.mxu0 %v1758
    %3767 = vmatprep.subr.bf16.mxu0 %v1753
    %3768 = vmatpush2.bf16.msra.mxu0 %v1752
    %3769 = vmatprep.subr.bf16.mxu0 %v1747
    %3770 = vmatpush2.bf16.msra.mxu0 %v1746
    %3771 = vmatprep.subr.bf16.mxu0 %v1741
    %3772 = vmatpush2.bf16.msra.mxu0 %v1740
    %3773 = vmatprep.mubr.bf16.mxu0 %v763
    %3774 = vmatmul.mubr.bf16.gmra.mxu0 %v762
    %v3775 = vpop.f32.mrf.mxu0
    %v3776 = vadd.f32 %v3423, %v3775
    %v3777 = vpop.f32.mrf.mxu0
    %v3778 = vadd.f32 %v3425, %v3777
    %v3779 = vpop.f32.mrf.mxu0
    %v3780 = vadd.f32 %v3427, %v3779
    %v3781 = vpop.f32.mrf.mxu0
    %v3782 = vadd.f32 %v3429, %v3781
    %3783 = vmatprep.mubr.bf16.mxu0 %v767
    %3784 = vmatmul.mubr.bf16.gmra.mxu0 %v766
    %v3785 = vpop.f32.mrf.mxu0
    %v3786 = vadd.f32 %v3433, %v3785
    %v3787 = vpop.f32.mrf.mxu0
    %v3788 = vadd.f32 %v3435, %v3787
    %v3789 = vpop.f32.mrf.mxu0
    %v3790 = vadd.f32 %v3437, %v3789
    %v3791 = vpop.f32.mrf.mxu0
    %v3792 = vadd.f32 %v3439, %v3791
    %3793 = vmatprep.mubr.bf16.mxu0 %v771
    %3794 = vmatmul.mubr.bf16.gmra.mxu0 %v770
    %v3795 = vpop.f32.mrf.mxu0
    %v3796 = vadd.f32 %v3443, %v3795
    %v3797 = vpop.f32.mrf.mxu0
    %v3798 = vadd.f32 %v3445, %v3797
    %v3799 = vpop.f32.mrf.mxu0
    %v3800 = vadd.f32 %v3447, %v3799
    %v3801 = vpop.f32.mrf.mxu0
    %v3802 = vadd.f32 %v3449, %v3801
    %3803 = vmatprep.mubr.bf16.mxu0 %v775
    %3804 = vmatmul.mubr.bf16.gmra.mxu0 %v774
    %v3805 = vpop.f32.mrf.mxu0
    %v3806 = vadd.f32 %v3453, %v3805
    %v3807 = vpop.f32.mrf.mxu0
    %v3808 = vadd.f32 %v3455, %v3807
    %v3809 = vpop.f32.mrf.mxu0
    %v3810 = vadd.f32 %v3457, %v3809
    %v3811 = vpop.f32.mrf.mxu0
    %v3812 = vadd.f32 %v3459, %v3811
    %3813 = vmatprep.mubr.bf16.mxu0 %v779
    %3814 = vmatmul.mubr.bf16.gmra.mxu0 %v778
    %v3815 = vpop.f32.mrf.mxu0
    %v3816 = vadd.f32 %v3463, %v3815
    %v3817 = vpop.f32.mrf.mxu0
    %v3818 = vadd.f32 %v3465, %v3817
    %v3819 = vpop.f32.mrf.mxu0
    %v3820 = vadd.f32 %v3467, %v3819
    %v3821 = vpop.f32.mrf.mxu0
    %v3822 = vadd.f32 %v3469, %v3821
    %3823 = vmatprep.mubr.bf16.mxu0 %v783
    %3824 = vmatmul.mubr.bf16.gmra.mxu0 %v782
    %v3825 = vpop.f32.mrf.mxu0
    %v3826 = vadd.f32 %v3473, %v3825
    %v3827 = vpop.f32.mrf.mxu0
    %v3828 = vadd.f32 %v3475, %v3827
    %v3829 = vpop.f32.mrf.mxu0
    %v3830 = vadd.f32 %v3477, %v3829
    %v3831 = vpop.f32.mrf.mxu0
    %v3832 = vadd.f32 %v3479, %v3831
    %3833 = vmatprep.mubr.bf16.mxu0 %v787
    %3834 = vmatmul.mubr.bf16.gmra.mxu0 %v786
    %v3835 = vpop.f32.mrf.mxu0
    %v3836 = vadd.f32 %v3483, %v3835
    %v3837 = vpop.f32.mrf.mxu0
    %v3838 = vadd.f32 %v3485, %v3837
    %v3839 = vpop.f32.mrf.mxu0
    %v3840 = vadd.f32 %v3487, %v3839
    %v3841 = vpop.f32.mrf.mxu0
    %v3842 = vadd.f32 %v3489, %v3841
    %3843 = vmatprep.mubr.bf16.mxu0 %v791
    %3844 = vmatmul.mubr.bf16.gmra.mxu0 %v790
    %v3845 = vpop.f32.mrf.mxu0
    %v3846 = vadd.f32 %v3493, %v3845
    %v3847 = vpop.f32.mrf.mxu0
    %v3848 = vadd.f32 %v3495, %v3847
    %v3849 = vpop.f32.mrf.mxu0
    %v3850 = vadd.f32 %v3497, %v3849
    %v3851 = vpop.f32.mrf.mxu0
    %v3852 = vadd.f32 %v3499, %v3851
    %3853 = vmatprep.mubr.bf16.mxu0 %v795
    %3854 = vmatmul.mubr.bf16.gmra.mxu0 %v794
    %v3855 = vpop.f32.mrf.mxu0
    %v3856 = vadd.f32 %v3503, %v3855
    %v3857 = vpop.f32.mrf.mxu0
    %v3858 = vadd.f32 %v3505, %v3857
    %v3859 = vpop.f32.mrf.mxu0
    %v3860 = vadd.f32 %v3507, %v3859
    %v3861 = vpop.f32.mrf.mxu0
    %v3862 = vadd.f32 %v3509, %v3861
    %3863 = vmatprep.mubr.bf16.mxu0 %v799
    %3864 = vmatmul.mubr.bf16.gmra.mxu0 %v798
    %v3865 = vpop.f32.mrf.mxu0
    %v3866 = vadd.f32 %v3513, %v3865
    %v3867 = vpop.f32.mrf.mxu0
    %v3868 = vadd.f32 %v3515, %v3867
    %v3869 = vpop.f32.mrf.mxu0
    %v3870 = vadd.f32 %v3517, %v3869
    %v3871 = vpop.f32.mrf.mxu0
    %v3872 = vadd.f32 %v3519, %v3871
    %3873 = vmatprep.mubr.bf16.mxu0 %v803
    %3874 = vmatmul.mubr.bf16.gmra.mxu0 %v802
    %v3875 = vpop.f32.mrf.mxu0
    %v3876 = vadd.f32 %v3523, %v3875
    %v3877 = vpop.f32.mrf.mxu0
    %v3878 = vadd.f32 %v3525, %v3877
    %v3879 = vpop.f32.mrf.mxu0
    %v3880 = vadd.f32 %v3527, %v3879
    %v3881 = vpop.f32.mrf.mxu0
    %v3882 = vadd.f32 %v3529, %v3881
    %3883 = vmatprep.mubr.bf16.mxu0 %v807
    %3884 = vmatmul.mubr.bf16.gmra.mxu0 %v806
    %v3885 = vpop.f32.mrf.mxu0
    %v3886 = vadd.f32 %v3533, %v3885
    %v3887 = vpop.f32.mrf.mxu0
    %v3888 = vadd.f32 %v3535, %v3887
    %v3889 = vpop.f32.mrf.mxu0
    %v3890 = vadd.f32 %v3537, %v3889
    %v3891 = vpop.f32.mrf.mxu0
    %v3892 = vadd.f32 %v3539, %v3891
    %3893 = vmatprep.mubr.bf16.mxu0 %v811
    %3894 = vmatmul.mubr.bf16.gmra.mxu0 %v810
    %v3895 = vpop.f32.mrf.mxu0
    %v3896 = vadd.f32 %v3543, %v3895
    %v3897 = vpop.f32.mrf.mxu0
    %v3898 = vadd.f32 %v3545, %v3897
    %v3899 = vpop.f32.mrf.mxu0
    %v3900 = vadd.f32 %v3547, %v3899
    %v3901 = vpop.f32.mrf.mxu0
    %v3902 = vadd.f32 %v3549, %v3901
    %3903 = vmatprep.mubr.bf16.mxu0 %v815
    %3904 = vmatmul.mubr.bf16.gmra.mxu0 %v814
    %v3905 = vpop.f32.mrf.mxu0
    %v3906 = vadd.f32 %v3553, %v3905
    %v3907 = vpop.f32.mrf.mxu0
    %v3908 = vadd.f32 %v3555, %v3907
    %v3909 = vpop.f32.mrf.mxu0
    %v3910 = vadd.f32 %v3557, %v3909
    %v3911 = vpop.f32.mrf.mxu0
    %v3912 = vadd.f32 %v3559, %v3911
    %3913 = vmatprep.mubr.bf16.mxu0 %v819
    %3914 = vmatmul.mubr.bf16.gmra.mxu0 %v818
    %v3915 = vpop.f32.mrf.mxu0
    %v3916 = vadd.f32 %v3563, %v3915
    %v3917 = vpop.f32.mrf.mxu0
    %v3918 = vadd.f32 %v3565, %v3917
    %v3919 = vpop.f32.mrf.mxu0
    %v3920 = vadd.f32 %v3567, %v3919
    %v3921 = vpop.f32.mrf.mxu0
    %v3922 = vadd.f32 %v3569, %v3921
    %3923 = vmatprep.mubr.bf16.mxu0 %v823
    %3924 = vmatmul.mubr.bf16.gmra.mxu0 %v822
    %v3925 = vpop.f32.mrf.mxu0
    %v3926 = vadd.f32 %v3573, %v3925
    %v3927 = vpop.f32.mrf.mxu0
    %v3928 = vadd.f32 %v3575, %v3927
    %v3929 = vpop.f32.mrf.mxu0
    %v3930 = vadd.f32 %v3577, %v3929
    %v3931 = vpop.f32.mrf.mxu0
    %v3932 = vadd.f32 %v3579, %v3931
    %3933 = vmatprep.mubr.bf16.mxu0 %v827
    %3934 = vmatmul.mubr.bf16.gmra.mxu0 %v826
    %v3935 = vpop.f32.mrf.mxu0
    %v3936 = vadd.f32 %v3583, %v3935
    %v3937 = vpop.f32.mrf.mxu0
    %v3938 = vadd.f32 %v3585, %v3937
    %v3939 = vpop.f32.mrf.mxu0
    %v3940 = vadd.f32 %v3587, %v3939
    %v3941 = vpop.f32.mrf.mxu0
    %v3942 = vadd.f32 %v3589, %v3941
    %3943 = vmatprep.mubr.bf16.mxu0 %v831
    %3944 = vmatmul.mubr.bf16.gmra.mxu0 %v830
    %v3945 = vpop.f32.mrf.mxu0
    %v3946 = vadd.f32 %v3593, %v3945
    %v3947 = vpop.f32.mrf.mxu0
    %v3948 = vadd.f32 %v3595, %v3947
    %v3949 = vpop.f32.mrf.mxu0
    %v3950 = vadd.f32 %v3597, %v3949
    %v3951 = vpop.f32.mrf.mxu0
    %v3952 = vadd.f32 %v3599, %v3951
    %3953 = vmatprep.mubr.bf16.mxu0 %v835
    %3954 = vmatmul.mubr.bf16.gmra.mxu0 %v834
    %v3955 = vpop.f32.mrf.mxu0
    %v3956 = vadd.f32 %v3603, %v3955
    %v3957 = vpop.f32.mrf.mxu0
    %v3958 = vadd.f32 %v3605, %v3957
    %v3959 = vpop.f32.mrf.mxu0
    %v3960 = vadd.f32 %v3607, %v3959
    %v3961 = vpop.f32.mrf.mxu0
    %v3962 = vadd.f32 %v3609, %v3961
    %3963 = vmatprep.mubr.bf16.mxu0 %v839
    %3964 = vmatmul.mubr.bf16.gmra.mxu0 %v838
    %v3965 = vpop.f32.mrf.mxu0
    %v3966 = vadd.f32 %v3613, %v3965
    %v3967 = vpop.f32.mrf.mxu0
    %v3968 = vadd.f32 %v3615, %v3967
    %v3969 = vpop.f32.mrf.mxu0
    %v3970 = vadd.f32 %v3617, %v3969
    %v3971 = vpop.f32.mrf.mxu0
    %v3972 = vadd.f32 %v3619, %v3971
    %3973 = vmatprep.mubr.bf16.mxu0 %v843
    %3974 = vmatmul.mubr.bf16.gmra.mxu0 %v842
    %v3975 = vpop.f32.mrf.mxu0
    %v3976 = vadd.f32 %v3623, %v3975
    %v3977 = vpop.f32.mrf.mxu0
    %v3978 = vadd.f32 %v3625, %v3977
    %v3979 = vpop.f32.mrf.mxu0
    %v3980 = vadd.f32 %v3627, %v3979
    %v3981 = vpop.f32.mrf.mxu0
    %v3982 = vadd.f32 %v3629, %v3981
    %3983 = vmatprep.mubr.bf16.mxu0 %v847
    %3984 = vmatmul.mubr.bf16.gmra.mxu0 %v846
    %v3985 = vpop.f32.mrf.mxu0
    %v3986 = vadd.f32 %v3633, %v3985
    %v3987 = vpop.f32.mrf.mxu0
    %v3988 = vadd.f32 %v3635, %v3987
    %v3989 = vpop.f32.mrf.mxu0
    %v3990 = vadd.f32 %v3637, %v3989
    %v3991 = vpop.f32.mrf.mxu0
    %v3992 = vadd.f32 %v3639, %v3991
    %3993 = vmatprep.mubr.bf16.mxu0 %v851
    %3994 = vmatmul.mubr.bf16.gmra.mxu0 %v850
    %v3995 = vpop.f32.mrf.mxu0
    %v3996 = vadd.f32 %v3643, %v3995
    %v3997 = vpop.f32.mrf.mxu0
    %v3998 = vadd.f32 %v3645, %v3997
    %v3999 = vpop.f32.mrf.mxu0
    %v4000 = vadd.f32 %v3647, %v3999
    %v4001 = vpop.f32.mrf.mxu0
    %v4002 = vadd.f32 %v3649, %v4001
    %4003 = vmatprep.mubr.bf16.mxu0 %v855
    %4004 = vmatmul.mubr.bf16.gmra.mxu0 %v854
    %v4005 = vpop.f32.mrf.mxu0
    %v4006 = vadd.f32 %v3653, %v4005
    %v4007 = vpop.f32.mrf.mxu0
    %v4008 = vadd.f32 %v3655, %v4007
    %v4009 = vpop.f32.mrf.mxu0
    %v4010 = vadd.f32 %v3657, %v4009
    %v4011 = vpop.f32.mrf.mxu0
    %v4012 = vadd.f32 %v3659, %v4011
    %4013 = vmatprep.mubr.bf16.mxu0 %v859
    %4014 = vmatmul.mubr.bf16.gmra.mxu0 %v858
    %v4015 = vpop.f32.mrf.mxu0
    %v4016 = vadd.f32 %v3663, %v4015
    %v4017 = vpop.f32.mrf.mxu0
    %v4018 = vadd.f32 %v3665, %v4017
    %v4019 = vpop.f32.mrf.mxu0
    %v4020 = vadd.f32 %v3667, %v4019
    %v4021 = vpop.f32.mrf.mxu0
    %v4022 = vadd.f32 %v3669, %v4021
    %4023 = vmatprep.mubr.bf16.mxu0 %v863
    %4024 = vmatmul.mubr.bf16.gmra.mxu0 %v862
    %v4025 = vpop.f32.mrf.mxu0
    %v4026 = vadd.f32 %v3673, %v4025
    %v4027 = vpop.f32.mrf.mxu0
    %v4028 = vadd.f32 %v3675, %v4027
    %v4029 = vpop.f32.mrf.mxu0
    %v4030 = vadd.f32 %v3677, %v4029
    %v4031 = vpop.f32.mrf.mxu0
    %v4032 = vadd.f32 %v3679, %v4031
    %4033 = vmatprep.mubr.bf16.mxu0 %v867
    %4034 = vmatmul.mubr.bf16.gmra.mxu0 %v866
    %v4035 = vpop.f32.mrf.mxu0
    %v4036 = vadd.f32 %v3683, %v4035
    %v4037 = vpop.f32.mrf.mxu0
    %v4038 = vadd.f32 %v3685, %v4037
    %v4039 = vpop.f32.mrf.mxu0
    %v4040 = vadd.f32 %v3687, %v4039
    %v4041 = vpop.f32.mrf.mxu0
    %v4042 = vadd.f32 %v3689, %v4041
    %4043 = vmatprep.mubr.bf16.mxu0 %v871
    %4044 = vmatmul.mubr.bf16.gmra.mxu0 %v870
    %v4045 = vpop.f32.mrf.mxu0
    %v4046 = vadd.f32 %v3693, %v4045
    %v4047 = vpop.f32.mrf.mxu0
    %v4048 = vadd.f32 %v3695, %v4047
    %v4049 = vpop.f32.mrf.mxu0
    %v4050 = vadd.f32 %v3697, %v4049
    %v4051 = vpop.f32.mrf.mxu0
    %v4052 = vadd.f32 %v3699, %v4051
    %4053 = vmatprep.mubr.bf16.mxu0 %v875
    %4054 = vmatmul.mubr.bf16.gmra.mxu0 %v874
    %v4055 = vpop.f32.mrf.mxu0
    %v4056 = vadd.f32 %v3703, %v4055
    %v4057 = vpop.f32.mrf.mxu0
    %v4058 = vadd.f32 %v3705, %v4057
    %v4059 = vpop.f32.mrf.mxu0
    %v4060 = vadd.f32 %v3707, %v4059
    %v4061 = vpop.f32.mrf.mxu0
    %v4062 = vadd.f32 %v3709, %v4061
    %4063 = vmatprep.mubr.bf16.mxu0 %v879
    %4064 = vmatmul.mubr.bf16.gmra.mxu0 %v878
    %v4065 = vpop.f32.mrf.mxu0
    %v4066 = vadd.f32 %v3713, %v4065
    %v4067 = vpop.f32.mrf.mxu0
    %v4068 = vadd.f32 %v3715, %v4067
    %v4069 = vpop.f32.mrf.mxu0
    %v4070 = vadd.f32 %v3717, %v4069
    %v4071 = vpop.f32.mrf.mxu0
    %v4072 = vadd.f32 %v3719, %v4071
    %4073 = vmatprep.mubr.bf16.mxu0 %v883
    %4074 = vmatmul.mubr.bf16.gmra.mxu0 %v882
    %v4075 = vpop.f32.mrf.mxu0
    %v4076 = vadd.f32 %v3723, %v4075
    %v4077 = vpop.f32.mrf.mxu0
    %v4078 = vadd.f32 %v3725, %v4077
    %v4079 = vpop.f32.mrf.mxu0
    %v4080 = vadd.f32 %v3727, %v4079
    %v4081 = vpop.f32.mrf.mxu0
    %v4082 = vadd.f32 %v3729, %v4081
    %4083 = vmatprep.mubr.bf16.mxu0 %v887
    %4084 = vmatmul.mubr.bf16.gmra.mxu0 %v886
    %v4085 = vpop.f32.mrf.mxu0
    %v4086 = vadd.f32 %v3733, %v4085
    %v4087 = vpop.f32.mrf.mxu0
    %v4088 = vadd.f32 %v3735, %v4087
    %v4089 = vpop.f32.mrf.mxu0
    %v4090 = vadd.f32 %v3737, %v4089
    %v4091 = vpop.f32.mrf.mxu0
    %v4092 = vadd.f32 %v3739, %v4091
    %4093 = vdwg.mxu0
    %v4094 = vmul.f32 %v2364, %v2364
    %v4095 = vmul.f32 %v2366, %v2366
    %v4096 = vmul.f32 %v3070, %v3070
    %v4097 = vmul.f32 %v2368, %v2368
    %v4098 = vmul.f32 %v2370, %v2370
    %v4099 = vmul.f32 %v3074, %v3074
    %v4100 = vmul.f32 %v2374, %v2374
    %v4101 = vmul.f32 %v2376, %v2376
    %v4102 = vmul.f32 %v3080, %v3080
    %v4103 = vmul.f32 %v2378, %v2378
    %v4104 = vmul.f32 %v2380, %v2380
    %v4105 = vmul.f32 %v3084, %v3084
    %v4106 = vmul.f32 %v2384, %v2384
    %v4107 = vmul.f32 %v2386, %v2386
    %v4108 = vmul.f32 %v3090, %v3090
    %v4109 = vmul.f32 %v2388, %v2388
    %v4110 = vmul.f32 %v2390, %v2390
    %v4111 = vmul.f32 %v3094, %v3094
    %v4112 = vmul.f32 %v2394, %v2394
    %v4113 = vmul.f32 %v2396, %v2396
    %v4114 = vmul.f32 %v3100, %v3100
    %v4115 = vmul.f32 %v2398, %v2398
    %v4116 = vmul.f32 %v2400, %v2400
    %v4117 = vmul.f32 %v3104, %v3104
    %v4118 = vmul.f32 %v2404, %v2404
    %v4119 = vmul.f32 %v2406, %v2406
    %v4120 = vmul.f32 %v3110, %v3110
    %v4121 = vmul.f32 %v2408, %v2408
    %v4122 = vmul.f32 %v2410, %v2410
    %v4123 = vmul.f32 %v3114, %v3114
    %v4124 = vmul.f32 %v2414, %v2414
    %v4125 = vmul.f32 %v2416, %v2416
    %v4126 = vmul.f32 %v3120, %v3120
    %v4127 = vmul.f32 %v2418, %v2418
    %v4128 = vmul.f32 %v2420, %v2420
    %v4129 = vmul.f32 %v3124, %v3124
    %v4130 = vmul.f32 %v2424, %v2424
    %v4131 = vmul.f32 %v2426, %v2426
    %v4132 = vmul.f32 %v3130, %v3130
    %v4133 = vmul.f32 %v2428, %v2428
    %v4134 = vmul.f32 %v2430, %v2430
    %v4135 = vmul.f32 %v3134, %v3134
    %v4136 = vmul.f32 %v2434, %v2434
    %v4137 = vmul.f32 %v2436, %v2436
    %v4138 = vmul.f32 %v3140, %v3140
    %v4139 = vmul.f32 %v2438, %v2438
    %v4140 = vmul.f32 %v2440, %v2440
    %v4141 = vmul.f32 %v3144, %v3144
    %v4142 = vmul.f32 %v2444, %v2444
    %v4143 = vmul.f32 %v2446, %v2446
    %v4144 = vmul.f32 %v3150, %v3150
    %v4145 = vmul.f32 %v2448, %v2448
    %v4146 = vmul.f32 %v2450, %v2450
    %v4147 = vmul.f32 %v3154, %v3154
    %v4148 = vmul.f32 %v2454, %v2454
    %v4149 = vmul.f32 %v2456, %v2456
    %v4150 = vmul.f32 %v3160, %v3160
    %v4151 = vmul.f32 %v2458, %v2458
    %v4152 = vmul.f32 %v2460, %v2460
    %v4153 = vmul.f32 %v3164, %v3164
    %v4154 = vmul.f32 %v2464, %v2464
    %v4155 = vmul.f32 %v2466, %v2466
    %v4156 = vmul.f32 %v3170, %v3170
    %v4157 = vmul.f32 %v2468, %v2468
    %v4158 = vmul.f32 %v2470, %v2470
    %v4159 = vmul.f32 %v3174, %v3174
    %v4160 = vmul.f32 %v2474, %v2474
    %v4161 = vmul.f32 %v2476, %v2476
    %v4162 = vmul.f32 %v3180, %v3180
    %v4163 = vmul.f32 %v2478, %v2478
    %v4164 = vmul.f32 %v2480, %v2480
    %v4165 = vmul.f32 %v3184, %v3184
    %v4166 = vmul.f32 %v2484, %v2484
    %v4167 = vmul.f32 %v2486, %v2486
    %v4168 = vmul.f32 %v3190, %v3190
    %v4169 = vmul.f32 %v2488, %v2488
    %v4170 = vmul.f32 %v2490, %v2490
    %v4171 = vmul.f32 %v3194, %v3194
    %v4172 = vmul.f32 %v2494, %v2494
    %v4173 = vmul.f32 %v2496, %v2496
    %v4174 = vmul.f32 %v3200, %v3200
    %v4175 = vmul.f32 %v2498, %v2498
    %v4176 = vmul.f32 %v2500, %v2500
    %v4177 = vmul.f32 %v3204, %v3204
    %v4178 = vmul.f32 %v2504, %v2504
    %v4179 = vmul.f32 %v2506, %v2506
    %v4180 = vmul.f32 %v3210, %v3210
    %v4181 = vmul.f32 %v2508, %v2508
    %v4182 = vmul.f32 %v2510, %v2510
    %v4183 = vmul.f32 %v3214, %v3214
    %v4184 = vmul.f32 %v2514, %v2514
    %v4185 = vmul.f32 %v2516, %v2516
    %v4186 = vmul.f32 %v3220, %v3220
    %v4187 = vmul.f32 %v2518, %v2518
    %v4188 = vmul.f32 %v2520, %v2520
    %v4189 = vmul.f32 %v3224, %v3224
    %v4190 = vmul.f32 %v2524, %v2524
    %v4191 = vmul.f32 %v2526, %v2526
    %v4192 = vmul.f32 %v3230, %v3230
    %v4193 = vmul.f32 %v2528, %v2528
    %v4194 = vmul.f32 %v2530, %v2530
    %v4195 = vmul.f32 %v3234, %v3234
    %v4196 = vmul.f32 %v2534, %v2534
    %v4197 = vmul.f32 %v2536, %v2536
    %v4198 = vmul.f32 %v3240, %v3240
    %v4199 = vmul.f32 %v2538, %v2538
    %v4200 = vmul.f32 %v2540, %v2540
    %v4201 = vmul.f32 %v3244, %v3244
    %v4202 = vmul.f32 %v2544, %v2544
    %v4203 = vmul.f32 %v2546, %v2546
    %v4204 = vmul.f32 %v3250, %v3250
    %v4205 = vmul.f32 %v2548, %v2548
    %v4206 = vmul.f32 %v2550, %v2550
    %v4207 = vmul.f32 %v3254, %v3254
    %v4208 = vmul.f32 %v2554, %v2554
    %v4209 = vmul.f32 %v2556, %v2556
    %v4210 = vmul.f32 %v3260, %v3260
    %v4211 = vmul.f32 %v2558, %v2558
    %v4212 = vmul.f32 %v2560, %v2560
    %v4213 = vmul.f32 %v3264, %v3264
    %v4214 = vmul.f32 %v2564, %v2564
    %v4215 = vmul.f32 %v2566, %v2566
    %v4216 = vmul.f32 %v3270, %v3270
    %v4217 = vmul.f32 %v2568, %v2568
    %v4218 = vmul.f32 %v2570, %v2570
    %v4219 = vmul.f32 %v3274, %v3274
    %v4220 = vmul.f32 %v2574, %v2574
    %v4221 = vmul.f32 %v2576, %v2576
    %v4222 = vmul.f32 %v3280, %v3280
    %v4223 = vmul.f32 %v2578, %v2578
    %v4224 = vmul.f32 %v2580, %v2580
    %v4225 = vmul.f32 %v3284, %v3284
    %v4226 = vmul.f32 %v2584, %v2584
    %v4227 = vmul.f32 %v2586, %v2586
    %v4228 = vmul.f32 %v3290, %v3290
    %v4229 = vmul.f32 %v2588, %v2588
    %v4230 = vmul.f32 %v2590, %v2590
    %v4231 = vmul.f32 %v3294, %v3294
    %v4232 = vmul.f32 %v2594, %v2594
    %v4233 = vmul.f32 %v2596, %v2596
    %v4234 = vmul.f32 %v3300, %v3300
    %v4235 = vmul.f32 %v2598, %v2598
    %v4236 = vmul.f32 %v2600, %v2600
    %v4237 = vmul.f32 %v3304, %v3304
    %v4238 = vmul.f32 %v2604, %v2604
    %v4239 = vmul.f32 %v2606, %v2606
    %v4240 = vmul.f32 %v3310, %v3310
    %v4241 = vmul.f32 %v2608, %v2608
    %v4242 = vmul.f32 %v2610, %v2610
    %v4243 = vmul.f32 %v3314, %v3314
    %v4244 = vmul.f32 %v2614, %v2614
    %v4245 = vmul.f32 %v2616, %v2616
    %v4246 = vmul.f32 %v3320, %v3320
    %v4247 = vmul.f32 %v2618, %v2618
    %v4248 = vmul.f32 %v2620, %v2620
    %v4249 = vmul.f32 %v3324, %v3324
    %v4250 = vmul.f32 %v2624, %v2624
    %v4251 = vmul.f32 %v2626, %v2626
    %v4252 = vmul.f32 %v3330, %v3330
    %v4253 = vmul.f32 %v2628, %v2628
    %v4254 = vmul.f32 %v2630, %v2630
    %v4255 = vmul.f32 %v3334, %v3334
    %v4256 = vmul.f32 %v2634, %v2634
    %v4257 = vmul.f32 %v2636, %v2636
    %v4258 = vmul.f32 %v3340, %v3340
    %v4259 = vmul.f32 %v2638, %v2638
    %v4260 = vmul.f32 %v2640, %v2640
    %v4261 = vmul.f32 %v3344, %v3344
    %v4262 = vmul.f32 %v2644, %v2644
    %v4263 = vmul.f32 %v2646, %v2646
    %v4264 = vmul.f32 %v3350, %v3350
    %v4265 = vmul.f32 %v2648, %v2648
    %v4266 = vmul.f32 %v2650, %v2650
    %v4267 = vmul.f32 %v3354, %v3354
    %v4268 = vmul.f32 %v2654, %v2654
    %v4269 = vmul.f32 %v2656, %v2656
    %v4270 = vmul.f32 %v3360, %v3360
    %v4271 = vmul.f32 %v2658, %v2658
    %v4272 = vmul.f32 %v2660, %v2660
    %v4273 = vmul.f32 %v3364, %v3364
    %v4274 = vmul.f32 %v2664, %v2664
    %v4275 = vmul.f32 %v2666, %v2666
    %v4276 = vmul.f32 %v3370, %v3370
    %v4277 = vmul.f32 %v2668, %v2668
    %v4278 = vmul.f32 %v2670, %v2670
    %v4279 = vmul.f32 %v3374, %v3374
    %v4280 = vmul.f32 %v2674, %v2674
    %v4281 = vmul.f32 %v2676, %v2676
    %v4282 = vmul.f32 %v3380, %v3380
    %v4283 = vmul.f32 %v2678, %v2678
    %v4284 = vmul.f32 %v2680, %v2680
    %v4285 = vmul.f32 %v3384, %v3384
    %v4286 = vmul.f32 %v3072, %v3072
    %v4287 = vmul.f32 %v3776, %v3776
    %v4288 = vmul.f32 %v3778, %v3778
    %v4289 = vmul.f32 %v3076, %v3076
    %v4290 = vmul.f32 %v3780, %v3780
    %v4291 = vmul.f32 %v3782, %v3782
    %v4292 = vmul.f32 %v3082, %v3082
    %v4293 = vmul.f32 %v3786, %v3786
    %v4294 = vmul.f32 %v3788, %v3788
    %v4295 = vmul.f32 %v3086, %v3086
    %v4296 = vmul.f32 %v3790, %v3790
    %v4297 = vmul.f32 %v3792, %v3792
    %v4298 = vmul.f32 %v3092, %v3092
    %v4299 = vmul.f32 %v3796, %v3796
    %v4300 = vmul.f32 %v3798, %v3798
    %v4301 = vmul.f32 %v3096, %v3096
    %v4302 = vmul.f32 %v3800, %v3800
    %v4303 = vmul.f32 %v3802, %v3802
    %v4304 = vmul.f32 %v3102, %v3102
    %v4305 = vmul.f32 %v3806, %v3806
    %v4306 = vmul.f32 %v3808, %v3808
    %v4307 = vmul.f32 %v3106, %v3106
    %v4308 = vmul.f32 %v3810, %v3810
    %v4309 = vmul.f32 %v3812, %v3812
    %v4310 = vmul.f32 %v3112, %v3112
    %v4311 = vmul.f32 %v3816, %v3816
    %v4312 = vmul.f32 %v3818, %v3818
    %v4313 = vmul.f32 %v3116, %v3116
    %v4314 = vmul.f32 %v3820, %v3820
    %v4315 = vmul.f32 %v3822, %v3822
    %v4316 = vmul.f32 %v3122, %v3122
    %v4317 = vmul.f32 %v3826, %v3826
    %v4318 = vmul.f32 %v3828, %v3828
    %v4319 = vmul.f32 %v3126, %v3126
    %v4320 = vmul.f32 %v3830, %v3830
    %v4321 = vmul.f32 %v3832, %v3832
    %v4322 = vmul.f32 %v3132, %v3132
    %v4323 = vmul.f32 %v3836, %v3836
    %v4324 = vmul.f32 %v3838, %v3838
    %v4325 = vmul.f32 %v3136, %v3136
    %v4326 = vmul.f32 %v3840, %v3840
    %v4327 = vmul.f32 %v3842, %v3842
    %v4328 = vmul.f32 %v3142, %v3142
    %v4329 = vmul.f32 %v3846, %v3846
    %v4330 = vmul.f32 %v3848, %v3848
    %v4331 = vmul.f32 %v3146, %v3146
    %v4332 = vmul.f32 %v3850, %v3850
    %v4333 = vmul.f32 %v3852, %v3852
    %v4334 = vmul.f32 %v3152, %v3152
    %v4335 = vmul.f32 %v3856, %v3856
    %v4336 = vmul.f32 %v3858, %v3858
    %v4337 = vmul.f32 %v3156, %v3156
    %v4338 = vmul.f32 %v3860, %v3860
    %v4339 = vmul.f32 %v3862, %v3862
    %v4340 = vmul.f32 %v3162, %v3162
    %v4341 = vmul.f32 %v3866, %v3866
    %v4342 = vmul.f32 %v3868, %v3868
    %v4343 = vmul.f32 %v3166, %v3166
    %v4344 = vmul.f32 %v3870, %v3870
    %v4345 = vmul.f32 %v3872, %v3872
    %v4346 = vmul.f32 %v3172, %v3172
    %v4347 = vmul.f32 %v3876, %v3876
    %v4348 = vmul.f32 %v3878, %v3878
    %v4349 = vmul.f32 %v3176, %v3176
    %v4350 = vmul.f32 %v3880, %v3880
    %v4351 = vmul.f32 %v3882, %v3882
    %v4352 = vmul.f32 %v3182, %v3182
    %v4353 = vmul.f32 %v3886, %v3886
    %v4354 = vmul.f32 %v3888, %v3888
    %v4355 = vmul.f32 %v3186, %v3186
    %v4356 = vmul.f32 %v3890, %v3890
    %v4357 = vmul.f32 %v3892, %v3892
    %v4358 = vmul.f32 %v3192, %v3192
    %v4359 = vmul.f32 %v3896, %v3896
    %v4360 = vmul.f32 %v3898, %v3898
    %v4361 = vmul.f32 %v3196, %v3196
    %v4362 = vmul.f32 %v3900, %v3900
    %v4363 = vmul.f32 %v3902, %v3902
    %v4364 = vmul.f32 %v3202, %v3202
    %v4365 = vmul.f32 %v3906, %v3906
    %v4366 = vmul.f32 %v3908, %v3908
    %v4367 = vmul.f32 %v3206, %v3206
    %v4368 = vmul.f32 %v3910, %v3910
    %v4369 = vmul.f32 %v3912, %v3912
    %v4370 = vmul.f32 %v3212, %v3212
    %v4371 = vmul.f32 %v3916, %v3916
    %v4372 = vmul.f32 %v3918, %v3918
    %v4373 = vmul.f32 %v3216, %v3216
    %v4374 = vmul.f32 %v3920, %v3920
    %v4375 = vmul.f32 %v3922, %v3922
    %v4376 = vmul.f32 %v3222, %v3222
    %v4377 = vmul.f32 %v3926, %v3926
    %v4378 = vmul.f32 %v3928, %v3928
    %v4379 = vmul.f32 %v3226, %v3226
    %v4380 = vmul.f32 %v3930, %v3930
    %v4381 = vmul.f32 %v3932, %v3932
    %v4382 = vmul.f32 %v3232, %v3232
    %v4383 = vmul.f32 %v3936, %v3936
    %v4384 = vmul.f32 %v3938, %v3938
    %v4385 = vmul.f32 %v3236, %v3236
    %v4386 = vmul.f32 %v3940, %v3940
    %v4387 = vmul.f32 %v3942, %v3942
    %v4388 = vmul.f32 %v3242, %v3242
    %v4389 = vmul.f32 %v3946, %v3946
    %v4390 = vmul.f32 %v3948, %v3948
    %v4391 = vmul.f32 %v3246, %v3246
    %v4392 = vmul.f32 %v3950, %v3950
    %v4393 = vmul.f32 %v3952, %v3952
    %v4394 = vmul.f32 %v3252, %v3252
    %v4395 = vmul.f32 %v3956, %v3956
    %v4396 = vmul.f32 %v3958, %v3958
    %v4397 = vmul.f32 %v3256, %v3256
    %v4398 = vmul.f32 %v3960, %v3960
    %v4399 = vmul.f32 %v3962, %v3962
    %v4400 = vmul.f32 %v3262, %v3262
    %v4401 = vmul.f32 %v3966, %v3966
    %v4402 = vmul.f32 %v3968, %v3968
    %v4403 = vmul.f32 %v3266, %v3266
    %v4404 = vmul.f32 %v3970, %v3970
    %v4405 = vmul.f32 %v3972, %v3972
    %v4406 = vmul.f32 %v3272, %v3272
    %v4407 = vmul.f32 %v3976, %v3976
    %v4408 = vmul.f32 %v3978, %v3978
    %v4409 = vmul.f32 %v3276, %v3276
    %v4410 = vmul.f32 %v3980, %v3980
    %v4411 = vmul.f32 %v3982, %v3982
    %v4412 = vmul.f32 %v3282, %v3282
    %v4413 = vmul.f32 %v3986, %v3986
    %v4414 = vmul.f32 %v3988, %v3988
    %v4415 = vmul.f32 %v3286, %v3286
    %v4416 = vmul.f32 %v3990, %v3990
    %v4417 = vmul.f32 %v3992, %v3992
    %v4418 = vmul.f32 %v3292, %v3292
    %v4419 = vmul.f32 %v3996, %v3996
    %v4420 = vmul.f32 %v3998, %v3998
    %v4421 = vmul.f32 %v3296, %v3296
    %v4422 = vmul.f32 %v4000, %v4000
    %v4423 = vmul.f32 %v4002, %v4002
    %v4424 = vmul.f32 %v3302, %v3302
    %v4425 = vmul.f32 %v4006, %v4006
    %v4426 = vmul.f32 %v4008, %v4008
    %v4427 = vmul.f32 %v3306, %v3306
    %v4428 = vmul.f32 %v4010, %v4010
    %v4429 = vmul.f32 %v4012, %v4012
    %v4430 = vmul.f32 %v3312, %v3312
    %v4431 = vmul.f32 %v4016, %v4016
    %v4432 = vmul.f32 %v4018, %v4018
    %v4433 = vmul.f32 %v3316, %v3316
    %v4434 = vmul.f32 %v4020, %v4020
    %v4435 = vmul.f32 %v4022, %v4022
    %v4436 = vmul.f32 %v3322, %v3322
    %v4437 = vmul.f32 %v4026, %v4026
    %v4438 = vmul.f32 %v4028, %v4028
    %v4439 = vmul.f32 %v3326, %v3326
    %v4440 = vmul.f32 %v4030, %v4030
    %v4441 = vmul.f32 %v4032, %v4032
    %v4442 = vmul.f32 %v3332, %v3332
    %v4443 = vmul.f32 %v4036, %v4036
    %v4444 = vmul.f32 %v4038, %v4038
    %v4445 = vmul.f32 %v3336, %v3336
    %v4446 = vmul.f32 %v4040, %v4040
    %v4447 = vmul.f32 %v4042, %v4042
    %v4448 = vmul.f32 %v3342, %v3342
    %v4449 = vmul.f32 %v4046, %v4046
    %v4450 = vmul.f32 %v4048, %v4048
    %v4451 = vmul.f32 %v3346, %v3346
    %v4452 = vmul.f32 %v4050, %v4050
    %v4453 = vmul.f32 %v4052, %v4052
    %v4454 = vmul.f32 %v3352, %v3352
    %v4455 = vmul.f32 %v4056, %v4056
    %v4456 = vmul.f32 %v4058, %v4058
    %v4457 = vmul.f32 %v3356, %v3356
    %v4458 = vmul.f32 %v4060, %v4060
    %v4459 = vmul.f32 %v4062, %v4062
    %v4460 = vmul.f32 %v3362, %v3362
    %v4461 = vmul.f32 %v4066, %v4066
    %v4462 = vmul.f32 %v4068, %v4068
    %v4463 = vmul.f32 %v3366, %v3366
    %v4464 = vmul.f32 %v4070, %v4070
    %v4465 = vmul.f32 %v4072, %v4072
    %v4466 = vmul.f32 %v3372, %v3372
    %v4467 = vmul.f32 %v4076, %v4076
    %v4468 = vmul.f32 %v4078, %v4078
    %v4469 = vmul.f32 %v3376, %v3376
    %v4470 = vmul.f32 %v4080, %v4080
    %v4471 = vmul.f32 %v4082, %v4082
    %v4472 = vmul.f32 %v3382, %v3382
    %v4473 = vmul.f32 %v4086, %v4086
    %v4474 = vmul.f32 %v4088, %v4088
    %v4475 = vmul.f32 %v3386, %v3386
    %v4476 = vmul.f32 %v4090, %v4090
    %v4477 = vmul.f32 %v4092, %v4092
    %v4478 = vadd.f32 %v4094, %v4286
    %v4479 = vadd.f32 %v4095, %v4287
    %v4480 = vadd.f32 %v4096, %v4288
    %v4481 = vadd.f32 %v4097, %v4289
    %v4482 = vadd.f32 %v4098, %v4290
    %v4483 = vadd.f32 %v4099, %v4291
    %v4484 = vadd.f32 %v4100, %v4292
    %v4485 = vadd.f32 %v4101, %v4293
    %v4486 = vadd.f32 %v4102, %v4294
    %v4487 = vadd.f32 %v4103, %v4295
    %v4488 = vadd.f32 %v4104, %v4296
    %v4489 = vadd.f32 %v4105, %v4297
    %v4490 = vadd.f32 %v4106, %v4298
    %v4491 = vadd.f32 %v4107, %v4299
    %v4492 = vadd.f32 %v4108, %v4300
    %v4493 = vadd.f32 %v4109, %v4301
    %v4494 = vadd.f32 %v4110, %v4302
    %v4495 = vadd.f32 %v4111, %v4303
    %v4496 = vadd.f32 %v4112, %v4304
    %v4497 = vadd.f32 %v4113, %v4305
    %v4498 = vadd.f32 %v4114, %v4306
    %v4499 = vadd.f32 %v4115, %v4307
    %v4500 = vadd.f32 %v4116, %v4308
    %v4501 = vadd.f32 %v4117, %v4309
    %v4502 = vadd.f32 %v4118, %v4310
    %v4503 = vadd.f32 %v4119, %v4311
    %v4504 = vadd.f32 %v4120, %v4312
    %v4505 = vadd.f32 %v4121, %v4313
    %v4506 = vadd.f32 %v4122, %v4314
    %v4507 = vadd.f32 %v4123, %v4315
    %v4508 = vadd.f32 %v4124, %v4316
    %v4509 = vadd.f32 %v4125, %v4317
    %v4510 = vadd.f32 %v4126, %v4318
    %v4511 = vadd.f32 %v4127, %v4319
    %v4512 = vadd.f32 %v4128, %v4320
    %v4513 = vadd.f32 %v4129, %v4321
    %v4514 = vadd.f32 %v4130, %v4322
    %v4515 = vadd.f32 %v4131, %v4323
    %v4516 = vadd.f32 %v4132, %v4324
    %v4517 = vadd.f32 %v4133, %v4325
    %v4518 = vadd.f32 %v4134, %v4326
    %v4519 = vadd.f32 %v4135, %v4327
    %v4520 = vadd.f32 %v4136, %v4328
    %v4521 = vadd.f32 %v4137, %v4329
    %v4522 = vadd.f32 %v4138, %v4330
    %v4523 = vadd.f32 %v4139, %v4331
    %v4524 = vadd.f32 %v4140, %v4332
    %v4525 = vadd.f32 %v4141, %v4333
    %v4526 = vadd.f32 %v4142, %v4334
    %v4527 = vadd.f32 %v4143, %v4335
    %v4528 = vadd.f32 %v4144, %v4336
    %v4529 = vadd.f32 %v4145, %v4337
    %v4530 = vadd.f32 %v4146, %v4338
    %v4531 = vadd.f32 %v4147, %v4339
    %v4532 = vadd.f32 %v4148, %v4340
    %v4533 = vadd.f32 %v4149, %v4341
    %v4534 = vadd.f32 %v4150, %v4342
    %v4535 = vadd.f32 %v4151, %v4343
    %v4536 = vadd.f32 %v4152, %v4344
    %v4537 = vadd.f32 %v4153, %v4345
    %v4538 = vadd.f32 %v4154, %v4346
    %v4539 = vadd.f32 %v4155, %v4347
    %v4540 = vadd.f32 %v4156, %v4348
    %v4541 = vadd.f32 %v4157, %v4349
    %v4542 = vadd.f32 %v4158, %v4350
    %v4543 = vadd.f32 %v4159, %v4351
    %v4544 = vadd.f32 %v4160, %v4352
    %v4545 = vadd.f32 %v4161, %v4353
    %v4546 = vadd.f32 %v4162, %v4354
    %v4547 = vadd.f32 %v4163, %v4355
    %v4548 = vadd.f32 %v4164, %v4356
    %v4549 = vadd.f32 %v4165, %v4357
    %v4550 = vadd.f32 %v4166, %v4358
    %v4551 = vadd.f32 %v4167, %v4359
    %v4552 = vadd.f32 %v4168, %v4360
    %v4553 = vadd.f32 %v4169, %v4361
    %v4554 = vadd.f32 %v4170, %v4362
    %v4555 = vadd.f32 %v4171, %v4363
    %v4556 = vadd.f32 %v4172, %v4364
    %v4557 = vadd.f32 %v4173, %v4365
    %v4558 = vadd.f32 %v4174, %v4366
    %v4559 = vadd.f32 %v4175, %v4367
    %v4560 = vadd.f32 %v4176, %v4368
    %v4561 = vadd.f32 %v4177, %v4369
    %v4562 = vadd.f32 %v4178, %v4370
    %v4563 = vadd.f32 %v4179, %v4371
    %v4564 = vadd.f32 %v4180, %v4372
    %v4565 = vadd.f32 %v4181, %v4373
    %v4566 = vadd.f32 %v4182, %v4374
    %v4567 = vadd.f32 %v4183, %v4375
    %v4568 = vadd.f32 %v4184, %v4376
    %v4569 = vadd.f32 %v4185, %v4377
    %v4570 = vadd.f32 %v4186, %v4378
    %v4571 = vadd.f32 %v4187, %v4379
    %v4572 = vadd.f32 %v4188, %v4380
    %v4573 = vadd.f32 %v4189, %v4381
    %v4574 = vadd.f32 %v4190, %v4382
    %v4575 = vadd.f32 %v4191, %v4383
    %v4576 = vadd.f32 %v4192, %v4384
    %v4577 = vadd.f32 %v4193, %v4385
    %v4578 = vadd.f32 %v4194, %v4386
    %v4579 = vadd.f32 %v4195, %v4387
    %v4580 = vadd.f32 %v4196, %v4388
    %v4581 = vadd.f32 %v4197, %v4389
    %v4582 = vadd.f32 %v4198, %v4390
    %v4583 = vadd.f32 %v4199, %v4391
    %v4584 = vadd.f32 %v4200, %v4392
    %v4585 = vadd.f32 %v4201, %v4393
    %v4586 = vadd.f32 %v4202, %v4394
    %v4587 = vadd.f32 %v4203, %v4395
    %v4588 = vadd.f32 %v4204, %v4396
    %v4589 = vadd.f32 %v4205, %v4397
    %v4590 = vadd.f32 %v4206, %v4398
    %v4591 = vadd.f32 %v4207, %v4399
    %v4592 = vadd.f32 %v4208, %v4400
    %v4593 = vadd.f32 %v4209, %v4401
    %v4594 = vadd.f32 %v4210, %v4402
    %v4595 = vadd.f32 %v4211, %v4403
    %v4596 = vadd.f32 %v4212, %v4404
    %v4597 = vadd.f32 %v4213, %v4405
    %v4598 = vadd.f32 %v4214, %v4406
    %v4599 = vadd.f32 %v4215, %v4407
    %v4600 = vadd.f32 %v4216, %v4408
    %v4601 = vadd.f32 %v4217, %v4409
    %v4602 = vadd.f32 %v4218, %v4410
    %v4603 = vadd.f32 %v4219, %v4411
    %v4604 = vadd.f32 %v4220, %v4412
    %v4605 = vadd.f32 %v4221, %v4413
    %v4606 = vadd.f32 %v4222, %v4414
    %v4607 = vadd.f32 %v4223, %v4415
    %v4608 = vadd.f32 %v4224, %v4416
    %v4609 = vadd.f32 %v4225, %v4417
    %v4610 = vadd.f32 %v4226, %v4418
    %v4611 = vadd.f32 %v4227, %v4419
    %v4612 = vadd.f32 %v4228, %v4420
    %v4613 = vadd.f32 %v4229, %v4421
    %v4614 = vadd.f32 %v4230, %v4422
    %v4615 = vadd.f32 %v4231, %v4423
    %v4616 = vadd.f32 %v4232, %v4424
    %v4617 = vadd.f32 %v4233, %v4425
    %v4618 = vadd.f32 %v4234, %v4426
    %v4619 = vadd.f32 %v4235, %v4427
    %v4620 = vadd.f32 %v4236, %v4428
    %v4621 = vadd.f32 %v4237, %v4429
    %v4622 = vadd.f32 %v4238, %v4430
    %v4623 = vadd.f32 %v4239, %v4431
    %v4624 = vadd.f32 %v4240, %v4432
    %v4625 = vadd.f32 %v4241, %v4433
    %v4626 = vadd.f32 %v4242, %v4434
    %v4627 = vadd.f32 %v4243, %v4435
    %v4628 = vadd.f32 %v4244, %v4436
    %v4629 = vadd.f32 %v4245, %v4437
    %v4630 = vadd.f32 %v4246, %v4438
    %v4631 = vadd.f32 %v4247, %v4439
    %v4632 = vadd.f32 %v4248, %v4440
    %v4633 = vadd.f32 %v4249, %v4441
    %v4634 = vadd.f32 %v4250, %v4442
    %v4635 = vadd.f32 %v4251, %v4443
    %v4636 = vadd.f32 %v4252, %v4444
    %v4637 = vadd.f32 %v4253, %v4445
    %v4638 = vadd.f32 %v4254, %v4446
    %v4639 = vadd.f32 %v4255, %v4447
    %v4640 = vadd.f32 %v4256, %v4448
    %v4641 = vadd.f32 %v4257, %v4449
    %v4642 = vadd.f32 %v4258, %v4450
    %v4643 = vadd.f32 %v4259, %v4451
    %v4644 = vadd.f32 %v4260, %v4452
    %v4645 = vadd.f32 %v4261, %v4453
    %v4646 = vadd.f32 %v4262, %v4454
    %v4647 = vadd.f32 %v4263, %v4455
    %v4648 = vadd.f32 %v4264, %v4456
    %v4649 = vadd.f32 %v4265, %v4457
    %v4650 = vadd.f32 %v4266, %v4458
    %v4651 = vadd.f32 %v4267, %v4459
    %v4652 = vadd.f32 %v4268, %v4460
    %v4653 = vadd.f32 %v4269, %v4461
    %v4654 = vadd.f32 %v4270, %v4462
    %v4655 = vadd.f32 %v4271, %v4463
    %v4656 = vadd.f32 %v4272, %v4464
    %v4657 = vadd.f32 %v4273, %v4465
    %v4658 = vadd.f32 %v4274, %v4466
    %v4659 = vadd.f32 %v4275, %v4467
    %v4660 = vadd.f32 %v4276, %v4468
    %v4661 = vadd.f32 %v4277, %v4469
    %v4662 = vadd.f32 %v4278, %v4470
    %v4663 = vadd.f32 %v4279, %v4471
    %v4664 = vadd.f32 %v4280, %v4472
    %v4665 = vadd.f32 %v4281, %v4473
    %v4666 = vadd.f32 %v4282, %v4474
    %v4667 = vadd.f32 %v4283, %v4475
    %v4668 = vadd.f32 %v4284, %v4476
    %v4669 = vadd.f32 %v4285, %v4477
    %v4670 = vld [vmem:[#allocation7] sm:$0xff]
    %v4671 = vld [vmem:[#allocation7 + $0x8] sm:$0xff]
    %v4672 = vld [vmem:[#allocation7 + $0x10] sm:$0xff]
    %v4673 = vld [vmem:[#allocation7 + $0x18] sm:$0xff]
    %v4674 = vld [vmem:[#allocation7 + $0x20] sm:$0xff]
    %v4675 = vld [vmem:[#allocation7 + $0x28] sm:$0xff]
    %v4676 = vld [vmem:[#allocation7 + $0x30] sm:$0xff]
    %v4677 = vld [vmem:[#allocation7 + $0x38] sm:$0xff]
    %v4678 = vld [vmem:[#allocation7 + $0x40] sm:$0xff]
    %v4679 = vld [vmem:[#allocation7 + $0x48] sm:$0xff]
    %v4680 = vld [vmem:[#allocation7 + $0x50] sm:$0xff]
    %v4681 = vld [vmem:[#allocation7 + $0x58] sm:$0xff]
    %v4682 = vld [vmem:[#allocation7 + $0x60] sm:$0xff]
    %v4683 = vld [vmem:[#allocation7 + $0x68] sm:$0xff]
    %v4684 = vld [vmem:[#allocation7 + $0x70] sm:$0xff]
    %v4685 = vld [vmem:[#allocation7 + $0x78] sm:$0xff]
    %v4686 = vld [vmem:[#allocation7 + $0x80] sm:$0xff]
    %v4687 = vld [vmem:[#allocation7 + $0x88] sm:$0xff]
    %v4688 = vld [vmem:[#allocation7 + $0x90] sm:$0xff]
    %v4689 = vld [vmem:[#allocation7 + $0x98] sm:$0xff]
    %v4690 = vld [vmem:[#allocation7 + $0xa0] sm:$0xff]
    %v4691 = vld [vmem:[#allocation7 + $0xa8] sm:$0xff]
    %v4692 = vld [vmem:[#allocation7 + $0xb0] sm:$0xff]
    %v4693 = vld [vmem:[#allocation7 + $0xb8] sm:$0xff]
    %v4694 = vld [vmem:[#allocation7 + $0xc0] sm:$0xff]
    %v4695 = vld [vmem:[#allocation7 + $0xc8] sm:$0xff]
    %v4696 = vld [vmem:[#allocation7 + $0xd0] sm:$0xff]
    %v4697 = vld [vmem:[#allocation7 + $0xd8] sm:$0xff]
    %v4698 = vld [vmem:[#allocation7 + $0xe0] sm:$0xff]
    %v4699 = vld [vmem:[#allocation7 + $0xe8] sm:$0xff]
    %v4700 = vld [vmem:[#allocation7 + $0xf0] sm:$0xff]
    %v4701 = vld [vmem:[#allocation7 + $0xf8] sm:$0xff]
    %v4702 = vld [vmem:[#allocation7 + $0x100] sm:$0xff]
    %v4703 = vld [vmem:[#allocation7 + $0x108] sm:$0xff]
    %v4704 = vld [vmem:[#allocation7 + $0x110] sm:$0xff]
    %v4705 = vld [vmem:[#allocation7 + $0x118] sm:$0xff]
    %v4706 = vld [vmem:[#allocation7 + $0x120] sm:$0xff]
    %v4707 = vld [vmem:[#allocation7 + $0x128] sm:$0xff]
    %v4708 = vld [vmem:[#allocation7 + $0x130] sm:$0xff]
    %v4709 = vld [vmem:[#allocation7 + $0x138] sm:$0xff]
    %v4710 = vld [vmem:[#allocation7 + $0x140] sm:$0xff]
    %v4711 = vld [vmem:[#allocation7 + $0x148] sm:$0xff]
    %v4712 = vld [vmem:[#allocation7 + $0x150] sm:$0xff]
    %v4713 = vld [vmem:[#allocation7 + $0x158] sm:$0xff]
    %v4714 = vld [vmem:[#allocation7 + $0x160] sm:$0xff]
    %v4715 = vld [vmem:[#allocation7 + $0x168] sm:$0xff]
    %v4716 = vld [vmem:[#allocation7 + $0x170] sm:$0xff]
    %v4717 = vld [vmem:[#allocation7 + $0x178] sm:$0xff]
    %4718 = vmatprep.subr.mxu0 0.0
    %4719 = vmatpush1.msra.mxu0 %v4685
    %4720 = vmatprep.subr.mxu0 0.0
    %4721 = vmatpush1.msra.mxu0 %v4684
    %4722 = vmatprep.subr.mxu0 0.0
    %4723 = vmatpush1.msra.mxu0 %v4683
    %4724 = vmatprep.subr.mxu0 0.0
    %4725 = vmatpush1.msra.mxu0 %v4682
    %4726 = vmatprep.subr.mxu0 0.0
    %4727 = vmatpush1.msra.mxu0 %v4681
    %4728 = vmatprep.subr.mxu0 0.0
    %4729 = vmatpush1.msra.mxu0 %v4680
    %4730 = vmatprep.subr.mxu0 0.0
    %4731 = vmatpush1.msra.mxu0 %v4679
    %4732 = vmatprep.subr.mxu0 0.0
    %4733 = vmatpush1.msra.mxu0 %v4678
    %4734 = vmatprep.subr.mxu0 0.0
    %4735 = vmatpush1.msra.mxu0 %v4677
    %4736 = vmatprep.subr.mxu0 0.0
    %4737 = vmatpush1.msra.mxu0 %v4676
    %4738 = vmatprep.subr.mxu0 0.0
    %4739 = vmatpush1.msra.mxu0 %v4675
    %4740 = vmatprep.subr.mxu0 0.0
    %4741 = vmatpush1.msra.mxu0 %v4674
    %4742 = vmatprep.subr.mxu0 0.0
    %4743 = vmatpush1.msra.mxu0 %v4673
    %4744 = vmatprep.subr.mxu0 0.0
    %4745 = vmatpush1.msra.mxu0 %v4672
    %4746 = vmatprep.subr.mxu0 0.0
    %4747 = vmatpush1.msra.mxu0 %v4671
    %4748 = vmatprep.subr.mxu0 0.0
    %4749 = vmatpush1.msra.mxu0 %v4670
    %4750 = vmatprep.subr.mxu0 0.0
    %4751 = vmatpush2.msra.mxu0 %v4701
    %4752 = vmatprep.subr.mxu0 0.0
    %4753 = vmatpush2.msra.mxu0 %v4700
    %4754 = vmatprep.subr.mxu0 0.0
    %4755 = vmatpush2.msra.mxu0 %v4699
    %4756 = vmatprep.subr.mxu0 0.0
    %4757 = vmatpush2.msra.mxu0 %v4698
    %4758 = vmatprep.subr.mxu0 0.0
    %4759 = vmatpush2.msra.mxu0 %v4697
    %4760 = vmatprep.subr.mxu0 0.0
    %4761 = vmatpush2.msra.mxu0 %v4696
    %4762 = vmatprep.subr.mxu0 0.0
    %4763 = vmatpush2.msra.mxu0 %v4695
    %4764 = vmatprep.subr.mxu0 0.0
    %4765 = vmatpush2.msra.mxu0 %v4694
    %4766 = vmatprep.subr.mxu0 0.0
    %4767 = vmatpush2.msra.mxu0 %v4693
    %4768 = vmatprep.subr.mxu0 0.0
    %4769 = vmatpush2.msra.mxu0 %v4692
    %4770 = vmatprep.subr.mxu0 0.0
    %4771 = vmatpush2.msra.mxu0 %v4691
    %4772 = vmatprep.subr.mxu0 0.0
    %4773 = vmatpush2.msra.mxu0 %v4690
    %4774 = vmatprep.subr.mxu0 0.0
    %4775 = vmatpush2.msra.mxu0 %v4689
    %4776 = vmatprep.subr.mxu0 0.0
    %4777 = vmatpush2.msra.mxu0 %v4688
    %4778 = vmatprep.subr.mxu0 0.0
    %4779 = vmatpush2.msra.mxu0 %v4687
    %4780 = vmatprep.subr.mxu0 0.0
    %4781 = vmatpush2.msra.mxu0 %v4686
    %4782 = vmatprep.mubr.f32.mxu0 %v4479
    %4783 = vmatmul.mubr.f32.gmra.mxu0 %v4478
    %v4784 = vpop.f32.mrf.mxu0
    %v4785 = vadd.f32 0.0, %v4784
    %v4786 = vpop.f32.mrf.mxu0
    %4787 = vmatprep.mubr.f32.mxu0 %v4482
    %4788 = vmatmul.mubr.f32.gmra.mxu0 %v4481
    %v4789 = vpop.f32.mrf.mxu0
    %v4790 = vadd.f32 0.0, %v4789
    %v4791 = vpop.f32.mrf.mxu0
    %4792 = vmatprep.mubr.f32.mxu0 %v4485
    %4793 = vmatmul.mubr.f32.gmra.mxu0 %v4484
    %v4794 = vpop.f32.mrf.mxu0
    %v4795 = vadd.f32 0.0, %v4794
    %v4796 = vpop.f32.mrf.mxu0
    %4797 = vmatprep.mubr.f32.mxu0 %v4488
    %4798 = vmatmul.mubr.f32.gmra.mxu0 %v4487
    %v4799 = vpop.f32.mrf.mxu0
    %v4800 = vadd.f32 0.0, %v4799
    %v4801 = vpop.f32.mrf.mxu0
    %4802 = vmatprep.mubr.f32.mxu0 %v4491
    %4803 = vmatmul.mubr.f32.gmra.mxu0 %v4490
    %v4804 = vpop.f32.mrf.mxu0
    %v4805 = vadd.f32 0.0, %v4804
    %v4806 = vpop.f32.mrf.mxu0
    %4807 = vmatprep.mubr.f32.mxu0 %v4494
    %4808 = vmatmul.mubr.f32.gmra.mxu0 %v4493
    %v4809 = vpop.f32.mrf.mxu0
    %v4810 = vadd.f32 0.0, %v4809
    %v4811 = vpop.f32.mrf.mxu0
    %4812 = vmatprep.mubr.f32.mxu0 %v4497
    %4813 = vmatmul.mubr.f32.gmra.mxu0 %v4496
    %v4814 = vpop.f32.mrf.mxu0
    %v4815 = vadd.f32 0.0, %v4814
    %v4816 = vpop.f32.mrf.mxu0
    %4817 = vmatprep.mubr.f32.mxu0 %v4500
    %4818 = vmatmul.mubr.f32.gmra.mxu0 %v4499
    %v4819 = vpop.f32.mrf.mxu0
    %v4820 = vadd.f32 0.0, %v4819
    %v4821 = vpop.f32.mrf.mxu0
    %4822 = vmatprep.mubr.f32.mxu0 %v4503
    %4823 = vmatmul.mubr.f32.gmra.mxu0 %v4502
    %v4824 = vpop.f32.mrf.mxu0
    %v4825 = vadd.f32 0.0, %v4824
    %v4826 = vpop.f32.mrf.mxu0
    %4827 = vmatprep.mubr.f32.mxu0 %v4506
    %4828 = vmatmul.mubr.f32.gmra.mxu0 %v4505
    %v4829 = vpop.f32.mrf.mxu0
    %v4830 = vadd.f32 0.0, %v4829
    %v4831 = vpop.f32.mrf.mxu0
    %4832 = vmatprep.mubr.f32.mxu0 %v4509
    %4833 = vmatmul.mubr.f32.gmra.mxu0 %v4508
    %v4834 = vpop.f32.mrf.mxu0
    %v4835 = vadd.f32 0.0, %v4834
    %v4836 = vpop.f32.mrf.mxu0
    %4837 = vmatprep.mubr.f32.mxu0 %v4512
    %4838 = vmatmul.mubr.f32.gmra.mxu0 %v4511
    %v4839 = vpop.f32.mrf.mxu0
    %v4840 = vadd.f32 0.0, %v4839
    %v4841 = vpop.f32.mrf.mxu0
    %4842 = vmatprep.mubr.f32.mxu0 %v4515
    %4843 = vmatmul.mubr.f32.gmra.mxu0 %v4514
    %v4844 = vpop.f32.mrf.mxu0
    %v4845 = vadd.f32 0.0, %v4844
    %v4846 = vpop.f32.mrf.mxu0
    %4847 = vmatprep.mubr.f32.mxu0 %v4518
    %4848 = vmatmul.mubr.f32.gmra.mxu0 %v4517
    %v4849 = vpop.f32.mrf.mxu0
    %v4850 = vadd.f32 0.0, %v4849
    %v4851 = vpop.f32.mrf.mxu0
    %4852 = vmatprep.mubr.f32.mxu0 %v4521
    %4853 = vmatmul.mubr.f32.gmra.mxu0 %v4520
    %v4854 = vpop.f32.mrf.mxu0
    %v4855 = vadd.f32 0.0, %v4854
    %v4856 = vpop.f32.mrf.mxu0
    %4857 = vmatprep.mubr.f32.mxu0 %v4524
    %4858 = vmatmul.mubr.f32.gmra.mxu0 %v4523
    %v4859 = vpop.f32.mrf.mxu0
    %v4860 = vadd.f32 0.0, %v4859
    %v4861 = vpop.f32.mrf.mxu0
    %4862 = vmatprep.mubr.f32.mxu0 %v4527
    %4863 = vmatmul.mubr.f32.gmra.mxu0 %v4526
    %v4864 = vpop.f32.mrf.mxu0
    %v4865 = vadd.f32 0.0, %v4864
    %v4866 = vpop.f32.mrf.mxu0
    %4867 = vmatprep.mubr.f32.mxu0 %v4530
    %4868 = vmatmul.mubr.f32.gmra.mxu0 %v4529
    %v4869 = vpop.f32.mrf.mxu0
    %v4870 = vadd.f32 0.0, %v4869
    %v4871 = vpop.f32.mrf.mxu0
    %4872 = vmatprep.mubr.f32.mxu0 %v4533
    %4873 = vmatmul.mubr.f32.gmra.mxu0 %v4532
    %v4874 = vpop.f32.mrf.mxu0
    %v4875 = vadd.f32 0.0, %v4874
    %v4876 = vpop.f32.mrf.mxu0
    %4877 = vmatprep.mubr.f32.mxu0 %v4536
    %4878 = vmatmul.mubr.f32.gmra.mxu0 %v4535
    %v4879 = vpop.f32.mrf.mxu0
    %v4880 = vadd.f32 0.0, %v4879
    %v4881 = vpop.f32.mrf.mxu0
    %4882 = vmatprep.mubr.f32.mxu0 %v4539
    %4883 = vmatmul.mubr.f32.gmra.mxu0 %v4538
    %v4884 = vpop.f32.mrf.mxu0
    %v4885 = vadd.f32 0.0, %v4884
    %v4886 = vpop.f32.mrf.mxu0
    %4887 = vmatprep.mubr.f32.mxu0 %v4542
    %4888 = vmatmul.mubr.f32.gmra.mxu0 %v4541
    %v4889 = vpop.f32.mrf.mxu0
    %v4890 = vadd.f32 0.0, %v4889
    %v4891 = vpop.f32.mrf.mxu0
    %4892 = vmatprep.mubr.f32.mxu0 %v4545
    %4893 = vmatmul.mubr.f32.gmra.mxu0 %v4544
    %v4894 = vpop.f32.mrf.mxu0
    %v4895 = vadd.f32 0.0, %v4894
    %v4896 = vpop.f32.mrf.mxu0
    %4897 = vmatprep.mubr.f32.mxu0 %v4548
    %4898 = vmatmul.mubr.f32.gmra.mxu0 %v4547
    %v4899 = vpop.f32.mrf.mxu0
    %v4900 = vadd.f32 0.0, %v4899
    %v4901 = vpop.f32.mrf.mxu0
    %4902 = vmatprep.mubr.f32.mxu0 %v4551
    %4903 = vmatmul.mubr.f32.gmra.mxu0 %v4550
    %v4904 = vpop.f32.mrf.mxu0
    %v4905 = vadd.f32 0.0, %v4904
    %v4906 = vpop.f32.mrf.mxu0
    %4907 = vmatprep.mubr.f32.mxu0 %v4554
    %4908 = vmatmul.mubr.f32.gmra.mxu0 %v4553
    %v4909 = vpop.f32.mrf.mxu0
    %v4910 = vadd.f32 0.0, %v4909
    %v4911 = vpop.f32.mrf.mxu0
    %4912 = vmatprep.mubr.f32.mxu0 %v4557
    %4913 = vmatmul.mubr.f32.gmra.mxu0 %v4556
    %v4914 = vpop.f32.mrf.mxu0
    %v4915 = vadd.f32 0.0, %v4914
    %v4916 = vpop.f32.mrf.mxu0
    %4917 = vmatprep.mubr.f32.mxu0 %v4560
    %4918 = vmatmul.mubr.f32.gmra.mxu0 %v4559
    %v4919 = vpop.f32.mrf.mxu0
    %v4920 = vadd.f32 0.0, %v4919
    %v4921 = vpop.f32.mrf.mxu0
    %4922 = vmatprep.mubr.f32.mxu0 %v4563
    %4923 = vmatmul.mubr.f32.gmra.mxu0 %v4562
    %v4924 = vpop.f32.mrf.mxu0
    %v4925 = vadd.f32 0.0, %v4924
    %v4926 = vpop.f32.mrf.mxu0
    %4927 = vmatprep.mubr.f32.mxu0 %v4566
    %4928 = vmatmul.mubr.f32.gmra.mxu0 %v4565
    %v4929 = vpop.f32.mrf.mxu0
    %v4930 = vadd.f32 0.0, %v4929
    %v4931 = vpop.f32.mrf.mxu0
    %4932 = vmatprep.mubr.f32.mxu0 %v4569
    %4933 = vmatmul.mubr.f32.gmra.mxu0 %v4568
    %v4934 = vpop.f32.mrf.mxu0
    %v4935 = vadd.f32 0.0, %v4934
    %v4936 = vpop.f32.mrf.mxu0
    %4937 = vmatprep.mubr.f32.mxu0 %v4572
    %4938 = vmatmul.mubr.f32.gmra.mxu0 %v4571
    %v4939 = vpop.f32.mrf.mxu0
    %v4940 = vadd.f32 0.0, %v4939
    %v4941 = vpop.f32.mrf.mxu0
    %4942 = vmatprep.mubr.f32.mxu0 %v4575
    %4943 = vmatmul.mubr.f32.gmra.mxu0 %v4574
    %v4944 = vpop.f32.mrf.mxu0
    %v4945 = vadd.f32 0.0, %v4944
    %v4946 = vpop.f32.mrf.mxu0
    %4947 = vmatprep.mubr.f32.mxu0 %v4578
    %4948 = vmatmul.mubr.f32.gmra.mxu0 %v4577
    %v4949 = vpop.f32.mrf.mxu0
    %v4950 = vadd.f32 0.0, %v4949
    %v4951 = vpop.f32.mrf.mxu0
    %4952 = vmatprep.mubr.f32.mxu0 %v4581
    %4953 = vmatmul.mubr.f32.gmra.mxu0 %v4580
    %v4954 = vpop.f32.mrf.mxu0
    %v4955 = vadd.f32 0.0, %v4954
    %v4956 = vpop.f32.mrf.mxu0
    %4957 = vmatprep.mubr.f32.mxu0 %v4584
    %4958 = vmatmul.mubr.f32.gmra.mxu0 %v4583
    %v4959 = vpop.f32.mrf.mxu0
    %v4960 = vadd.f32 0.0, %v4959
    %v4961 = vpop.f32.mrf.mxu0
    %4962 = vmatprep.mubr.f32.mxu0 %v4587
    %4963 = vmatmul.mubr.f32.gmra.mxu0 %v4586
    %v4964 = vpop.f32.mrf.mxu0
    %v4965 = vadd.f32 0.0, %v4964
    %v4966 = vpop.f32.mrf.mxu0
    %4967 = vmatprep.mubr.f32.mxu0 %v4590
    %4968 = vmatmul.mubr.f32.gmra.mxu0 %v4589
    %v4969 = vpop.f32.mrf.mxu0
    %v4970 = vadd.f32 0.0, %v4969
    %v4971 = vpop.f32.mrf.mxu0
    %4972 = vmatprep.mubr.f32.mxu0 %v4593
    %4973 = vmatmul.mubr.f32.gmra.mxu0 %v4592
    %v4974 = vpop.f32.mrf.mxu0
    %v4975 = vadd.f32 0.0, %v4974
    %v4976 = vpop.f32.mrf.mxu0
    %4977 = vmatprep.mubr.f32.mxu0 %v4596
    %4978 = vmatmul.mubr.f32.gmra.mxu0 %v4595
    %v4979 = vpop.f32.mrf.mxu0
    %v4980 = vadd.f32 0.0, %v4979
    %v4981 = vpop.f32.mrf.mxu0
    %4982 = vmatprep.mubr.f32.mxu0 %v4599
    %4983 = vmatmul.mubr.f32.gmra.mxu0 %v4598
    %v4984 = vpop.f32.mrf.mxu0
    %v4985 = vadd.f32 0.0, %v4984
    %v4986 = vpop.f32.mrf.mxu0
    %4987 = vmatprep.mubr.f32.mxu0 %v4602
    %4988 = vmatmul.mubr.f32.gmra.mxu0 %v4601
    %v4989 = vpop.f32.mrf.mxu0
    %v4990 = vadd.f32 0.0, %v4989
    %v4991 = vpop.f32.mrf.mxu0
    %4992 = vmatprep.mubr.f32.mxu0 %v4605
    %4993 = vmatmul.mubr.f32.gmra.mxu0 %v4604
    %v4994 = vpop.f32.mrf.mxu0
    %v4995 = vadd.f32 0.0, %v4994
    %v4996 = vpop.f32.mrf.mxu0
    %4997 = vmatprep.mubr.f32.mxu0 %v4608
    %4998 = vmatmul.mubr.f32.gmra.mxu0 %v4607
    %v4999 = vpop.f32.mrf.mxu0
    %v5000 = vadd.f32 0.0, %v4999
    %v5001 = vpop.f32.mrf.mxu0
    %5002 = vmatprep.mubr.f32.mxu0 %v4611
    %5003 = vmatmul.mubr.f32.gmra.mxu0 %v4610
    %v5004 = vpop.f32.mrf.mxu0
    %v5005 = vadd.f32 0.0, %v5004
    %v5006 = vpop.f32.mrf.mxu0
    %5007 = vmatprep.mubr.f32.mxu0 %v4614
    %5008 = vmatmul.mubr.f32.gmra.mxu0 %v4613
    %v5009 = vpop.f32.mrf.mxu0
    %v5010 = vadd.f32 0.0, %v5009
    %v5011 = vpop.f32.mrf.mxu0
    %5012 = vmatprep.mubr.f32.mxu0 %v4617
    %5013 = vmatmul.mubr.f32.gmra.mxu0 %v4616
    %v5014 = vpop.f32.mrf.mxu0
    %v5015 = vadd.f32 0.0, %v5014
    %v5016 = vpop.f32.mrf.mxu0
    %5017 = vmatprep.mubr.f32.mxu0 %v4620
    %5018 = vmatmul.mubr.f32.gmra.mxu0 %v4619
    %v5019 = vpop.f32.mrf.mxu0
    %v5020 = vadd.f32 0.0, %v5019
    %v5021 = vpop.f32.mrf.mxu0
    %5022 = vmatprep.mubr.f32.mxu0 %v4623
    %5023 = vmatmul.mubr.f32.gmra.mxu0 %v4622
    %v5024 = vpop.f32.mrf.mxu0
    %v5025 = vadd.f32 0.0, %v5024
    %v5026 = vpop.f32.mrf.mxu0
    %5027 = vmatprep.mubr.f32.mxu0 %v4626
    %5028 = vmatmul.mubr.f32.gmra.mxu0 %v4625
    %v5029 = vpop.f32.mrf.mxu0
    %v5030 = vadd.f32 0.0, %v5029
    %v5031 = vpop.f32.mrf.mxu0
    %5032 = vmatprep.mubr.f32.mxu0 %v4629
    %5033 = vmatmul.mubr.f32.gmra.mxu0 %v4628
    %v5034 = vpop.f32.mrf.mxu0
    %v5035 = vadd.f32 0.0, %v5034
    %v5036 = vpop.f32.mrf.mxu0
    %5037 = vmatprep.mubr.f32.mxu0 %v4632
    %5038 = vmatmul.mubr.f32.gmra.mxu0 %v4631
    %v5039 = vpop.f32.mrf.mxu0
    %v5040 = vadd.f32 0.0, %v5039
    %v5041 = vpop.f32.mrf.mxu0
    %5042 = vmatprep.mubr.f32.mxu0 %v4635
    %5043 = vmatmul.mubr.f32.gmra.mxu0 %v4634
    %v5044 = vpop.f32.mrf.mxu0
    %v5045 = vadd.f32 0.0, %v5044
    %v5046 = vpop.f32.mrf.mxu0
    %5047 = vmatprep.mubr.f32.mxu0 %v4638
    %5048 = vmatmul.mubr.f32.gmra.mxu0 %v4637
    %v5049 = vpop.f32.mrf.mxu0
    %v5050 = vadd.f32 0.0, %v5049
    %v5051 = vpop.f32.mrf.mxu0
    %5052 = vmatprep.mubr.f32.mxu0 %v4641
    %5053 = vmatmul.mubr.f32.gmra.mxu0 %v4640
    %v5054 = vpop.f32.mrf.mxu0
    %v5055 = vadd.f32 0.0, %v5054
    %v5056 = vpop.f32.mrf.mxu0
    %5057 = vmatprep.mubr.f32.mxu0 %v4644
    %5058 = vmatmul.mubr.f32.gmra.mxu0 %v4643
    %v5059 = vpop.f32.mrf.mxu0
    %v5060 = vadd.f32 0.0, %v5059
    %v5061 = vpop.f32.mrf.mxu0
    %5062 = vmatprep.mubr.f32.mxu0 %v4647
    %5063 = vmatmul.mubr.f32.gmra.mxu0 %v4646
    %v5064 = vpop.f32.mrf.mxu0
    %v5065 = vadd.f32 0.0, %v5064
    %v5066 = vpop.f32.mrf.mxu0
    %5067 = vmatprep.mubr.f32.mxu0 %v4650
    %5068 = vmatmul.mubr.f32.gmra.mxu0 %v4649
    %v5069 = vpop.f32.mrf.mxu0
    %v5070 = vadd.f32 0.0, %v5069
    %v5071 = vpop.f32.mrf.mxu0
    %5072 = vmatprep.mubr.f32.mxu0 %v4653
    %5073 = vmatmul.mubr.f32.gmra.mxu0 %v4652
    %v5074 = vpop.f32.mrf.mxu0
    %v5075 = vadd.f32 0.0, %v5074
    %v5076 = vpop.f32.mrf.mxu0
    %5077 = vmatprep.mubr.f32.mxu0 %v4656
    %5078 = vmatmul.mubr.f32.gmra.mxu0 %v4655
    %v5079 = vpop.f32.mrf.mxu0
    %v5080 = vadd.f32 0.0, %v5079
    %v5081 = vpop.f32.mrf.mxu0
    %5082 = vmatprep.mubr.f32.mxu0 %v4659
    %5083 = vmatmul.mubr.f32.gmra.mxu0 %v4658
    %v5084 = vpop.f32.mrf.mxu0
    %v5085 = vadd.f32 0.0, %v5084
    %v5086 = vpop.f32.mrf.mxu0
    %5087 = vmatprep.mubr.f32.mxu0 %v4662
    %5088 = vmatmul.mubr.f32.gmra.mxu0 %v4661
    %v5089 = vpop.f32.mrf.mxu0
    %v5090 = vadd.f32 0.0, %v5089
    %v5091 = vpop.f32.mrf.mxu0
    %5092 = vmatprep.mubr.f32.mxu0 %v4665
    %5093 = vmatmul.mubr.f32.gmra.mxu0 %v4664
    %v5094 = vpop.f32.mrf.mxu0
    %v5095 = vadd.f32 0.0, %v5094
    %v5096 = vpop.f32.mrf.mxu0
    %5097 = vmatprep.mubr.f32.mxu0 %v4668
    %5098 = vmatmul.mubr.f32.gmra.mxu0 %v4667
    %v5099 = vpop.f32.mrf.mxu0
    %v5100 = vadd.f32 0.0, %v5099
    %v5101 = vpop.f32.mrf.mxu0
    %5102 = vdwg.mxu0
    %5103 = vmatprep.subr.mxu0 0.0
    %5104 = vmatpush1.msra.mxu0 %v4717
    %5105 = vmatprep.subr.mxu0 0.0
    %5106 = vmatpush1.msra.mxu0 %v4716
    %5107 = vmatprep.subr.mxu0 0.0
    %5108 = vmatpush1.msra.mxu0 %v4715
    %5109 = vmatprep.subr.mxu0 0.0
    %5110 = vmatpush1.msra.mxu0 %v4714
    %5111 = vmatprep.subr.mxu0 0.0
    %5112 = vmatpush1.msra.mxu0 %v4713
    %5113 = vmatprep.subr.mxu0 0.0
    %5114 = vmatpush1.msra.mxu0 %v4712
    %5115 = vmatprep.subr.mxu0 0.0
    %5116 = vmatpush1.msra.mxu0 %v4711
    %5117 = vmatprep.subr.mxu0 0.0
    %5118 = vmatpush1.msra.mxu0 %v4710
    %5119 = vmatprep.subr.mxu0 0.0
    %5120 = vmatpush1.msra.mxu0 %v4709
    %5121 = vmatprep.subr.mxu0 0.0
    %5122 = vmatpush1.msra.mxu0 %v4708
    %5123 = vmatprep.subr.mxu0 0.0
    %5124 = vmatpush1.msra.mxu0 %v4707
    %5125 = vmatprep.subr.mxu0 0.0
    %5126 = vmatpush1.msra.mxu0 %v4706
    %5127 = vmatprep.subr.mxu0 0.0
    %5128 = vmatpush1.msra.mxu0 %v4705
    %5129 = vmatprep.subr.mxu0 0.0
    %5130 = vmatpush1.msra.mxu0 %v4704
    %5131 = vmatprep.subr.mxu0 0.0
    %5132 = vmatpush1.msra.mxu0 %v4703
    %5133 = vmatprep.subr.mxu0 0.0
    %5134 = vmatpush1.msra.mxu0 %v4702
    %5135 = vmatprep.subr.mxu0 0.0
    %5136 = vmatpush2.msra.mxu0 0.0
    %5137 = vmatprep.subr.mxu0 0.0
    %5138 = vmatpush2.msra.mxu0 0.0
    %5139 = vmatprep.subr.mxu0 0.0
    %5140 = vmatpush2.msra.mxu0 0.0
    %5141 = vmatprep.subr.mxu0 0.0
    %5142 = vmatpush2.msra.mxu0 0.0
    %5143 = vmatprep.subr.mxu0 0.0
    %5144 = vmatpush2.msra.mxu0 0.0
    %5145 = vmatprep.subr.mxu0 0.0
    %5146 = vmatpush2.msra.mxu0 0.0
    %5147 = vmatprep.subr.mxu0 0.0
    %5148 = vmatpush2.msra.mxu0 0.0
    %5149 = vmatprep.subr.mxu0 0.0
    %5150 = vmatpush2.msra.mxu0 0.0
    %5151 = vmatprep.subr.mxu0 0.0
    %5152 = vmatpush2.msra.mxu0 0.0
    %5153 = vmatprep.subr.mxu0 0.0
    %5154 = vmatpush2.msra.mxu0 0.0
    %5155 = vmatprep.subr.mxu0 0.0
    %5156 = vmatpush2.msra.mxu0 0.0
    %5157 = vmatprep.subr.mxu0 0.0
    %5158 = vmatpush2.msra.mxu0 0.0
    %5159 = vmatprep.subr.mxu0 0.0
    %5160 = vmatpush2.msra.mxu0 0.0
    %5161 = vmatprep.subr.mxu0 0.0
    %5162 = vmatpush2.msra.mxu0 0.0
    %5163 = vmatprep.subr.mxu0 0.0
    %5164 = vmatpush2.msra.mxu0 0.0
    %5165 = vmatprep.subr.mxu0 0.0
    %5166 = vmatpush2.msra.mxu0 0.0
    %5167 = vmatprep.mubr.f32.mxu0 0.0
    %5168 = vmatmul.mubr.f32.gmra.mxu0 %v4480
    %v5169 = vpop.f32.mrf.mxu0
    %v5170 = vadd.f32 %v4785, %v5169
    %v5171 = vpop.f32.mrf.mxu0
    %5172 = vmatprep.mubr.f32.mxu0 0.0
    %5173 = vmatmul.mubr.f32.gmra.mxu0 %v4483
    %v5174 = vpop.f32.mrf.mxu0
    %v5175 = vadd.f32 %v4790, %v5174
    %v5176 = vpop.f32.mrf.mxu0
    %5177 = vmatprep.mubr.f32.mxu0 0.0
    %5178 = vmatmul.mubr.f32.gmra.mxu0 %v4486
    %v5179 = vpop.f32.mrf.mxu0
    %v5180 = vadd.f32 %v4795, %v5179
    %v5181 = vpop.f32.mrf.mxu0
    %5182 = vmatprep.mubr.f32.mxu0 0.0
    %5183 = vmatmul.mubr.f32.gmra.mxu0 %v4489
    %v5184 = vpop.f32.mrf.mxu0
    %v5185 = vadd.f32 %v4800, %v5184
    %v5186 = vpop.f32.mrf.mxu0
    %5187 = vmatprep.mubr.f32.mxu0 0.0
    %5188 = vmatmul.mubr.f32.gmra.mxu0 %v4492
    %v5189 = vpop.f32.mrf.mxu0
    %v5190 = vadd.f32 %v4805, %v5189
    %v5191 = vpop.f32.mrf.mxu0
    %5192 = vmatprep.mubr.f32.mxu0 0.0
    %5193 = vmatmul.mubr.f32.gmra.mxu0 %v4495
    %v5194 = vpop.f32.mrf.mxu0
    %v5195 = vadd.f32 %v4810, %v5194
    %v5196 = vpop.f32.mrf.mxu0
    %5197 = vmatprep.mubr.f32.mxu0 0.0
    %5198 = vmatmul.mubr.f32.gmra.mxu0 %v4498
    %v5199 = vpop.f32.mrf.mxu0
    %v5200 = vadd.f32 %v4815, %v5199
    %v5201 = vpop.f32.mrf.mxu0
    %5202 = vmatprep.mubr.f32.mxu0 0.0
    %5203 = vmatmul.mubr.f32.gmra.mxu0 %v4501
    %v5204 = vpop.f32.mrf.mxu0
    %v5205 = vadd.f32 %v4820, %v5204
    %v5206 = vpop.f32.mrf.mxu0
    %5207 = vmatprep.mubr.f32.mxu0 0.0
    %5208 = vmatmul.mubr.f32.gmra.mxu0 %v4504
    %v5209 = vpop.f32.mrf.mxu0
    %v5210 = vadd.f32 %v4825, %v5209
    %v5211 = vpop.f32.mrf.mxu0
    %5212 = vmatprep.mubr.f32.mxu0 0.0
    %5213 = vmatmul.mubr.f32.gmra.mxu0 %v4507
    %v5214 = vpop.f32.mrf.mxu0
    %v5215 = vadd.f32 %v4830, %v5214
    %v5216 = vpop.f32.mrf.mxu0
    %5217 = vmatprep.mubr.f32.mxu0 0.0
    %5218 = vmatmul.mubr.f32.gmra.mxu0 %v4510
    %v5219 = vpop.f32.mrf.mxu0
    %v5220 = vadd.f32 %v4835, %v5219
    %v5221 = vpop.f32.mrf.mxu0
    %5222 = vmatprep.mubr.f32.mxu0 0.0
    %5223 = vmatmul.mubr.f32.gmra.mxu0 %v4513
    %v5224 = vpop.f32.mrf.mxu0
    %v5225 = vadd.f32 %v4840, %v5224
    %v5226 = vpop.f32.mrf.mxu0
    %5227 = vmatprep.mubr.f32.mxu0 0.0
    %5228 = vmatmul.mubr.f32.gmra.mxu0 %v4516
    %v5229 = vpop.f32.mrf.mxu0
    %v5230 = vadd.f32 %v4845, %v5229
    %v5231 = vpop.f32.mrf.mxu0
    %5232 = vmatprep.mubr.f32.mxu0 0.0
    %5233 = vmatmul.mubr.f32.gmra.mxu0 %v4519
    %v5234 = vpop.f32.mrf.mxu0
    %v5235 = vadd.f32 %v4850, %v5234
    %v5236 = vpop.f32.mrf.mxu0
    %5237 = vmatprep.mubr.f32.mxu0 0.0
    %5238 = vmatmul.mubr.f32.gmra.mxu0 %v4522
    %v5239 = vpop.f32.mrf.mxu0
    %v5240 = vadd.f32 %v4855, %v5239
    %v5241 = vpop.f32.mrf.mxu0
    %5242 = vmatprep.mubr.f32.mxu0 0.0
    %5243 = vmatmul.mubr.f32.gmra.mxu0 %v4525
    %v5244 = vpop.f32.mrf.mxu0
    %v5245 = vadd.f32 %v4860, %v5244
    %v5246 = vpop.f32.mrf.mxu0
    %5247 = vmatprep.mubr.f32.mxu0 0.0
    %5248 = vmatmul.mubr.f32.gmra.mxu0 %v4528
    %v5249 = vpop.f32.mrf.mxu0
    %v5250 = vadd.f32 %v4865, %v5249
    %v5251 = vpop.f32.mrf.mxu0
    %5252 = vmatprep.mubr.f32.mxu0 0.0
    %5253 = vmatmul.mubr.f32.gmra.mxu0 %v4531
    %v5254 = vpop.f32.mrf.mxu0
    %v5255 = vadd.f32 %v4870, %v5254
    %v5256 = vpop.f32.mrf.mxu0
    %5257 = vmatprep.mubr.f32.mxu0 0.0
    %5258 = vmatmul.mubr.f32.gmra.mxu0 %v4534
    %v5259 = vpop.f32.mrf.mxu0
    %v5260 = vadd.f32 %v4875, %v5259
    %v5261 = vpop.f32.mrf.mxu0
    %5262 = vmatprep.mubr.f32.mxu0 0.0
    %5263 = vmatmul.mubr.f32.gmra.mxu0 %v4537
    %v5264 = vpop.f32.mrf.mxu0
    %v5265 = vadd.f32 %v4880, %v5264
    %v5266 = vpop.f32.mrf.mxu0
    %5267 = vmatprep.mubr.f32.mxu0 0.0
    %5268 = vmatmul.mubr.f32.gmra.mxu0 %v4540
    %v5269 = vpop.f32.mrf.mxu0
    %v5270 = vadd.f32 %v4885, %v5269
    %v5271 = vpop.f32.mrf.mxu0
    %5272 = vmatprep.mubr.f32.mxu0 0.0
    %5273 = vmatmul.mubr.f32.gmra.mxu0 %v4543
    %v5274 = vpop.f32.mrf.mxu0
    %v5275 = vadd.f32 %v4890, %v5274
    %v5276 = vpop.f32.mrf.mxu0
    %5277 = vmatprep.mubr.f32.mxu0 0.0
    %5278 = vmatmul.mubr.f32.gmra.mxu0 %v4546
    %v5279 = vpop.f32.mrf.mxu0
    %v5280 = vadd.f32 %v4895, %v5279
    %v5281 = vpop.f32.mrf.mxu0
    %5282 = vmatprep.mubr.f32.mxu0 0.0
    %5283 = vmatmul.mubr.f32.gmra.mxu0 %v4549
    %v5284 = vpop.f32.mrf.mxu0
    %v5285 = vadd.f32 %v4900, %v5284
    %v5286 = vpop.f32.mrf.mxu0
    %5287 = vmatprep.mubr.f32.mxu0 0.0
    %5288 = vmatmul.mubr.f32.gmra.mxu0 %v4552
    %v5289 = vpop.f32.mrf.mxu0
    %v5290 = vadd.f32 %v4905, %v5289
    %v5291 = vpop.f32.mrf.mxu0
    %5292 = vmatprep.mubr.f32.mxu0 0.0
    %5293 = vmatmul.mubr.f32.gmra.mxu0 %v4555
    %v5294 = vpop.f32.mrf.mxu0
    %v5295 = vadd.f32 %v4910, %v5294
    %v5296 = vpop.f32.mrf.mxu0
    %5297 = vmatprep.mubr.f32.mxu0 0.0
    %5298 = vmatmul.mubr.f32.gmra.mxu0 %v4558
    %v5299 = vpop.f32.mrf.mxu0
    %v5300 = vadd.f32 %v4915, %v5299
    %v5301 = vpop.f32.mrf.mxu0
    %5302 = vmatprep.mubr.f32.mxu0 0.0
    %5303 = vmatmul.mubr.f32.gmra.mxu0 %v4561
    %v5304 = vpop.f32.mrf.mxu0
    %v5305 = vadd.f32 %v4920, %v5304
    %v5306 = vpop.f32.mrf.mxu0
    %5307 = vmatprep.mubr.f32.mxu0 0.0
    %5308 = vmatmul.mubr.f32.gmra.mxu0 %v4564
    %v5309 = vpop.f32.mrf.mxu0
    %v5310 = vadd.f32 %v4925, %v5309
    %v5311 = vpop.f32.mrf.mxu0
    %5312 = vmatprep.mubr.f32.mxu0 0.0
    %5313 = vmatmul.mubr.f32.gmra.mxu0 %v4567
    %v5314 = vpop.f32.mrf.mxu0
    %v5315 = vadd.f32 %v4930, %v5314
    %v5316 = vpop.f32.mrf.mxu0
    %5317 = vmatprep.mubr.f32.mxu0 0.0
    %5318 = vmatmul.mubr.f32.gmra.mxu0 %v4570
    %v5319 = vpop.f32.mrf.mxu0
    %v5320 = vadd.f32 %v4935, %v5319
    %v5321 = vpop.f32.mrf.mxu0
    %5322 = vmatprep.mubr.f32.mxu0 0.0
    %5323 = vmatmul.mubr.f32.gmra.mxu0 %v4573
    %v5324 = vpop.f32.mrf.mxu0
    %v5325 = vadd.f32 %v4940, %v5324
    %v5326 = vpop.f32.mrf.mxu0
    %5327 = vmatprep.mubr.f32.mxu0 0.0
    %5328 = vmatmul.mubr.f32.gmra.mxu0 %v4576
    %v5329 = vpop.f32.mrf.mxu0
    %v5330 = vadd.f32 %v4945, %v5329
    %v5331 = vpop.f32.mrf.mxu0
    %5332 = vmatprep.mubr.f32.mxu0 0.0
    %5333 = vmatmul.mubr.f32.gmra.mxu0 %v4579
    %v5334 = vpop.f32.mrf.mxu0
    %v5335 = vadd.f32 %v4950, %v5334
    %v5336 = vpop.f32.mrf.mxu0
    %5337 = vmatprep.mubr.f32.mxu0 0.0
    %5338 = vmatmul.mubr.f32.gmra.mxu0 %v4582
    %v5339 = vpop.f32.mrf.mxu0
    %v5340 = vadd.f32 %v4955, %v5339
    %v5341 = vpop.f32.mrf.mxu0
    %5342 = vmatprep.mubr.f32.mxu0 0.0
    %5343 = vmatmul.mubr.f32.gmra.mxu0 %v4585
    %v5344 = vpop.f32.mrf.mxu0
    %v5345 = vadd.f32 %v4960, %v5344
    %v5346 = vpop.f32.mrf.mxu0
    %5347 = vmatprep.mubr.f32.mxu0 0.0
    %5348 = vmatmul.mubr.f32.gmra.mxu0 %v4588
    %v5349 = vpop.f32.mrf.mxu0
    %v5350 = vadd.f32 %v4965, %v5349
    %v5351 = vpop.f32.mrf.mxu0
    %5352 = vmatprep.mubr.f32.mxu0 0.0
    %5353 = vmatmul.mubr.f32.gmra.mxu0 %v4591
    %v5354 = vpop.f32.mrf.mxu0
    %v5355 = vadd.f32 %v4970, %v5354
    %v5356 = vpop.f32.mrf.mxu0
    %5357 = vmatprep.mubr.f32.mxu0 0.0
    %5358 = vmatmul.mubr.f32.gmra.mxu0 %v4594
    %v5359 = vpop.f32.mrf.mxu0
    %v5360 = vadd.f32 %v4975, %v5359
    %v5361 = vpop.f32.mrf.mxu0
    %5362 = vmatprep.mubr.f32.mxu0 0.0
    %5363 = vmatmul.mubr.f32.gmra.mxu0 %v4597
    %v5364 = vpop.f32.mrf.mxu0
    %v5365 = vadd.f32 %v4980, %v5364
    %v5366 = vpop.f32.mrf.mxu0
    %5367 = vmatprep.mubr.f32.mxu0 0.0
    %5368 = vmatmul.mubr.f32.gmra.mxu0 %v4600
    %v5369 = vpop.f32.mrf.mxu0
    %v5370 = vadd.f32 %v4985, %v5369
    %v5371 = vpop.f32.mrf.mxu0
    %5372 = vmatprep.mubr.f32.mxu0 0.0
    %5373 = vmatmul.mubr.f32.gmra.mxu0 %v4603
    %v5374 = vpop.f32.mrf.mxu0
    %v5375 = vadd.f32 %v4990, %v5374
    %v5376 = vpop.f32.mrf.mxu0
    %5377 = vmatprep.mubr.f32.mxu0 0.0
    %5378 = vmatmul.mubr.f32.gmra.mxu0 %v4606
    %v5379 = vpop.f32.mrf.mxu0
    %v5380 = vadd.f32 %v4995, %v5379
    %v5381 = vpop.f32.mrf.mxu0
    %5382 = vmatprep.mubr.f32.mxu0 0.0
    %5383 = vmatmul.mubr.f32.gmra.mxu0 %v4609
    %v5384 = vpop.f32.mrf.mxu0
    %v5385 = vadd.f32 %v5000, %v5384
    %v5386 = vpop.f32.mrf.mxu0
    %5387 = vmatprep.mubr.f32.mxu0 0.0
    %5388 = vmatmul.mubr.f32.gmra.mxu0 %v4612
    %v5389 = vpop.f32.mrf.mxu0
    %v5390 = vadd.f32 %v5005, %v5389
    %v5391 = vpop.f32.mrf.mxu0
    %5392 = vmatprep.mubr.f32.mxu0 0.0
    %5393 = vmatmul.mubr.f32.gmra.mxu0 %v4615
    %v5394 = vpop.f32.mrf.mxu0
    %v5395 = vadd.f32 %v5010, %v5394
    %v5396 = vpop.f32.mrf.mxu0
    %5397 = vmatprep.mubr.f32.mxu0 0.0
    %5398 = vmatmul.mubr.f32.gmra.mxu0 %v4618
    %v5399 = vpop.f32.mrf.mxu0
    %v5400 = vadd.f32 %v5015, %v5399
    %v5401 = vpop.f32.mrf.mxu0
    %5402 = vmatprep.mubr.f32.mxu0 0.0
    %5403 = vmatmul.mubr.f32.gmra.mxu0 %v4621
    %v5404 = vpop.f32.mrf.mxu0
    %v5405 = vadd.f32 %v5020, %v5404
    %v5406 = vpop.f32.mrf.mxu0
    %5407 = vmatprep.mubr.f32.mxu0 0.0
    %5408 = vmatmul.mubr.f32.gmra.mxu0 %v4624
    %v5409 = vpop.f32.mrf.mxu0
    %v5410 = vadd.f32 %v5025, %v5409
    %v5411 = vpop.f32.mrf.mxu0
    %5412 = vmatprep.mubr.f32.mxu0 0.0
    %5413 = vmatmul.mubr.f32.gmra.mxu0 %v4627
    %v5414 = vpop.f32.mrf.mxu0
    %v5415 = vadd.f32 %v5030, %v5414
    %v5416 = vpop.f32.mrf.mxu0
    %5417 = vmatprep.mubr.f32.mxu0 0.0
    %5418 = vmatmul.mubr.f32.gmra.mxu0 %v4630
    %v5419 = vpop.f32.mrf.mxu0
    %v5420 = vadd.f32 %v5035, %v5419
    %v5421 = vpop.f32.mrf.mxu0
    %5422 = vmatprep.mubr.f32.mxu0 0.0
    %5423 = vmatmul.mubr.f32.gmra.mxu0 %v4633
    %v5424 = vpop.f32.mrf.mxu0
    %v5425 = vadd.f32 %v5040, %v5424
    %v5426 = vpop.f32.mrf.mxu0
    %5427 = vmatprep.mubr.f32.mxu0 0.0
    %5428 = vmatmul.mubr.f32.gmra.mxu0 %v4636
    %v5429 = vpop.f32.mrf.mxu0
    %v5430 = vadd.f32 %v5045, %v5429
    %v5431 = vpop.f32.mrf.mxu0
    %5432 = vmatprep.mubr.f32.mxu0 0.0
    %5433 = vmatmul.mubr.f32.gmra.mxu0 %v4639
    %v5434 = vpop.f32.mrf.mxu0
    %v5435 = vadd.f32 %v5050, %v5434
    %v5436 = vpop.f32.mrf.mxu0
    %5437 = vmatprep.mubr.f32.mxu0 0.0
    %5438 = vmatmul.mubr.f32.gmra.mxu0 %v4642
    %v5439 = vpop.f32.mrf.mxu0
    %v5440 = vadd.f32 %v5055, %v5439
    %v5441 = vpop.f32.mrf.mxu0
    %5442 = vmatprep.mubr.f32.mxu0 0.0
    %5443 = vmatmul.mubr.f32.gmra.mxu0 %v4645
    %v5444 = vpop.f32.mrf.mxu0
    %v5445 = vadd.f32 %v5060, %v5444
    %v5446 = vpop.f32.mrf.mxu0
    %5447 = vmatprep.mubr.f32.mxu0 0.0
    %5448 = vmatmul.mubr.f32.gmra.mxu0 %v4648
    %v5449 = vpop.f32.mrf.mxu0
    %v5450 = vadd.f32 %v5065, %v5449
    %v5451 = vpop.f32.mrf.mxu0
    %5452 = vmatprep.mubr.f32.mxu0 0.0
    %5453 = vmatmul.mubr.f32.gmra.mxu0 %v4651
    %v5454 = vpop.f32.mrf.mxu0
    %v5455 = vadd.f32 %v5070, %v5454
    %v5456 = vpop.f32.mrf.mxu0
    %5457 = vmatprep.mubr.f32.mxu0 0.0
    %5458 = vmatmul.mubr.f32.gmra.mxu0 %v4654
    %v5459 = vpop.f32.mrf.mxu0
    %v5460 = vadd.f32 %v5075, %v5459
    %v5461 = vpop.f32.mrf.mxu0
    %5462 = vmatprep.mubr.f32.mxu0 0.0
    %5463 = vmatmul.mubr.f32.gmra.mxu0 %v4657
    %v5464 = vpop.f32.mrf.mxu0
    %v5465 = vadd.f32 %v5080, %v5464
    %v5466 = vpop.f32.mrf.mxu0
    %5467 = vmatprep.mubr.f32.mxu0 0.0
    %5468 = vmatmul.mubr.f32.gmra.mxu0 %v4660
    %v5469 = vpop.f32.mrf.mxu0
    %v5470 = vadd.f32 %v5085, %v5469
    %v5471 = vpop.f32.mrf.mxu0
    %5472 = vmatprep.mubr.f32.mxu0 0.0
    %5473 = vmatmul.mubr.f32.gmra.mxu0 %v4663
    %v5474 = vpop.f32.mrf.mxu0
    %v5475 = vadd.f32 %v5090, %v5474
    %v5476 = vpop.f32.mrf.mxu0
    %5477 = vmatprep.mubr.f32.mxu0 0.0
    %5478 = vmatmul.mubr.f32.gmra.mxu0 %v4666
    %v5479 = vpop.f32.mrf.mxu0
    %v5480 = vadd.f32 %v5095, %v5479
    %v5481 = vpop.f32.mrf.mxu0
    %5482 = vmatprep.mubr.f32.mxu0 0.0
    %5483 = vmatmul.mubr.f32.gmra.mxu0 %v4669
    %v5484 = vpop.f32.mrf.mxu0
    %v5485 = vadd.f32 %v5100, %v5484
    %v5486 = vpop.f32.mrf.mxu0
    %5487 = vdwg.mxu0
    %v5488 = vmax.f32 %v5170, 1.1920929e-07
    %v5489 = vmax.f32 %v5175, 1.1920929e-07
    %v5490 = vmax.f32 %v5180, 1.1920929e-07
    %v5491 = vmax.f32 %v5185, 1.1920929e-07
    %v5492 = vmax.f32 %v5190, 1.1920929e-07
    %v5493 = vmax.f32 %v5195, 1.1920929e-07
    %v5494 = vmax.f32 %v5200, 1.1920929e-07
    %v5495 = vmax.f32 %v5205, 1.1920929e-07
    %v5496 = vmax.f32 %v5210, 1.1920929e-07
    %v5497 = vmax.f32 %v5215, 1.1920929e-07
    %v5498 = vmax.f32 %v5220, 1.1920929e-07
    %v5499 = vmax.f32 %v5225, 1.1920929e-07
    %v5500 = vmax.f32 %v5230, 1.1920929e-07
    %v5501 = vmax.f32 %v5235, 1.1920929e-07
    %v5502 = vmax.f32 %v5240, 1.1920929e-07
    %v5503 = vmax.f32 %v5245, 1.1920929e-07
    %v5504 = vmax.f32 %v5250, 1.1920929e-07
    %v5505 = vmax.f32 %v5255, 1.1920929e-07
    %v5506 = vmax.f32 %v5260, 1.1920929e-07
    %v5507 = vmax.f32 %v5265, 1.1920929e-07
    %v5508 = vmax.f32 %v5270, 1.1920929e-07
    %v5509 = vmax.f32 %v5275, 1.1920929e-07
    %v5510 = vmax.f32 %v5280, 1.1920929e-07
    %v5511 = vmax.f32 %v5285, 1.1920929e-07
    %v5512 = vmax.f32 %v5290, 1.1920929e-07
    %v5513 = vmax.f32 %v5295, 1.1920929e-07
    %v5514 = vmax.f32 %v5300, 1.1920929e-07
    %v5515 = vmax.f32 %v5305, 1.1920929e-07
    %v5516 = vmax.f32 %v5310, 1.1920929e-07
    %v5517 = vmax.f32 %v5315, 1.1920929e-07
    %v5518 = vmax.f32 %v5320, 1.1920929e-07
    %v5519 = vmax.f32 %v5325, 1.1920929e-07
    %v5520 = vmax.f32 %v5330, 1.1920929e-07
    %v5521 = vmax.f32 %v5335, 1.1920929e-07
    %v5522 = vmax.f32 %v5340, 1.1920929e-07
    %v5523 = vmax.f32 %v5345, 1.1920929e-07
    %v5524 = vmax.f32 %v5350, 1.1920929e-07
    %v5525 = vmax.f32 %v5355, 1.1920929e-07
    %v5526 = vmax.f32 %v5360, 1.1920929e-07
    %v5527 = vmax.f32 %v5365, 1.1920929e-07
    %v5528 = vmax.f32 %v5370, 1.1920929e-07
    %v5529 = vmax.f32 %v5375, 1.1920929e-07
    %v5530 = vmax.f32 %v5380, 1.1920929e-07
    %v5531 = vmax.f32 %v5385, 1.1920929e-07
    %v5532 = vmax.f32 %v5390, 1.1920929e-07
    %v5533 = vmax.f32 %v5395, 1.1920929e-07
    %v5534 = vmax.f32 %v5400, 1.1920929e-07
    %v5535 = vmax.f32 %v5405, 1.1920929e-07
    %v5536 = vmax.f32 %v5410, 1.1920929e-07
    %v5537 = vmax.f32 %v5415, 1.1920929e-07
    %v5538 = vmax.f32 %v5420, 1.1920929e-07
    %v5539 = vmax.f32 %v5425, 1.1920929e-07
    %v5540 = vmax.f32 %v5430, 1.1920929e-07
    %v5541 = vmax.f32 %v5435, 1.1920929e-07
    %v5542 = vmax.f32 %v5440, 1.1920929e-07
    %v5543 = vmax.f32 %v5445, 1.1920929e-07
    %v5544 = vmax.f32 %v5450, 1.1920929e-07
    %v5545 = vmax.f32 %v5455, 1.1920929e-07
    %v5546 = vmax.f32 %v5460, 1.1920929e-07
    %v5547 = vmax.f32 %v5465, 1.1920929e-07
    %v5548 = vmax.f32 %v5470, 1.1920929e-07
    %v5549 = vmax.f32 %v5475, 1.1920929e-07
    %v5550 = vmax.f32 %v5480, 1.1920929e-07
    %v5551 = vmax.f32 %v5485, 1.1920929e-07
    %v5552 = vlog2.pop %v5488
    %v5553 = vmul.f32 %v5552, 0.6931472
    %v5554 = vlog2.pop %v5489
    %v5555 = vmul.f32 %v5554, 0.6931472
    %v5556 = vlog2.pop %v5490
    %v5557 = vmul.f32 %v5556, 0.6931472
    %v5558 = vlog2.pop %v5491
    %v5559 = vmul.f32 %v5558, 0.6931472
    %v5560 = vlog2.pop %v5492
    %v5561 = vmul.f32 %v5560, 0.6931472
    %v5562 = vlog2.pop %v5493
    %v5563 = vmul.f32 %v5562, 0.6931472
    %v5564 = vlog2.pop %v5494
    %v5565 = vmul.f32 %v5564, 0.6931472
    %v5566 = vlog2.pop %v5495
    %v5567 = vmul.f32 %v5566, 0.6931472
    %v5568 = vlog2.pop %v5496
    %v5569 = vmul.f32 %v5568, 0.6931472
    %v5570 = vlog2.pop %v5497
    %v5571 = vmul.f32 %v5570, 0.6931472
    %v5572 = vlog2.pop %v5498
    %v5573 = vmul.f32 %v5572, 0.6931472
    %v5574 = vlog2.pop %v5499
    %v5575 = vmul.f32 %v5574, 0.6931472
    %v5576 = vlog2.pop %v5500
    %v5577 = vmul.f32 %v5576, 0.6931472
    %v5578 = vlog2.pop %v5501
    %v5579 = vmul.f32 %v5578, 0.6931472
    %v5580 = vlog2.pop %v5502
    %v5581 = vmul.f32 %v5580, 0.6931472
    %v5582 = vlog2.pop %v5503
    %v5583 = vmul.f32 %v5582, 0.6931472
    %v5584 = vlog2.pop %v5504
    %v5585 = vmul.f32 %v5584, 0.6931472
    %v5586 = vlog2.pop %v5505
    %v5587 = vmul.f32 %v5586, 0.6931472
    %v5588 = vlog2.pop %v5506
    %v5589 = vmul.f32 %v5588, 0.6931472
    %v5590 = vlog2.pop %v5507
    %v5591 = vmul.f32 %v5590, 0.6931472
    %v5592 = vlog2.pop %v5508
    %v5593 = vmul.f32 %v5592, 0.6931472
    %v5594 = vlog2.pop %v5509
    %v5595 = vmul.f32 %v5594, 0.6931472
    %v5596 = vlog2.pop %v5510
    %v5597 = vmul.f32 %v5596, 0.6931472
    %v5598 = vlog2.pop %v5511
    %v5599 = vmul.f32 %v5598, 0.6931472
    %v5600 = vlog2.pop %v5512
    %v5601 = vmul.f32 %v5600, 0.6931472
    %v5602 = vlog2.pop %v5513
    %v5603 = vmul.f32 %v5602, 0.6931472
    %v5604 = vlog2.pop %v5514
    %v5605 = vmul.f32 %v5604, 0.6931472
    %v5606 = vlog2.pop %v5515
    %v5607 = vmul.f32 %v5606, 0.6931472
    %v5608 = vlog2.pop %v5516
    %v5609 = vmul.f32 %v5608, 0.6931472
    %v5610 = vlog2.pop %v5517
    %v5611 = vmul.f32 %v5610, 0.6931472
    %v5612 = vlog2.pop %v5518
    %v5613 = vmul.f32 %v5612, 0.6931472
    %v5614 = vlog2.pop %v5519
    %v5615 = vmul.f32 %v5614, 0.6931472
    %v5616 = vlog2.pop %v5520
    %v5617 = vmul.f32 %v5616, 0.6931472
    %v5618 = vlog2.pop %v5521
    %v5619 = vmul.f32 %v5618, 0.6931472
    %v5620 = vlog2.pop %v5522
    %v5621 = vmul.f32 %v5620, 0.6931472
    %v5622 = vlog2.pop %v5523
    %v5623 = vmul.f32 %v5622, 0.6931472
    %v5624 = vlog2.pop %v5524
    %v5625 = vmul.f32 %v5624, 0.6931472
    %v5626 = vlog2.pop %v5525
    %v5627 = vmul.f32 %v5626, 0.6931472
    %v5628 = vlog2.pop %v5526
    %v5629 = vmul.f32 %v5628, 0.6931472
    %v5630 = vlog2.pop %v5527
    %v5631 = vmul.f32 %v5630, 0.6931472
    %v5632 = vlog2.pop %v5528
    %v5633 = vmul.f32 %v5632, 0.6931472
    %v5634 = vlog2.pop %v5529
    %v5635 = vmul.f32 %v5634, 0.6931472
    %v5636 = vlog2.pop %v5530
    %v5637 = vmul.f32 %v5636, 0.6931472
    %v5638 = vlog2.pop %v5531
    %v5639 = vmul.f32 %v5638, 0.6931472
    %v5640 = vlog2.pop %v5532
    %v5641 = vmul.f32 %v5640, 0.6931472
    %v5642 = vlog2.pop %v5533
    %v5643 = vmul.f32 %v5642, 0.6931472
    %v5644 = vlog2.pop %v5534
    %v5645 = vmul.f32 %v5644, 0.6931472
    %v5646 = vlog2.pop %v5535
    %v5647 = vmul.f32 %v5646, 0.6931472
    %v5648 = vlog2.pop %v5536
    %v5649 = vmul.f32 %v5648, 0.6931472
    %v5650 = vlog2.pop %v5537
    %v5651 = vmul.f32 %v5650, 0.6931472
    %v5652 = vlog2.pop %v5538
    %v5653 = vmul.f32 %v5652, 0.6931472
    %v5654 = vlog2.pop %v5539
    %v5655 = vmul.f32 %v5654, 0.6931472
    %v5656 = vlog2.pop %v5540
    %v5657 = vmul.f32 %v5656, 0.6931472
    %v5658 = vlog2.pop %v5541
    %v5659 = vmul.f32 %v5658, 0.6931472
    %v5660 = vlog2.pop %v5542
    %v5661 = vmul.f32 %v5660, 0.6931472
    %v5662 = vlog2.pop %v5543
    %v5663 = vmul.f32 %v5662, 0.6931472
    %v5664 = vlog2.pop %v5544
    %v5665 = vmul.f32 %v5664, 0.6931472
    %v5666 = vlog2.pop %v5545
    %v5667 = vmul.f32 %v5666, 0.6931472
    %v5668 = vlog2.pop %v5546
    %v5669 = vmul.f32 %v5668, 0.6931472
    %v5670 = vlog2.pop %v5547
    %v5671 = vmul.f32 %v5670, 0.6931472
    %v5672 = vlog2.pop %v5548
    %v5673 = vmul.f32 %v5672, 0.6931472
    %v5674 = vlog2.pop %v5549
    %v5675 = vmul.f32 %v5674, 0.6931472
    %v5676 = vlog2.pop %v5550
    %v5677 = vmul.f32 %v5676, 0.6931472
    %v5678 = vlog2.pop %v5551
    %v5679 = vmul.f32 %v5678, 0.6931472
    %v5680 = vsub.f32 %v5553, -4.2677393
    %v5681 = vsub.f32 %v5555, -4.2677393
    %v5682 = vsub.f32 %v5557, -4.2677393
    %v5683 = vsub.f32 %v5559, -4.2677393
    %v5684 = vsub.f32 %v5561, -4.2677393
    %v5685 = vsub.f32 %v5563, -4.2677393
    %v5686 = vsub.f32 %v5565, -4.2677393
    %v5687 = vsub.f32 %v5567, -4.2677393
    %v5688 = vsub.f32 %v5569, -4.2677393
    %v5689 = vsub.f32 %v5571, -4.2677393
    %v5690 = vsub.f32 %v5573, -4.2677393
    %v5691 = vsub.f32 %v5575, -4.2677393
    %v5692 = vsub.f32 %v5577, -4.2677393
    %v5693 = vsub.f32 %v5579, -4.2677393
    %v5694 = vsub.f32 %v5581, -4.2677393
    %v5695 = vsub.f32 %v5583, -4.2677393
    %v5696 = vsub.f32 %v5585, -4.2677393
    %v5697 = vsub.f32 %v5587, -4.2677393
    %v5698 = vsub.f32 %v5589, -4.2677393
    %v5699 = vsub.f32 %v5591, -4.2677393
    %v5700 = vsub.f32 %v5593, -4.2677393
    %v5701 = vsub.f32 %v5595, -4.2677393
    %v5702 = vsub.f32 %v5597, -4.2677393
    %v5703 = vsub.f32 %v5599, -4.2677393
    %v5704 = vsub.f32 %v5601, -4.2677393
    %v5705 = vsub.f32 %v5603, -4.2677393
    %v5706 = vsub.f32 %v5605, -4.2677393
    %v5707 = vsub.f32 %v5607, -4.2677393
    %v5708 = vsub.f32 %v5609, -4.2677393
    %v5709 = vsub.f32 %v5611, -4.2677393
    %v5710 = vsub.f32 %v5613, -4.2677393
    %v5711 = vsub.f32 %v5615, -4.2677393
    %v5712 = vsub.f32 %v5617, -4.2677393
    %v5713 = vsub.f32 %v5619, -4.2677393
    %v5714 = vsub.f32 %v5621, -4.2677393
    %v5715 = vsub.f32 %v5623, -4.2677393
    %v5716 = vsub.f32 %v5625, -4.2677393
    %v5717 = vsub.f32 %v5627, -4.2677393
    %v5718 = vsub.f32 %v5629, -4.2677393
    %v5719 = vsub.f32 %v5631, -4.2677393
    %v5720 = vsub.f32 %v5633, -4.2677393
    %v5721 = vsub.f32 %v5635, -4.2677393
    %v5722 = vsub.f32 %v5637, -4.2677393
    %v5723 = vsub.f32 %v5639, -4.2677393
    %v5724 = vsub.f32 %v5641, -4.2677393
    %v5725 = vsub.f32 %v5643, -4.2677393
    %v5726 = vsub.f32 %v5645, -4.2677393
    %v5727 = vsub.f32 %v5647, -4.2677393
    %v5728 = vsub.f32 %v5649, -4.2677393
    %v5729 = vsub.f32 %v5651, -4.2677393
    %v5730 = vsub.f32 %v5653, -4.2677393
    %v5731 = vsub.f32 %v5655, -4.2677393
    %v5732 = vsub.f32 %v5657, -4.2677393
    %v5733 = vsub.f32 %v5659, -4.2677393
    %v5734 = vsub.f32 %v5661, -4.2677393
    %v5735 = vsub.f32 %v5663, -4.2677393
    %v5736 = vsub.f32 %v5665, -4.2677393
    %v5737 = vsub.f32 %v5667, -4.2677393
    %v5738 = vsub.f32 %v5669, -4.2677393
    %v5739 = vsub.f32 %v5671, -4.2677393
    %v5740 = vsub.f32 %v5673, -4.2677393
    %v5741 = vsub.f32 %v5675, -4.2677393
    %v5742 = vsub.f32 %v5677, -4.2677393
    %v5743 = vsub.f32 %v5679, -4.2677393
    %v5744 = vmul.f32 %v5680, 0.1094332
    %v5745 = vmul.f32 %v5681, 0.1094332
    %v5746 = vmul.f32 %v5682, 0.1094332
    %v5747 = vmul.f32 %v5683, 0.1094332
    %v5748 = vmul.f32 %v5684, 0.1094332
    %v5749 = vmul.f32 %v5685, 0.1094332
    %v5750 = vmul.f32 %v5686, 0.1094332
    %v5751 = vmul.f32 %v5687, 0.1094332
    %v5752 = vmul.f32 %v5688, 0.1094332
    %v5753 = vmul.f32 %v5689, 0.1094332
    %v5754 = vmul.f32 %v5690, 0.1094332
    %v5755 = vmul.f32 %v5691, 0.1094332
    %v5756 = vmul.f32 %v5692, 0.1094332
    %v5757 = vmul.f32 %v5693, 0.1094332
    %v5758 = vmul.f32 %v5694, 0.1094332
    %v5759 = vmul.f32 %v5695, 0.1094332
    %v5760 = vmul.f32 %v5696, 0.1094332
    %v5761 = vmul.f32 %v5697, 0.1094332
    %v5762 = vmul.f32 %v5698, 0.1094332
    %v5763 = vmul.f32 %v5699, 0.1094332
    %v5764 = vmul.f32 %v5700, 0.1094332
    %v5765 = vmul.f32 %v5701, 0.1094332
    %v5766 = vmul.f32 %v5702, 0.1094332
    %v5767 = vmul.f32 %v5703, 0.1094332
    %v5768 = vmul.f32 %v5704, 0.1094332
    %v5769 = vmul.f32 %v5705, 0.1094332
    %v5770 = vmul.f32 %v5706, 0.1094332
    %v5771 = vmul.f32 %v5707, 0.1094332
    %v5772 = vmul.f32 %v5708, 0.1094332
    %v5773 = vmul.f32 %v5709, 0.1094332
    %v5774 = vmul.f32 %v5710, 0.1094332
    %v5775 = vmul.f32 %v5711, 0.1094332
    %v5776 = vmul.f32 %v5712, 0.1094332
    %v5777 = vmul.f32 %v5713, 0.1094332
    %v5778 = vmul.f32 %v5714, 0.1094332
    %v5779 = vmul.f32 %v5715, 0.1094332
    %v5780 = vmul.f32 %v5716, 0.1094332
    %v5781 = vmul.f32 %v5717, 0.1094332
    %v5782 = vmul.f32 %v5718, 0.1094332
    %v5783 = vmul.f32 %v5719, 0.1094332
    %v5784 = vmul.f32 %v5720, 0.1094332
    %v5785 = vmul.f32 %v5721, 0.1094332
    %v5786 = vmul.f32 %v5722, 0.1094332
    %v5787 = vmul.f32 %v5723, 0.1094332
    %v5788 = vmul.f32 %v5724, 0.1094332
    %v5789 = vmul.f32 %v5725, 0.1094332
    %v5790 = vmul.f32 %v5726, 0.1094332
    %v5791 = vmul.f32 %v5727, 0.1094332
    %v5792 = vmul.f32 %v5728, 0.1094332
    %v5793 = vmul.f32 %v5729, 0.1094332
    %v5794 = vmul.f32 %v5730, 0.1094332
    %v5795 = vmul.f32 %v5731, 0.1094332
    %v5796 = vmul.f32 %v5732, 0.1094332
    %v5797 = vmul.f32 %v5733, 0.1094332
    %v5798 = vmul.f32 %v5734, 0.1094332
    %v5799 = vmul.f32 %v5735, 0.1094332
    %v5800 = vmul.f32 %v5736, 0.1094332
    %v5801 = vmul.f32 %v5737, 0.1094332
    %v5802 = vmul.f32 %v5738, 0.1094332
    %v5803 = vmul.f32 %v5739, 0.1094332
    %v5804 = vmul.f32 %v5740, 0.1094332
    %v5805 = vmul.f32 %v5741, 0.1094332
    %v5806 = vmul.f32 %v5742, 0.1094332
    %v5807 = vmul.f32 %v5743, 0.1094332
    %5808 = vst [vmem:[#allocation8] sm:$0xff] %v5744
    %5809 = vst [vmem:[#allocation8 + $0x8] sm:$0xff] %v5745
    %5810 = vst [vmem:[#allocation8 + $0x10] sm:$0xff] %v5746
    %5811 = vst [vmem:[#allocation8 + $0x18] sm:$0xff] %v5747
    %5812 = vst [vmem:[#allocation8 + $0x20] sm:$0xff] %v5748
    %5813 = vst [vmem:[#allocation8 + $0x28] sm:$0xff] %v5749
    %5814 = vst [vmem:[#allocation8 + $0x30] sm:$0xff] %v5750
    %5815 = vst [vmem:[#allocation8 + $0x38] sm:$0xff] %v5751
    %5816 = vst [vmem:[#allocation8 + $0x40] sm:$0xff] %v5752
    %5817 = vst [vmem:[#allocation8 + $0x48] sm:$0xff] %v5753
    %5818 = vst [vmem:[#allocation8 + $0x50] sm:$0xff] %v5754
    %5819 = vst [vmem:[#allocation8 + $0x58] sm:$0xff] %v5755
    %5820 = vst [vmem:[#allocation8 + $0x60] sm:$0xff] %v5756
    %5821 = vst [vmem:[#allocation8 + $0x68] sm:$0xff] %v5757
    %5822 = vst [vmem:[#allocation8 + $0x70] sm:$0xff] %v5758
    %5823 = vst [vmem:[#allocation8 + $0x78] sm:$0xff] %v5759
    %5824 = vst [vmem:[#allocation8 + $0x80] sm:$0xff] %v5760
    %5825 = vst [vmem:[#allocation8 + $0x88] sm:$0xff] %v5761
    %5826 = vst [vmem:[#allocation8 + $0x90] sm:$0xff] %v5762
    %5827 = vst [vmem:[#allocation8 + $0x98] sm:$0xff] %v5763
    %5828 = vst [vmem:[#allocation8 + $0xa0] sm:$0xff] %v5764
    %5829 = vst [vmem:[#allocation8 + $0xa8] sm:$0xff] %v5765
    %5830 = vst [vmem:[#allocation8 + $0xb0] sm:$0xff] %v5766
    %5831 = vst [vmem:[#allocation8 + $0xb8] sm:$0xff] %v5767
    %5832 = vst [vmem:[#allocation8 + $0xc0] sm:$0xff] %v5768
    %5833 = vst [vmem:[#allocation8 + $0xc8] sm:$0xff] %v5769
    %5834 = vst [vmem:[#allocation8 + $0xd0] sm:$0xff] %v5770
    %5835 = vst [vmem:[#allocation8 + $0xd8] sm:$0xff] %v5771
    %5836 = vst [vmem:[#allocation8 + $0xe0] sm:$0xff] %v5772
    %5837 = vst [vmem:[#allocation8 + $0xe8] sm:$0xff] %v5773
    %5838 = vst [vmem:[#allocation8 + $0xf0] sm:$0xff] %v5774
    %5839 = vst [vmem:[#allocation8 + $0xf8] sm:$0xff] %v5775
    %5840 = vst [vmem:[#allocation8 + $0x100] sm:$0xff] %v5776
    %5841 = vst [vmem:[#allocation8 + $0x108] sm:$0xff] %v5777
    %5842 = vst [vmem:[#allocation8 + $0x110] sm:$0xff] %v5778
    %5843 = vst [vmem:[#allocation8 + $0x118] sm:$0xff] %v5779
    %5844 = vst [vmem:[#allocation8 + $0x120] sm:$0xff] %v5780
    %5845 = vst [vmem:[#allocation8 + $0x128] sm:$0xff] %v5781
    %5846 = vst [vmem:[#allocation8 + $0x130] sm:$0xff] %v5782
    %5847 = vst [vmem:[#allocation8 + $0x138] sm:$0xff] %v5783
    %5848 = vst [vmem:[#allocation8 + $0x140] sm:$0xff] %v5784
    %5849 = vst [vmem:[#allocation8 + $0x148] sm:$0xff] %v5785
    %5850 = vst [vmem:[#allocation8 + $0x150] sm:$0xff] %v5786
    %5851 = vst [vmem:[#allocation8 + $0x158] sm:$0xff] %v5787
    %5852 = vst [vmem:[#allocation8 + $0x160] sm:$0xff] %v5788
    %5853 = vst [vmem:[#allocation8 + $0x168] sm:$0xff] %v5789
    %5854 = vst [vmem:[#allocation8 + $0x170] sm:$0xff] %v5790
    %5855 = vst [vmem:[#allocation8 + $0x178] sm:$0xff] %v5791
    %5856 = vst [vmem:[#allocation8 + $0x180] sm:$0xff] %v5792
    %5857 = vst [vmem:[#allocation8 + $0x188] sm:$0xff] %v5793
    %5858 = vst [vmem:[#allocation8 + $0x190] sm:$0xff] %v5794
    %5859 = vst [vmem:[#allocation8 + $0x198] sm:$0xff] %v5795
    %5860 = vst [vmem:[#allocation8 + $0x1a0] sm:$0xff] %v5796
    %5861 = vst [vmem:[#allocation8 + $0x1a8] sm:$0xff] %v5797
    %5862 = vst [vmem:[#allocation8 + $0x1b0] sm:$0xff] %v5798
    %5863 = vst [vmem:[#allocation8 + $0x1b8] sm:$0xff] %v5799
    %5864 = vst [vmem:[#allocation8 + $0x1c0] sm:$0xff] %v5800
    %5865 = vst [vmem:[#allocation8 + $0x1c8] sm:$0xff] %v5801
    %5866 = vst [vmem:[#allocation8 + $0x1d0] sm:$0xff] %v5802
    %5867 = vst [vmem:[#allocation8 + $0x1d8] sm:$0xff] %v5803
    %5868 = vst [vmem:[#allocation8 + $0x1e0] sm:$0xff] %v5804
    %5869 = vst [vmem:[#allocation8 + $0x1e8] sm:$0xff] %v5805
    %5870 = vst [vmem:[#allocation8 + $0x1f0] sm:$0xff] %v5806
    %5871 = vst [vmem:[#allocation8 + $0x1f8] sm:$0xff] %v5807
    // Predicated region
    $region26: #{tpu_custom_call.1} parent=1 // pred_check
      _
    $region27: #{tpu_custom_call.1} parent=1 // pred_check_branch
      %5873 = sbr.rel (0) target = $region29
    $region28: #{tpu_custom_call.1} parent=1 // pred_region
      %s5875 = ssub.s32 8192, 8192
      %5876 = vsyncadd [#allocation4], %s5875
      %s5877 = sshll.u32 [#allocation8], 4
      %s5878 = int_to_ptr.vmem [resolvable:$true] %s5877
      %5883 = dma.vmem_to_hbm [thread:$0]  %s5878, 8192, %s3, [#allocation4], 128, 128, 8
    $region29: #{tpu_custom_call.1} parent=1 // pred_fallthru
      _
    // Predicated region
    $region30: #{tpu_custom_call.1} parent=1 // pred_check
      _
    $region31: #{tpu_custom_call.1} parent=1 // pred_check_branch
      %5885 = sbr.rel (0) target = $region33
    $region32: #{tpu_custom_call.1} parent=1 // pred_region
      %5886 = dma.done [#allocation4], 8192
    $region33: #{tpu_custom_call.1} parent=1 // pred_fallthru
      _
    %5887 = vsyncpa [#allocation3], 1
    %5888 = vsyncpa [#allocation6], 1
    %5889 = vsyncpa [#allocation4], 1

</llo_original>
